<compile_context>
chip_gen: v6e
topology: v6e:2x2x1
jax: 0.10.0
libtpu: 0.0.40
codegen_flags: <defaults>
</compile_context>

<pallas_src>
import functools

import jax
import jax.numpy as jnp
import numpy as np
from jax import lax
from jax.experimental import pallas as pl
from jax.experimental.pallas import tpu as pltpu

LANE = 128                      # pad Cout to a full lane width
SUBLANE = 8
VMEM_LIMIT = 32 * 1024 * 1024   # explicit scoped-VMEM budget (safe on v5e/v6e/v7x)


def _round_up(x, m):
    return (x + m - 1) // m * m


def _make_matmul_stats_kernel(tile, cpad, m_real):
    """Pass 1: y = P @ W + bias (bf16 in, f32 acc) + per-tile BN partial sums."""

    def kernel(p_ref, w_ref, b_ref, y_ref, s_ref):
        y = jnp.dot(p_ref[...], w_ref[...], preferred_element_type=jnp.float32)
        y = y + b_ref[...]                                   # conv bias (1, cpad)
        y_ref[...] = y

        # Mask M-padding rows so they do not pollute the batch statistics.
        row0 = pl.program_id(0) * tile
        rows = row0 + lax.broadcasted_iota(jnp.int32, (tile, 1), 0)
        ym = jnp.where(rows < m_real, y, 0.0)
        s1 = jnp.sum(ym, axis=0, keepdims=True)              # (1, cpad)  sum(y)
        s2 = jnp.sum(ym * ym, axis=0, keepdims=True)         # (1, cpad)  sum(y*y)
        pad = jnp.zeros((SUBLANE - 2, cpad), jnp.float32)
        s_ref[...] = jnp.concatenate([s1, s2, pad], axis=0)[None]

    return kernel


def _bn_prelu_kernel(y_ref, scale_ref, shift_ref, alpha_ref, o_ref):
    """Pass 2: z = y*scale + shift (folded BatchNorm affine), then PReLU."""
    z = y_ref[...] * scale_ref[...] + shift_ref[...]
    o_ref[...] = jnp.where(z > 0, z, alpha_ref[...] * z).astype(o_ref.dtype)


def _matmul_bias_stats(P, Wm, b_p, tile, m_real):
    """Tiled pass-1 pallas_call.  P: (Mp, Kp) bf16, Wm: (Kp, cpad) bf16."""
    Mp, Kp = P.shape
    cpad = Wm.shape[1]
    assert Mp % tile == 0
    nt = Mp // tile
    flops = 2 * Mp * Kp * cpad
    bytes_accessed = (P.size * 2 + Wm.size * 2 + b_p.size * 4
                      + Mp * cpad * 4 + nt * SUBLANE * cpad * 4)
    return pl.pallas_call(
        _make_matmul_stats_kernel(tile, cpad, m_real),
        out_shape=(jax.ShapeDtypeStruct((Mp, cpad), jnp.float32),
                   jax.ShapeDtypeStruct((nt, SUBLANE, cpad), jnp.float32)),
        grid=(nt,),
        in_specs=[pl.BlockSpec((tile, Kp), lambda i: (i, 0)),
                  pl.BlockSpec((Kp, cpad), lambda i: (0, 0)),    # resident weights
                  pl.BlockSpec((1, cpad), lambda i: (0, 0))],    # resident bias
        out_specs=(pl.BlockSpec((tile, cpad), lambda i: (i, 0)),
                   pl.BlockSpec((1, SUBLANE, cpad), lambda i: (i, 0, 0))),
        compiler_params=pltpu.CompilerParams(
            dimension_semantics=("parallel",),
            vmem_limit_bytes=VMEM_LIMIT),
        cost_estimate=pl.CostEstimate(flops=flops, transcendentals=0,
                                      bytes_accessed=bytes_accessed),
    )(P, Wm, b_p)


def _bn_prelu(y, scale, shift, alpha, tile):
    Mp, cpad = y.shape
    assert Mp % tile == 0
    nt = Mp // tile
    return pl.pallas_call(
        _bn_prelu_kernel,
        out_shape=jax.ShapeDtypeStruct((Mp, cpad), jnp.float32),
        grid=(nt,),
        in_specs=[pl.BlockSpec((tile, cpad), lambda i: (i, 0)),
                  pl.BlockSpec((1, cpad), lambda i: (0, 0)),
                  pl.BlockSpec((1, cpad), lambda i: (0, 0)),
                  pl.BlockSpec((1, cpad), lambda i: (0, 0))],
        out_specs=pl.BlockSpec((tile, cpad), lambda i: (i, 0)),
        compiler_params=pltpu.CompilerParams(
            dimension_semantics=("parallel",),
            vmem_limit_bytes=VMEM_LIMIT),
        cost_estimate=pl.CostEstimate(flops=3 * Mp * cpad, transcendentals=0,
                                      bytes_accessed=2 * Mp * cpad * 4),
    )(y, scale, shift, alpha)


@functools.partial(jax.jit,
                   static_argnames=("stride", "padding", "output_padding", "tile_m"))
def conv_transpose_layer(x, weight, bias, gamma, beta, prelu_a,
                         stride=1, padding=0, output_padding=0, tile_m=512):
    """x: (N, Cin, H, W); weight: (Cin, Cout, KH, KW) (PyTorch ConvTranspose2d)."""
    N, Cin, H, W = x.shape
    _, Cout, KH, KW = weight.shape
    s, p, op = stride, padding, output_padding
    assert KH - 1 - p >= 0 and KW - 1 - p >= 0, "padding must be <= kernel_size - 1"
    assert tile_m % SUBLANE == 0

    H_out = (H - 1) * s - 2 * p + KH + op
    W_out = (W - 1) * s - 2 * p + KW + op
    off_h = KH - 1 - p           # top/left offset of the equivalent dilate+pad+conv
    off_w = KW - 1 - p

    cpad = _round_up(Cout, LANE)

    def chan_pad(v):
        return jnp.zeros((1, cpad), jnp.float32).at[0, :Cout].set(
            v.astype(jnp.float32).reshape(Cout))

    b_p = chan_pad(bias)
    g_p = chan_pad(gamma)
    be_p = chan_pad(beta)
    a_p = jnp.full((1, cpad), jnp.asarray(prelu_a, jnp.float32).reshape(()),
                   dtype=jnp.float32)

    # flipped kernel in (KH, KW, Cin, Cout) order
    w_flip = jnp.transpose(weight, (2, 3, 0, 1))[::-1, ::-1, :, :].astype(jnp.float32)

    # TODO(synk): in a full model keep activations NHWC end-to-end so these
    # entry/exit transposes leave the per-layer hot path.
    x_nhwc = jnp.transpose(x, (0, 2, 3, 1))

    # ---- stride x stride sub-convolution decomposition (no zero-dilated input) ---
    # Output pixel oh = s*qh + rh is touched by kernel row kh only when
    # (rh + kh - off_h) % s == 0; it then reads input row qh + (rh + kh - off_h)//s.
    row_groups, col_groups = [], []
    for rh in range(s):
        kh_v = [kh for kh in range(KH) if (rh + kh - off_h) % s == 0]
        dh = [(rh + kh - off_h) // s for kh in kh_v]
        row_groups.append((rh, kh_v, dh, len(range(rh, H_out, s))))
    for rw in range(s):
        kw_v = [kw for kw in range(KW) if (rw + kw - off_w) % s == 0]
        dw = [(rw + kw - off_w) // s for kw in kw_v]
        col_groups.append((rw, kw_v, dw, len(range(rw, W_out, s))))

    all_dh = [d for (_, _, dh, _) in row_groups for d in dh]
    all_dw = [d for (_, _, dw, _) in col_groups for d in dw]
    pad_t = max(0, -min(all_dh)) if all_dh else 0
    pad_l = max(0, -min(all_dw)) if all_dw else 0
    pad_b = max([0] + [(Hg - 1) + max(dh) - (H - 1)
                       for (_, _, dh, Hg) in row_groups if dh and Hg > 0])
    pad_r = max([0] + [(Wg - 1) + max(dw) - (W - 1)
                       for (_, _, dw, Wg) in col_groups if dw and Wg > 0])
    x_ext = jnp.pad(x_nhwc, ((0, 0), (pad_t, pad_b), (pad_l, pad_r), (0, 0)))

    # ---- pass 1: per-group matmul + bias + partial BatchNorm sums ----
    group_results = []
    sum_acc = jnp.zeros((cpad,), jnp.float32)
    ssq_acc = jnp.zeros((cpad,), jnp.float32)

    for (rh, kh_v, dh, Hg) in row_groups:
        for (rw, kw_v, dw, Wg) in col_groups:
            if Hg == 0 or Wg == 0:
                continue
            m_real = N * Hg * Wg
            if kh_v and kw_v:
                cols = []
                for dhi in dh:
                    for dwi in dw:
                        cols.append(x_ext[:, dhi + pad_t:dhi + pad_t + Hg,
                                          dwi + pad_l:dwi + pad_l + Wg, :])
                Pg = jnp.concatenate(cols, axis=-1).reshape(m_real, -1)
                Wg_mat = w_flip[np.asarray(kh_v)][:, np.asarray(kw_v)].reshape(-1, Cout)
            else:
                # TODO(synk): residue class with no kernel tap (kernel < stride):
                # contribution is bias-only; feed a zero tap to keep shapes regular.
                Pg = jnp.zeros((m_real, Cin), jnp.float32)
                Wg_mat = jnp.zeros((Cin, Cout), jnp.float32)

            Kg = Pg.shape[1]
            Kp = _round_up(Kg, SUBLANE)
            tile_g = tile_m if m_real >= tile_m else _round_up(m_real, SUBLANE)
            Mp = _round_up(m_real, tile_g)

            Pg_pad = jnp.pad(Pg, ((0, Mp - m_real), (0, Kp - Kg))).astype(jnp.bfloat16)
            Wm = jnp.zeros((Kp, cpad), jnp.float32).at[:Kg, :Cout].set(
                Wg_mat).astype(jnp.bfloat16)

            y_g, stats_g = _matmul_bias_stats(Pg_pad, Wm, b_p, tile_g, m_real)
            sum_acc = sum_acc + jnp.sum(stats_g[:, 0, :], axis=0)
            ssq_acc = ssq_acc + jnp.sum(stats_g[:, 1, :], axis=0)
            group_results.append((rh, rw, Hg, Wg, m_real, tile_g, y_g))

    # ---- tiny global BN reduction + affine fold (train-mode, biased variance) ----
    count = jnp.float32(N * H_out * W_out)
    mu = sum_acc / count
    var = jnp.maximum(ssq_acc / count - mu * mu, 0.0)
    inv_std = lax.rsqrt(var + 1e-5)
    scale = (g_p[0] * inv_std)[None, :]                       # (1, cpad)
    shift = (be_p[0] - mu * g_p[0] * inv_std)[None, :]        # (1, cpad)

    # ---- pass 2: normalize + PReLU, scatter sub-grids back to the full output ----
    out_nhwc = jnp.zeros((N, H_out, W_out, Cout), jnp.float32)
    for (rh, rw, Hg, Wg, m_real, tile_g, y_g) in group_results:
        z_g = _bn_prelu(y_g, scale, shift, a_p, tile_g)
        blk = z_g[:m_real, :Cout].reshape(N, Hg, Wg, Cout)
        out_nhwc = out_nhwc.at[:, rh::s, rw::s, :].set(blk)

    return jnp.transpose(out_nhwc, (0, 3, 1, 2))


def _reference(x, weight, bias, gamma, beta, prelu_a, stride, padding, output_padding):
    """Pure-JAX reference (independent of the Pallas kernels)."""
    Cin, Cout, KH, KW = weight.shape
    w_oihw = jnp.transpose(weight, (1, 0, 2, 3))[:, :, ::-1, ::-1]   # flipped, OIHW
    y = lax.conv_general_dilated(
        x, w_oihw, window_strides=(1, 1),
        padding=((KH - 1 - padding, KH - 1 - padding + output_padding),
                 (KW - 1 - padding, KW - 1 - padding + output_padding)),
        lhs_dilation=(stride, stride),
        dimension_numbers=("NCHW", "OIHW", "NCHW"))
    y = y + bias[None, :, None, None]
    mu = jnp.mean(y, axis=(0, 2, 3), keepdims=True)
    var = jnp.mean((y - mu) ** 2, axis=(0, 2, 3), keepdims=True)
    z = gamma[None, :, None, None] * (y - mu) * lax.rsqrt(var + 1e-5) \
        + beta[None, :, None, None]
    return jnp.where(z > 0, z, prelu_a * z)


if __name__ == "__main__":
    key = jax.random.PRNGKey(0)
    k_x, k_w, k_b = jax.random.split(key, 3)

    # small shapes consistent with the module
    N, Cin, H, W = 2, 4, 16, 16
    Cout, K = 8, 3
    stride, padding, output_padding = 2, 1, 1

    x = jax.random.normal(k_x, (N, Cin, H, W), jnp.float32)

    # deterministic synthetic parameter init (PyTorch shapes, not a checkpoint)
    fan = Cin * K * K
    weight = jax.random.normal(k_w, (Cin, Cout, K, K), jnp.float32) / np.sqrt(fan)
    bias = jax.random.normal(k_b, (Cout,), jnp.float32) * 0.1
    gamma = jnp.ones((Cout,), jnp.float32)   # BatchNorm2d default weight
    beta = jnp.zeros((Cout,), jnp.float32)   # BatchNorm2d default bias
    prelu_a = 0.25                           # PReLU default (single shared alpha)

    out = conv_transpose_layer(x, weight, bias, gamma, beta, prelu_a,
                               stride=stride, padding=padding,
                               output_padding=output_padding)
    out = jax.block_until_ready(out)

    H_out = (H - 1) * stride - 2 * padding + K + output_padding
    W_out = (W - 1) * stride - 2 * padding + K + output_padding
    assert out.shape == (N, Cout, H_out, W_out), out.shape

    ref = _reference(x, weight, bias, gamma, beta, prelu_a,
                     stride, padding, output_padding)
    np.testing.assert_allclose(np.asarray(out), np.asarray(ref), rtol=5e-2, atol=5e-2)

    print("KERNEL_OK")
</pallas_src>

<mosaic_0001>
module attributes {stable_mosaic.version = 11 : i64} {
  func.func @kernel(%arg0: i32, %arg1: memref<512x16xbf16, #tpu.memory_space<vmem>>, %arg2: memref<16x128xbf16, #tpu.memory_space<vmem>>, %arg3: memref<1x128xf32, #tpu.memory_space<vmem>>, %arg4: memref<512x128xf32, #tpu.memory_space<vmem>>, %arg5: memref<1x8x128xf32, #tpu.memory_space<vmem>>) attributes {dimension_semantics = [#tpu.dimension_semantics<parallel>], iteration_bounds = array<i64: 1>, scalar_prefetch = 0 : i64, scratch_operands = 0 : i64, tpu.core_type = #tpu.core_type<tc>, window_params = [{transform_indices = @transform_0, window_bounds = array<i64: 512, 16>}, {pipeline_mode = #tpu.pipeline_mode<synchronous>, transform_indices = @transform_1, window_bounds = array<i64: 16, 128>}, {pipeline_mode = #tpu.pipeline_mode<synchronous>, transform_indices = @transform_2, window_bounds = array<i64: 1, 128>}, {transform_indices = @transform_3, window_bounds = array<i64: 512, 128>}, {transform_indices = @transform_4, window_bounds = array<i64: 1, 8, 128>}]} {
    %c0 = arith.constant 0 : index
    %c0_0 = arith.constant 0 : index
    %0 = vector.load %arg1[%c0, %c0_0] : memref<512x16xbf16, #tpu.memory_space<vmem>>, vector<512x16xbf16>
    %c0_1 = arith.constant 0 : index
    %c0_2 = arith.constant 0 : index
    %1 = vector.load %arg2[%c0_1, %c0_2] : memref<16x128xbf16, #tpu.memory_space<vmem>>, vector<16x128xbf16>
    %cst = arith.constant dense<0.000000e+00> : vector<512x128xf32>
    %2 = tpu.matmul %0, %1, %cst {dimension_numbers = #tpu.dot_dimension_numbers<[1], [0], [0], [1], [0, 0, 1, 1], [], []>} : vector<512x16xbf16>, vector<16x128xbf16>, vector<512x128xf32> -> vector<512x128xf32>
    %c0_3 = arith.constant 0 : index
    %c0_4 = arith.constant 0 : index
    %3 = vector.load %arg3[%c0_3, %c0_4] : memref<1x128xf32, #tpu.memory_space<vmem>>, vector<1x128xf32>
    %4 = vector.broadcast %3 : vector<1x128xf32> to vector<512x128xf32>
    %5 = arith.addf %2, %4 : vector<512x128xf32>
    %c0_5 = arith.constant 0 : index
    %c0_6 = arith.constant 0 : index
    %6 = vector.load %arg4[%c0_5, %c0_6] : memref<512x128xf32, #tpu.memory_space<vmem>>, vector<512x128xf32>
    tpu.vector_store %arg4[%c0_5, %c0_6], %5 {strides = array<i32>} : memref<512x128xf32, #tpu.memory_space<vmem>>, vector<512x128xf32>,
    %c512_i32 = arith.constant 512 : i32
    %7 = arith.muli %arg0, %c512_i32 : i32
    %8 = tpu.iota {dimensions = array<i32: 0>} : vector<512x1xi32>
    %9 = vector.broadcast %7 : i32 to vector<512x1xi32>
    %10 = arith.addi %9, %8 : vector<512x1xi32>
    %c512_i32_7 = arith.constant 512 : i32
    %11 = vector.broadcast %c512_i32_7 : i32 to vector<512x1xi32>
    %12 = arith.cmpi slt, %10, %11 : vector<512x1xi32>
    %cst_8 = arith.constant 0.000000e+00 : f32
    %13 = vector.shape_cast %12 : vector<512x1xi1> to vector<512x1xi1>
    %14 = vector.broadcast %13 : vector<512x1xi1> to vector<512x128xi1>
    %15 = vector.broadcast %cst_8 : f32 to vector<512x128xf32>
    %16 = arith.select %14, %5, %15 : vector<512x128xi1>, vector<512x128xf32>
    %cst_9 = arith.constant dense<0.000000e+00> : vector<128xf32>
    %17 = vector.multi_reduction <add>, %16, %cst_9 [0] : vector<512x128xf32> to vector<128xf32>
    %18 = vector.shape_cast %17 : vector<128xf32> to vector<1x128xf32>
    %19 = arith.mulf %16, %16 : vector<512x128xf32>
    %cst_10 = arith.constant dense<0.000000e+00> : vector<128xf32>
    %20 = vector.multi_reduction <add>, %19, %cst_10 [0] : vector<512x128xf32> to vector<128xf32>
    %21 = vector.shape_cast %20 : vector<128xf32> to vector<1x128xf32>
    %cst_11 = arith.constant 0.000000e+00 : f32
    %22 = vector.broadcast %cst_11 : f32 to vector<6x128xf32>
    %23 = tpu.concatenate %18, %21, %22 in 0 : vector<1x128xf32>, vector<1x128xf32>, vector<6x128xf32> -> vector<8x128xf32>
    %24 = vector.shape_cast %23 : vector<8x128xf32> to vector<1x8x128xf32>
    %c0_12 = arith.constant 0 : index
    %c0_13 = arith.constant 0 : index
    %c0_14 = arith.constant 0 : index
    %25 = vector.load %arg5[%c0_12, %c0_13, %c0_14] : memref<1x8x128xf32, #tpu.memory_space<vmem>>, vector<1x8x128xf32>
    tpu.vector_store %arg5[%c0_12, %c0_13, %c0_14], %24 {strides = array<i32>} : memref<1x8x128xf32, #tpu.memory_space<vmem>>, vector<1x8x128xf32>,
    return
  }
  func.func @transform_0(%arg0: i32) -> (i32, i32) {
    %c0_i32 = arith.constant 0 : i32
    %c0_i32_0 = arith.constant 0 : i32
    return %arg0, %c0_i32 : i32, i32
  }
  func.func @transform_1(%arg0: i32) -> (i32, i32) {
    %c0_i32 = arith.constant 0 : i32
    %c0_i32_0 = arith.constant 0 : i32
    %c0_i32_1 = arith.constant 0 : i32
    return %c0_i32, %c0_i32_0 : i32, i32
  }
  func.func @transform_2(%arg0: i32) -> (i32, i32) {
    %c0_i32 = arith.constant 0 : i32
    %c0_i32_0 = arith.constant 0 : i32
    %c0_i32_1 = arith.constant 0 : i32
    return %c0_i32, %c0_i32_0 : i32, i32
  }
  func.func @transform_3(%arg0: i32) -> (i32, i32) {
    %c0_i32 = arith.constant 0 : i32
    %c0_i32_0 = arith.constant 0 : i32
    return %arg0, %c0_i32 : i32, i32
  }
  func.func @transform_4(%arg0: i32) -> (i32, i32, i32) {
    %c0_i32 = arith.constant 0 : i32
    %c0_i32_0 = arith.constant 0 : i32
    %c0_i32_1 = arith.constant 0 : i32
    return %arg0, %c0_i32, %c0_i32_0 : i32, i32, i32
  }
}

module attributes {stable_mosaic.version = 11 : i64} {
  func.func @_bn_prelu_kernel(%arg0: i32, %arg1: memref<512x128xf32, #tpu.memory_space<vmem>>, %arg2: memref<1x128xf32, #tpu.memory_space<vmem>>, %arg3: memref<1x128xf32, #tpu.memory_space<vmem>>, %arg4: memref<1x128xf32, #tpu.memory_space<vmem>>, %arg5: memref<512x128xf32, #tpu.memory_space<vmem>>) attributes {dimension_semantics = [#tpu.dimension_semantics<parallel>], iteration_bounds = array<i64: 1>, scalar_prefetch = 0 : i64, scratch_operands = 0 : i64, tpu.core_type = #tpu.core_type<tc>, window_params = [{transform_indices = @transform_0, window_bounds = array<i64: 512, 128>}, {pipeline_mode = #tpu.pipeline_mode<synchronous>, transform_indices = @transform_1, window_bounds = array<i64: 1, 128>}, {pipeline_mode = #tpu.pipeline_mode<synchronous>, transform_indices = @transform_2, window_bounds = array<i64: 1, 128>}, {pipeline_mode = #tpu.pipeline_mode<synchronous>, transform_indices = @transform_3, window_bounds = array<i64: 1, 128>}, {transform_indices = @transform_4, window_bounds = array<i64: 512, 128>}]} {
    %c0 = arith.constant 0 : index
    %c0_0 = arith.constant 0 : index
    %0 = vector.load %arg1[%c0, %c0_0] : memref<512x128xf32, #tpu.memory_space<vmem>>, vector<512x128xf32>
    %c0_1 = arith.constant 0 : index
    %c0_2 = arith.constant 0 : index
    %1 = vector.load %arg2[%c0_1, %c0_2] : memref<1x128xf32, #tpu.memory_space<vmem>>, vector<1x128xf32>
    %2 = vector.broadcast %1 : vector<1x128xf32> to vector<512x128xf32>
    %3 = arith.mulf %0, %2 : vector<512x128xf32>
    %c0_3 = arith.constant 0 : index
    %c0_4 = arith.constant 0 : index
    %4 = vector.load %arg3[%c0_3, %c0_4] : memref<1x128xf32, #tpu.memory_space<vmem>>, vector<1x128xf32>
    %5 = vector.broadcast %4 : vector<1x128xf32> to vector<512x128xf32>
    %6 = arith.addf %3, %5 : vector<512x128xf32>
    %cst = arith.constant 0.000000e+00 : f32
    %7 = vector.broadcast %cst : f32 to vector<512x128xf32>
    %8 = arith.cmpf ogt, %6, %7 : vector<512x128xf32>
    %c0_5 = arith.constant 0 : index
    %c0_6 = arith.constant 0 : index
    %9 = vector.load %arg4[%c0_5, %c0_6] : memref<1x128xf32, #tpu.memory_space<vmem>>, vector<1x128xf32>
    %10 = vector.broadcast %9 : vector<1x128xf32> to vector<512x128xf32>
    %11 = arith.mulf %10, %6 : vector<512x128xf32>
    %12 = arith.select %8, %6, %11 : vector<512x128xi1>, vector<512x128xf32>
    %c0_7 = arith.constant 0 : index
    %c0_8 = arith.constant 0 : index
    %13 = vector.load %arg5[%c0_7, %c0_8] : memref<512x128xf32, #tpu.memory_space<vmem>>, vector<512x128xf32>
    tpu.vector_store %arg5[%c0_7, %c0_8], %12 {strides = array<i32>} : memref<512x128xf32, #tpu.memory_space<vmem>>, vector<512x128xf32>,
    return
  }
  func.func @transform_0(%arg0: i32) -> (i32, i32) {
    %c0_i32 = arith.constant 0 : i32
    %c0_i32_0 = arith.constant 0 : i32
    return %arg0, %c0_i32 : i32, i32
  }
  func.func @transform_1(%arg0: i32) -> (i32, i32) {
    %c0_i32 = arith.constant 0 : i32
    %c0_i32_0 = arith.constant 0 : i32
    %c0_i32_1 = arith.constant 0 : i32
    return %c0_i32, %c0_i32_0 : i32, i32
  }
  func.func @transform_2(%arg0: i32) -> (i32, i32) {
    %c0_i32 = arith.constant 0 : i32
    %c0_i32_0 = arith.constant 0 : i32
    %c0_i32_1 = arith.constant 0 : i32
    return %c0_i32, %c0_i32_0 : i32, i32
  }
  func.func @transform_3(%arg0: i32) -> (i32, i32) {
    %c0_i32 = arith.constant 0 : i32
    %c0_i32_0 = arith.constant 0 : i32
    %c0_i32_1 = arith.constant 0 : i32
    return %c0_i32, %c0_i32_0 : i32, i32
  }
  func.func @transform_4(%arg0: i32) -> (i32, i32) {
    %c0_i32 = arith.constant 0 : i32
    %c0_i32_0 = arith.constant 0 : i32
    return %arg0, %c0_i32 : i32, i32
  }
}

module attributes {stable_mosaic.version = 11 : i64} {
  func.func @kernel(%arg0: i32, %arg1: memref<512x8xbf16, #tpu.memory_space<vmem>>, %arg2: memref<8x128xbf16, #tpu.memory_space<vmem>>, %arg3: memref<1x128xf32, #tpu.memory_space<vmem>>, %arg4: memref<512x128xf32, #tpu.memory_space<vmem>>, %arg5: memref<1x8x128xf32, #tpu.memory_space<vmem>>) attributes {dimension_semantics = [#tpu.dimension_semantics<parallel>], iteration_bounds = array<i64: 1>, scalar_prefetch = 0 : i64, scratch_operands = 0 : i64, tpu.core_type = #tpu.core_type<tc>, window_params = [{transform_indices = @transform_0, window_bounds = array<i64: 512, 8>}, {pipeline_mode = #tpu.pipeline_mode<synchronous>, transform_indices = @transform_1, window_bounds = array<i64: 8, 128>}, {pipeline_mode = #tpu.pipeline_mode<synchronous>, transform_indices = @transform_2, window_bounds = array<i64: 1, 128>}, {transform_indices = @transform_3, window_bounds = array<i64: 512, 128>}, {transform_indices = @transform_4, window_bounds = array<i64: 1, 8, 128>}]} {
    %c0 = arith.constant 0 : index
    %c0_0 = arith.constant 0 : index
    %0 = vector.load %arg1[%c0, %c0_0] : memref<512x8xbf16, #tpu.memory_space<vmem>>, vector<512x8xbf16>
    %c0_1 = arith.constant 0 : index
    %c0_2 = arith.constant 0 : index
    %1 = vector.load %arg2[%c0_1, %c0_2] : memref<8x128xbf16, #tpu.memory_space<vmem>>, vector<8x128xbf16>
    %cst = arith.constant dense<0.000000e+00> : vector<512x128xf32>
    %2 = tpu.matmul %0, %1, %cst {dimension_numbers = #tpu.dot_dimension_numbers<[1], [0], [0], [1], [0, 0, 1, 1], [], []>} : vector<512x8xbf16>, vector<8x128xbf16>, vector<512x128xf32> -> vector<512x128xf32>
    %c0_3 = arith.constant 0 : index
    %c0_4 = arith.constant 0 : index
    %3 = vector.load %arg3[%c0_3, %c0_4] : memref<1x128xf32, #tpu.memory_space<vmem>>, vector<1x128xf32>
    %4 = vector.broadcast %3 : vector<1x128xf32> to vector<512x128xf32>
    %5 = arith.addf %2, %4 : vector<512x128xf32>
    %c0_5 = arith.constant 0 : index
    %c0_6 = arith.constant 0 : index
    %6 = vector.load %arg4[%c0_5, %c0_6] : memref<512x128xf32, #tpu.memory_space<vmem>>, vector<512x128xf32>
    tpu.vector_store %arg4[%c0_5, %c0_6], %5 {strides = array<i32>} : memref<512x128xf32, #tpu.memory_space<vmem>>, vector<512x128xf32>,
    %c512_i32 = arith.constant 512 : i32
    %7 = arith.muli %arg0, %c512_i32 : i32
    %8 = tpu.iota {dimensions = array<i32: 0>} : vector<512x1xi32>
    %9 = vector.broadcast %7 : i32 to vector<512x1xi32>
    %10 = arith.addi %9, %8 : vector<512x1xi32>
    %c512_i32_7 = arith.constant 512 : i32
    %11 = vector.broadcast %c512_i32_7 : i32 to vector<512x1xi32>
    %12 = arith.cmpi slt, %10, %11 : vector<512x1xi32>
    %cst_8 = arith.constant 0.000000e+00 : f32
    %13 = vector.shape_cast %12 : vector<512x1xi1> to vector<512x1xi1>
    %14 = vector.broadcast %13 : vector<512x1xi1> to vector<512x128xi1>
    %15 = vector.broadcast %cst_8 : f32 to vector<512x128xf32>
    %16 = arith.select %14, %5, %15 : vector<512x128xi1>, vector<512x128xf32>
    %cst_9 = arith.constant dense<0.000000e+00> : vector<128xf32>
    %17 = vector.multi_reduction <add>, %16, %cst_9 [0] : vector<512x128xf32> to vector<128xf32>
    %18 = vector.shape_cast %17 : vector<128xf32> to vector<1x128xf32>
    %19 = arith.mulf %16, %16 : vector<512x128xf32>
    %cst_10 = arith.constant dense<0.000000e+00> : vector<128xf32>
    %20 = vector.multi_reduction <add>, %19, %cst_10 [0] : vector<512x128xf32> to vector<128xf32>
    %21 = vector.shape_cast %20 : vector<128xf32> to vector<1x128xf32>
    %cst_11 = arith.constant 0.000000e+00 : f32
    %22 = vector.broadcast %cst_11 : f32 to vector<6x128xf32>
    %23 = tpu.concatenate %18, %21, %22 in 0 : vector<1x128xf32>, vector<1x128xf32>, vector<6x128xf32> -> vector<8x128xf32>
    %24 = vector.shape_cast %23 : vector<8x128xf32> to vector<1x8x128xf32>
    %c0_12 = arith.constant 0 : index
    %c0_13 = arith.constant 0 : index
    %c0_14 = arith.constant 0 : index
    %25 = vector.load %arg5[%c0_12, %c0_13, %c0_14] : memref<1x8x128xf32, #tpu.memory_space<vmem>>, vector<1x8x128xf32>
    tpu.vector_store %arg5[%c0_12, %c0_13, %c0_14], %24 {strides = array<i32>} : memref<1x8x128xf32, #tpu.memory_space<vmem>>, vector<1x8x128xf32>,
    return
  }
  func.func @transform_0(%arg0: i32) -> (i32, i32) {
    %c0_i32 = arith.constant 0 : i32
    %c0_i32_0 = arith.constant 0 : i32
    return %arg0, %c0_i32 : i32, i32
  }
  func.func @transform_1(%arg0: i32) -> (i32, i32) {
    %c0_i32 = arith.constant 0 : i32
    %c0_i32_0 = arith.constant 0 : i32
    %c0_i32_1 = arith.constant 0 : i32
    return %c0_i32, %c0_i32_0 : i32, i32
  }
  func.func @transform_2(%arg0: i32) -> (i32, i32) {
    %c0_i32 = arith.constant 0 : i32
    %c0_i32_0 = arith.constant 0 : i32
    %c0_i32_1 = arith.constant 0 : i32
    return %c0_i32, %c0_i32_0 : i32, i32
  }
  func.func @transform_3(%arg0: i32) -> (i32, i32) {
    %c0_i32 = arith.constant 0 : i32
    %c0_i32_0 = arith.constant 0 : i32
    return %arg0, %c0_i32 : i32, i32
  }
  func.func @transform_4(%arg0: i32) -> (i32, i32, i32) {
    %c0_i32 = arith.constant 0 : i32
    %c0_i32_0 = arith.constant 0 : i32
    %c0_i32_1 = arith.constant 0 : i32
    return %arg0, %c0_i32, %c0_i32_0 : i32, i32, i32
  }
}

</mosaic_0001>

<llo_original>
// kernel: conv_transpose_layer.15
$region0: #{conv_transpose_layer.15}
  #allocation0 [shape = 'u32[]', space=smem, size = 0x4, offset = 0x4, fixed_abs, tag = 'smem constant byte address 0x4 - core index']
  #allocation1 [shape = 'u32[144,128]{1,0:T(1,128)}', space=vmem, size = 0x12000, scoped, tag = 'internal scratch']
  %s0 = inlined_call_operand.vmem [shape: f32[512,128], index: 0, kind: input, shape index: {}]
  %s1 = inlined_call_operand.vmem [shape: f32[1,128], index: 1, kind: input, shape index: {}]
  %s2 = inlined_call_operand.vmem [shape: f32[1,128], index: 2, kind: input, shape index: {}]
  %s3 = inlined_call_operand.vmem [shape: f32[1,128], index: 3, kind: input, shape index: {}]
  %s4 = inlined_call_operand.vmem [shape: f32[512,128], index: 4, kind: output, shape index: {}]
  %s5 = sld [smem:[#allocation0]]
  $region26: #{conv_transpose_layer.15} parent=0
    _
  %s7 = ssub.s32 1, %s5
  %s8 = scalar_select 0, %s7, %s5
  // Predicated region
  $region2: #{conv_transpose_layer.15} parent=0 // pred_check
    _
  $region3: #{conv_transpose_layer.15} parent=0 // pred_check_branch
    %10 = sbr.rel (0) target = $region5
  $region4: #{conv_transpose_layer.15} parent=0 // pred_region
    _
  $region5: #{conv_transpose_layer.15} parent=0 // pred_fallthru
    _
  // Predicated region
  $region6: #{conv_transpose_layer.15} parent=0 // pred_check
    _
  $region7: #{conv_transpose_layer.15} parent=0 // pred_check_branch
    %12 = sbr.rel (0) target = $region9
  $region8: #{conv_transpose_layer.15} parent=0 // pred_region
    _
  $region9: #{conv_transpose_layer.15} parent=0 // pred_fallthru
    _
  // Predicated region
  $region10: #{conv_transpose_layer.15} parent=0 // pred_check
    _
  $region11: #{conv_transpose_layer.15} parent=0 // pred_check_branch
    %14 = sbr.rel (0) target = $region13
  $region12: #{conv_transpose_layer.15} parent=0 // pred_region
    _
  $region13: #{conv_transpose_layer.15} parent=0 // pred_fallthru
    _
  // Predicated region
  $region14: #{conv_transpose_layer.15} parent=0 // pred_check
    _
  $region15: #{conv_transpose_layer.15} parent=0 // pred_check_branch
    %16 = sbr.rel (0) target = $region17
  $region16: #{conv_transpose_layer.15} parent=0 // pred_region
    _
  $region17: #{conv_transpose_layer.15} parent=0 // pred_fallthru
    _
  %v17 = vld [vmem:[%s0] sm:$0xff]
  %v18 = vld [vmem:[%s0 + $0x8] sm:$0xff]
  %v19 = vld [vmem:[%s0 + $0x10] sm:$0xff]
  %v20 = vld [vmem:[%s0 + $0x18] sm:$0xff]
  %v21 = vld [vmem:[%s0 + $0x20] sm:$0xff]
  %v22 = vld [vmem:[%s0 + $0x28] sm:$0xff]
  %v23 = vld [vmem:[%s0 + $0x30] sm:$0xff]
  %v24 = vld [vmem:[%s0 + $0x38] sm:$0xff]
  %v25 = vld [vmem:[%s0 + $0x40] sm:$0xff]
  %v26 = vld [vmem:[%s0 + $0x48] sm:$0xff]
  %v27 = vld [vmem:[%s0 + $0x50] sm:$0xff]
  %v28 = vld [vmem:[%s0 + $0x58] sm:$0xff]
  %v29 = vld [vmem:[%s0 + $0x60] sm:$0xff]
  %v30 = vld [vmem:[%s0 + $0x68] sm:$0xff]
  %v31 = vld [vmem:[%s0 + $0x70] sm:$0xff]
  %v32 = vld [vmem:[%s0 + $0x78] sm:$0xff]
  %v33 = vld [vmem:[%s0 + $0x80] sm:$0xff]
  %v34 = vld [vmem:[%s0 + $0x88] sm:$0xff]
  %v35 = vld [vmem:[%s0 + $0x90] sm:$0xff]
  %v36 = vld [vmem:[%s0 + $0x98] sm:$0xff]
  %v37 = vld [vmem:[%s0 + $0xa0] sm:$0xff]
  %v38 = vld [vmem:[%s0 + $0xa8] sm:$0xff]
  %v39 = vld [vmem:[%s0 + $0xb0] sm:$0xff]
  %v40 = vld [vmem:[%s0 + $0xb8] sm:$0xff]
  %v41 = vld [vmem:[%s0 + $0xc0] sm:$0xff]
  %v42 = vld [vmem:[%s0 + $0xc8] sm:$0xff]
  %v43 = vld [vmem:[%s0 + $0xd0] sm:$0xff]
  %v44 = vld [vmem:[%s0 + $0xd8] sm:$0xff]
  %v45 = vld [vmem:[%s0 + $0xe0] sm:$0xff]
  %v46 = vld [vmem:[%s0 + $0xe8] sm:$0xff]
  %v47 = vld [vmem:[%s0 + $0xf0] sm:$0xff]
  %v48 = vld [vmem:[%s0 + $0xf8] sm:$0xff]
  %v49 = vld [vmem:[%s0 + $0x100] sm:$0xff]
  %v50 = vld [vmem:[%s0 + $0x108] sm:$0xff]
  %v51 = vld [vmem:[%s0 + $0x110] sm:$0xff]
  %v52 = vld [vmem:[%s0 + $0x118] sm:$0xff]
  %v53 = vld [vmem:[%s0 + $0x120] sm:$0xff]
  %v54 = vld [vmem:[%s0 + $0x128] sm:$0xff]
  %v55 = vld [vmem:[%s0 + $0x130] sm:$0xff]
  %v56 = vld [vmem:[%s0 + $0x138] sm:$0xff]
  %v57 = vld [vmem:[%s0 + $0x140] sm:$0xff]
  %v58 = vld [vmem:[%s0 + $0x148] sm:$0xff]
  %v59 = vld [vmem:[%s0 + $0x150] sm:$0xff]
  %v60 = vld [vmem:[%s0 + $0x158] sm:$0xff]
  %v61 = vld [vmem:[%s0 + $0x160] sm:$0xff]
  %v62 = vld [vmem:[%s0 + $0x168] sm:$0xff]
  %v63 = vld [vmem:[%s0 + $0x170] sm:$0xff]
  %v64 = vld [vmem:[%s0 + $0x178] sm:$0xff]
  %v65 = vld [vmem:[%s0 + $0x180] sm:$0xff]
  %v66 = vld [vmem:[%s0 + $0x188] sm:$0xff]
  %v67 = vld [vmem:[%s0 + $0x190] sm:$0xff]
  %v68 = vld [vmem:[%s0 + $0x198] sm:$0xff]
  %v69 = vld [vmem:[%s0 + $0x1a0] sm:$0xff]
  %v70 = vld [vmem:[%s0 + $0x1a8] sm:$0xff]
  %v71 = vld [vmem:[%s0 + $0x1b0] sm:$0xff]
  %v72 = vld [vmem:[%s0 + $0x1b8] sm:$0xff]
  %v73 = vld [vmem:[%s0 + $0x1c0] sm:$0xff]
  %v74 = vld [vmem:[%s0 + $0x1c8] sm:$0xff]
  %v75 = vld [vmem:[%s0 + $0x1d0] sm:$0xff]
  %v76 = vld [vmem:[%s0 + $0x1d8] sm:$0xff]
  %v77 = vld [vmem:[%s0 + $0x1e0] sm:$0xff]
  %v78 = vld [vmem:[%s0 + $0x1e8] sm:$0xff]
  %v79 = vld [vmem:[%s0 + $0x1f0] sm:$0xff]
  %v80 = vld [vmem:[%s0 + $0x1f8] sm:$0xff]
  %v81 = vld [vmem:[%s1] sm:$0x1]
  %v83 = vlaneseq
  %v84 = vshrl.u32 %v83, 7
  %v85 = vsub.s32 0, %v84
  %v86 = vrot.slane %v81, %v85
  %v88 = vmul.f32 %v17, %v86
  %v89 = vmul.f32 %v18, %v86
  %v90 = vmul.f32 %v19, %v86
  %v91 = vmul.f32 %v20, %v86
  %v92 = vmul.f32 %v21, %v86
  %v93 = vmul.f32 %v22, %v86
  %v94 = vmul.f32 %v23, %v86
  %v95 = vmul.f32 %v24, %v86
  %v96 = vmul.f32 %v25, %v86
  %v97 = vmul.f32 %v26, %v86
  %v98 = vmul.f32 %v27, %v86
  %v99 = vmul.f32 %v28, %v86
  %v100 = vmul.f32 %v29, %v86
  %v101 = vmul.f32 %v30, %v86
  %v102 = vmul.f32 %v31, %v86
  %v103 = vmul.f32 %v32, %v86
  %v104 = vmul.f32 %v33, %v86
  %v105 = vmul.f32 %v34, %v86
  %v106 = vmul.f32 %v35, %v86
  %v107 = vmul.f32 %v36, %v86
  %v108 = vmul.f32 %v37, %v86
  %v109 = vmul.f32 %v38, %v86
  %v110 = vmul.f32 %v39, %v86
  %v111 = vmul.f32 %v40, %v86
  %v112 = vmul.f32 %v41, %v86
  %v113 = vmul.f32 %v42, %v86
  %v114 = vmul.f32 %v43, %v86
  %v115 = vmul.f32 %v44, %v86
  %v116 = vmul.f32 %v45, %v86
  %v117 = vmul.f32 %v46, %v86
  %v118 = vmul.f32 %v47, %v86
  %v119 = vmul.f32 %v48, %v86
  %v120 = vmul.f32 %v49, %v86
  %v121 = vmul.f32 %v50, %v86
  %v122 = vmul.f32 %v51, %v86
  %v123 = vmul.f32 %v52, %v86
  %v124 = vmul.f32 %v53, %v86
  %v125 = vmul.f32 %v54, %v86
  %v126 = vmul.f32 %v55, %v86
  %v127 = vmul.f32 %v56, %v86
  %v128 = vmul.f32 %v57, %v86
  %v129 = vmul.f32 %v58, %v86
  %v130 = vmul.f32 %v59, %v86
  %v131 = vmul.f32 %v60, %v86
  %v132 = vmul.f32 %v61, %v86
  %v133 = vmul.f32 %v62, %v86
  %v134 = vmul.f32 %v63, %v86
  %v135 = vmul.f32 %v64, %v86
  %v136 = vmul.f32 %v65, %v86
  %v137 = vmul.f32 %v66, %v86
  %v138 = vmul.f32 %v67, %v86
  %v139 = vmul.f32 %v68, %v86
  %v140 = vmul.f32 %v69, %v86
  %v141 = vmul.f32 %v70, %v86
  %v142 = vmul.f32 %v71, %v86
  %v143 = vmul.f32 %v72, %v86
  %v144 = vmul.f32 %v73, %v86
  %v145 = vmul.f32 %v74, %v86
  %v146 = vmul.f32 %v75, %v86
  %v147 = vmul.f32 %v76, %v86
  %v148 = vmul.f32 %v77, %v86
  %v149 = vmul.f32 %v78, %v86
  %v150 = vmul.f32 %v79, %v86
  %v151 = vmul.f32 %v80, %v86
  %v152 = vld [vmem:[%s2] sm:$0x1]
  %v154 = vlaneseq
  %v155 = vshrl.u32 %v154, 7
  %v156 = vsub.s32 0, %v155
  %v157 = vrot.slane %v152, %v156
  %v159 = vadd.f32 %v88, %v157
  %v160 = vadd.f32 %v89, %v157
  %v161 = vadd.f32 %v90, %v157
  %v162 = vadd.f32 %v91, %v157
  %v163 = vadd.f32 %v92, %v157
  %v164 = vadd.f32 %v93, %v157
  %v165 = vadd.f32 %v94, %v157
  %v166 = vadd.f32 %v95, %v157
  %v167 = vadd.f32 %v96, %v157
  %v168 = vadd.f32 %v97, %v157
  %v169 = vadd.f32 %v98, %v157
  %v170 = vadd.f32 %v99, %v157
  %v171 = vadd.f32 %v100, %v157
  %v172 = vadd.f32 %v101, %v157
  %v173 = vadd.f32 %v102, %v157
  %v174 = vadd.f32 %v103, %v157
  %v175 = vadd.f32 %v104, %v157
  %v176 = vadd.f32 %v105, %v157
  %v177 = vadd.f32 %v106, %v157
  %v178 = vadd.f32 %v107, %v157
  %v179 = vadd.f32 %v108, %v157
  %v180 = vadd.f32 %v109, %v157
  %v181 = vadd.f32 %v110, %v157
  %v182 = vadd.f32 %v111, %v157
  %v183 = vadd.f32 %v112, %v157
  %v184 = vadd.f32 %v113, %v157
  %v185 = vadd.f32 %v114, %v157
  %v186 = vadd.f32 %v115, %v157
  %v187 = vadd.f32 %v116, %v157
  %v188 = vadd.f32 %v117, %v157
  %v189 = vadd.f32 %v118, %v157
  %v190 = vadd.f32 %v119, %v157
  %v191 = vadd.f32 %v120, %v157
  %v192 = vadd.f32 %v121, %v157
  %v193 = vadd.f32 %v122, %v157
  %v194 = vadd.f32 %v123, %v157
  %v195 = vadd.f32 %v124, %v157
  %v196 = vadd.f32 %v125, %v157
  %v197 = vadd.f32 %v126, %v157
  %v198 = vadd.f32 %v127, %v157
  %v199 = vadd.f32 %v128, %v157
  %v200 = vadd.f32 %v129, %v157
  %v201 = vadd.f32 %v130, %v157
  %v202 = vadd.f32 %v131, %v157
  %v203 = vadd.f32 %v132, %v157
  %v204 = vadd.f32 %v133, %v157
  %v205 = vadd.f32 %v134, %v157
  %v206 = vadd.f32 %v135, %v157
  %v207 = vadd.f32 %v136, %v157
  %v208 = vadd.f32 %v137, %v157
  %v209 = vadd.f32 %v138, %v157
  %v210 = vadd.f32 %v139, %v157
  %v211 = vadd.f32 %v140, %v157
  %v212 = vadd.f32 %v141, %v157
  %v213 = vadd.f32 %v142, %v157
  %v214 = vadd.f32 %v143, %v157
  %v215 = vadd.f32 %v144, %v157
  %v216 = vadd.f32 %v145, %v157
  %v217 = vadd.f32 %v146, %v157
  %v218 = vadd.f32 %v147, %v157
  %v219 = vadd.f32 %v148, %v157
  %v220 = vadd.f32 %v149, %v157
  %v221 = vadd.f32 %v150, %v157
  %v222 = vadd.f32 %v151, %v157
  %vm223 = vcmp.gt.f32.partialorder %v159, 0.0
  %vm224 = vcmp.gt.f32.partialorder %v160, 0.0
  %vm225 = vcmp.gt.f32.partialorder %v161, 0.0
  %vm226 = vcmp.gt.f32.partialorder %v162, 0.0
  %vm227 = vcmp.gt.f32.partialorder %v163, 0.0
  %vm228 = vcmp.gt.f32.partialorder %v164, 0.0
  %vm229 = vcmp.gt.f32.partialorder %v165, 0.0
  %vm230 = vcmp.gt.f32.partialorder %v166, 0.0
  %vm231 = vcmp.gt.f32.partialorder %v167, 0.0
  %vm232 = vcmp.gt.f32.partialorder %v168, 0.0
  %vm233 = vcmp.gt.f32.partialorder %v169, 0.0
  %vm234 = vcmp.gt.f32.partialorder %v170, 0.0
  %vm235 = vcmp.gt.f32.partialorder %v171, 0.0
  %vm236 = vcmp.gt.f32.partialorder %v172, 0.0
  %vm237 = vcmp.gt.f32.partialorder %v173, 0.0
  %vm238 = vcmp.gt.f32.partialorder %v174, 0.0
  %vm239 = vcmp.gt.f32.partialorder %v175, 0.0
  %vm240 = vcmp.gt.f32.partialorder %v176, 0.0
  %vm241 = vcmp.gt.f32.partialorder %v177, 0.0
  %vm242 = vcmp.gt.f32.partialorder %v178, 0.0
  %vm243 = vcmp.gt.f32.partialorder %v179, 0.0
  %vm244 = vcmp.gt.f32.partialorder %v180, 0.0
  %vm245 = vcmp.gt.f32.partialorder %v181, 0.0
  %vm246 = vcmp.gt.f32.partialorder %v182, 0.0
  %vm247 = vcmp.gt.f32.partialorder %v183, 0.0
  %vm248 = vcmp.gt.f32.partialorder %v184, 0.0
  %vm249 = vcmp.gt.f32.partialorder %v185, 0.0
  %vm250 = vcmp.gt.f32.partialorder %v186, 0.0
  %vm251 = vcmp.gt.f32.partialorder %v187, 0.0
  %vm252 = vcmp.gt.f32.partialorder %v188, 0.0
  %vm253 = vcmp.gt.f32.partialorder %v189, 0.0
  %vm254 = vcmp.gt.f32.partialorder %v190, 0.0
  %vm255 = vcmp.gt.f32.partialorder %v191, 0.0
  %vm256 = vcmp.gt.f32.partialorder %v192, 0.0
  %vm257 = vcmp.gt.f32.partialorder %v193, 0.0
  %vm258 = vcmp.gt.f32.partialorder %v194, 0.0
  %vm259 = vcmp.gt.f32.partialorder %v195, 0.0
  %vm260 = vcmp.gt.f32.partialorder %v196, 0.0
  %vm261 = vcmp.gt.f32.partialorder %v197, 0.0
  %vm262 = vcmp.gt.f32.partialorder %v198, 0.0
  %vm263 = vcmp.gt.f32.partialorder %v199, 0.0
  %vm264 = vcmp.gt.f32.partialorder %v200, 0.0
  %vm265 = vcmp.gt.f32.partialorder %v201, 0.0
  %vm266 = vcmp.gt.f32.partialorder %v202, 0.0
  %vm267 = vcmp.gt.f32.partialorder %v203, 0.0
  %vm268 = vcmp.gt.f32.partialorder %v204, 0.0
  %vm269 = vcmp.gt.f32.partialorder %v205, 0.0
  %vm270 = vcmp.gt.f32.partialorder %v206, 0.0
  %vm271 = vcmp.gt.f32.partialorder %v207, 0.0
  %vm272 = vcmp.gt.f32.partialorder %v208, 0.0
  %vm273 = vcmp.gt.f32.partialorder %v209, 0.0
  %vm274 = vcmp.gt.f32.partialorder %v210, 0.0
  %vm275 = vcmp.gt.f32.partialorder %v211, 0.0
  %vm276 = vcmp.gt.f32.partialorder %v212, 0.0
  %vm277 = vcmp.gt.f32.partialorder %v213, 0.0
  %vm278 = vcmp.gt.f32.partialorder %v214, 0.0
  %vm279 = vcmp.gt.f32.partialorder %v215, 0.0
  %vm280 = vcmp.gt.f32.partialorder %v216, 0.0
  %vm281 = vcmp.gt.f32.partialorder %v217, 0.0
  %vm282 = vcmp.gt.f32.partialorder %v218, 0.0
  %vm283 = vcmp.gt.f32.partialorder %v219, 0.0
  %vm284 = vcmp.gt.f32.partialorder %v220, 0.0
  %vm285 = vcmp.gt.f32.partialorder %v221, 0.0
  %vm286 = vcmp.gt.f32.partialorder %v222, 0.0
  %v287 = vld [vmem:[%s3] sm:$0x1]
  %v289 = vlaneseq
  %v290 = vshrl.u32 %v289, 7
  %v291 = vsub.s32 0, %v290
  %v292 = vrot.slane %v287, %v291
  %v294 = vmul.f32 %v292, %v159
  %v295 = vmul.f32 %v292, %v160
  %v296 = vmul.f32 %v292, %v161
  %v297 = vmul.f32 %v292, %v162
  %v298 = vmul.f32 %v292, %v163
  %v299 = vmul.f32 %v292, %v164
  %v300 = vmul.f32 %v292, %v165
  %v301 = vmul.f32 %v292, %v166
  %v302 = vmul.f32 %v292, %v167
  %v303 = vmul.f32 %v292, %v168
  %v304 = vmul.f32 %v292, %v169
  %v305 = vmul.f32 %v292, %v170
  %v306 = vmul.f32 %v292, %v171
  %v307 = vmul.f32 %v292, %v172
  %v308 = vmul.f32 %v292, %v173
  %v309 = vmul.f32 %v292, %v174
  %v310 = vmul.f32 %v292, %v175
  %v311 = vmul.f32 %v292, %v176
  %v312 = vmul.f32 %v292, %v177
  %v313 = vmul.f32 %v292, %v178
  %v314 = vmul.f32 %v292, %v179
  %v315 = vmul.f32 %v292, %v180
  %v316 = vmul.f32 %v292, %v181
  %v317 = vmul.f32 %v292, %v182
  %v318 = vmul.f32 %v292, %v183
  %v319 = vmul.f32 %v292, %v184
  %v320 = vmul.f32 %v292, %v185
  %v321 = vmul.f32 %v292, %v186
  %v322 = vmul.f32 %v292, %v187
  %v323 = vmul.f32 %v292, %v188
  %v324 = vmul.f32 %v292, %v189
  %v325 = vmul.f32 %v292, %v190
  %v326 = vmul.f32 %v292, %v191
  %v327 = vmul.f32 %v292, %v192
  %v328 = vmul.f32 %v292, %v193
  %v329 = vmul.f32 %v292, %v194
  %v330 = vmul.f32 %v292, %v195
  %v331 = vmul.f32 %v292, %v196
  %v332 = vmul.f32 %v292, %v197
  %v333 = vmul.f32 %v292, %v198
  %v334 = vmul.f32 %v292, %v199
  %v335 = vmul.f32 %v292, %v200
  %v336 = vmul.f32 %v292, %v201
  %v337 = vmul.f32 %v292, %v202
  %v338 = vmul.f32 %v292, %v203
  %v339 = vmul.f32 %v292, %v204
  %v340 = vmul.f32 %v292, %v205
  %v341 = vmul.f32 %v292, %v206
  %v342 = vmul.f32 %v292, %v207
  %v343 = vmul.f32 %v292, %v208
  %v344 = vmul.f32 %v292, %v209
  %v345 = vmul.f32 %v292, %v210
  %v346 = vmul.f32 %v292, %v211
  %v347 = vmul.f32 %v292, %v212
  %v348 = vmul.f32 %v292, %v213
  %v349 = vmul.f32 %v292, %v214
  %v350 = vmul.f32 %v292, %v215
  %v351 = vmul.f32 %v292, %v216
  %v352 = vmul.f32 %v292, %v217
  %v353 = vmul.f32 %v292, %v218
  %v354 = vmul.f32 %v292, %v219
  %v355 = vmul.f32 %v292, %v220
  %v356 = vmul.f32 %v292, %v221
  %v357 = vmul.f32 %v292, %v222
  %v358 = vsel %vm223, %v159, %v294
  %v359 = vsel %vm224, %v160, %v295
  %v360 = vsel %vm225, %v161, %v296
  %v361 = vsel %vm226, %v162, %v297
  %v362 = vsel %vm227, %v163, %v298
  %v363 = vsel %vm228, %v164, %v299
  %v364 = vsel %vm229, %v165, %v300
  %v365 = vsel %vm230, %v166, %v301
  %v366 = vsel %vm231, %v167, %v302
  %v367 = vsel %vm232, %v168, %v303
  %v368 = vsel %vm233, %v169, %v304
  %v369 = vsel %vm234, %v170, %v305
  %v370 = vsel %vm235, %v171, %v306
  %v371 = vsel %vm236, %v172, %v307
  %v372 = vsel %vm237, %v173, %v308
  %v373 = vsel %vm238, %v174, %v309
  %v374 = vsel %vm239, %v175, %v310
  %v375 = vsel %vm240, %v176, %v311
  %v376 = vsel %vm241, %v177, %v312
  %v377 = vsel %vm242, %v178, %v313
  %v378 = vsel %vm243, %v179, %v314
  %v379 = vsel %vm244, %v180, %v315
  %v380 = vsel %vm245, %v181, %v316
  %v381 = vsel %vm246, %v182, %v317
  %v382 = vsel %vm247, %v183, %v318
  %v383 = vsel %vm248, %v184, %v319
  %v384 = vsel %vm249, %v185, %v320
  %v385 = vsel %vm250, %v186, %v321
  %v386 = vsel %vm251, %v187, %v322
  %v387 = vsel %vm252, %v188, %v323
  %v388 = vsel %vm253, %v189, %v324
  %v389 = vsel %vm254, %v190, %v325
  %v390 = vsel %vm255, %v191, %v326
  %v391 = vsel %vm256, %v192, %v327
  %v392 = vsel %vm257, %v193, %v328
  %v393 = vsel %vm258, %v194, %v329
  %v394 = vsel %vm259, %v195, %v330
  %v395 = vsel %vm260, %v196, %v331
  %v396 = vsel %vm261, %v197, %v332
  %v397 = vsel %vm262, %v198, %v333
  %v398 = vsel %vm263, %v199, %v334
  %v399 = vsel %vm264, %v200, %v335
  %v400 = vsel %vm265, %v201, %v336
  %v401 = vsel %vm266, %v202, %v337
  %v402 = vsel %vm267, %v203, %v338
  %v403 = vsel %vm268, %v204, %v339
  %v404 = vsel %vm269, %v205, %v340
  %v405 = vsel %vm270, %v206, %v341
  %v406 = vsel %vm271, %v207, %v342
  %v407 = vsel %vm272, %v208, %v343
  %v408 = vsel %vm273, %v209, %v344
  %v409 = vsel %vm274, %v210, %v345
  %v410 = vsel %vm275, %v211, %v346
  %v411 = vsel %vm276, %v212, %v347
  %v412 = vsel %vm277, %v213, %v348
  %v413 = vsel %vm278, %v214, %v349
  %v414 = vsel %vm279, %v215, %v350
  %v415 = vsel %vm280, %v216, %v351
  %v416 = vsel %vm281, %v217, %v352
  %v417 = vsel %vm282, %v218, %v353
  %v418 = vsel %vm283, %v219, %v354
  %v419 = vsel %vm284, %v220, %v355
  %v420 = vsel %vm285, %v221, %v356
  %v421 = vsel %vm286, %v222, %v357
  %422 = vst [vmem:[%s4] sm:$0xff] %v358
  %423 = vst [vmem:[%s4 + $0x8] sm:$0xff] %v359
  %424 = vst [vmem:[%s4 + $0x10] sm:$0xff] %v360
  %425 = vst [vmem:[%s4 + $0x18] sm:$0xff] %v361
  %426 = vst [vmem:[%s4 + $0x20] sm:$0xff] %v362
  %427 = vst [vmem:[%s4 + $0x28] sm:$0xff] %v363
  %428 = vst [vmem:[%s4 + $0x30] sm:$0xff] %v364
  %429 = vst [vmem:[%s4 + $0x38] sm:$0xff] %v365
  %430 = vst [vmem:[%s4 + $0x40] sm:$0xff] %v366
  %431 = vst [vmem:[%s4 + $0x48] sm:$0xff] %v367
  %432 = vst [vmem:[%s4 + $0x50] sm:$0xff] %v368
  %433 = vst [vmem:[%s4 + $0x58] sm:$0xff] %v369
  %434 = vst [vmem:[%s4 + $0x60] sm:$0xff] %v370
  %435 = vst [vmem:[%s4 + $0x68] sm:$0xff] %v371
  %436 = vst [vmem:[%s4 + $0x70] sm:$0xff] %v372
  %437 = vst [vmem:[%s4 + $0x78] sm:$0xff] %v373
  %438 = vst [vmem:[%s4 + $0x80] sm:$0xff] %v374
  %439 = vst [vmem:[%s4 + $0x88] sm:$0xff] %v375
  %440 = vst [vmem:[%s4 + $0x90] sm:$0xff] %v376
  %441 = vst [vmem:[%s4 + $0x98] sm:$0xff] %v377
  %442 = vst [vmem:[%s4 + $0xa0] sm:$0xff] %v378
  %443 = vst [vmem:[%s4 + $0xa8] sm:$0xff] %v379
  %444 = vst [vmem:[%s4 + $0xb0] sm:$0xff] %v380
  %445 = vst [vmem:[%s4 + $0xb8] sm:$0xff] %v381
  %446 = vst [vmem:[%s4 + $0xc0] sm:$0xff] %v382
  %447 = vst [vmem:[%s4 + $0xc8] sm:$0xff] %v383
  %448 = vst [vmem:[%s4 + $0xd0] sm:$0xff] %v384
  %449 = vst [vmem:[%s4 + $0xd8] sm:$0xff] %v385
  %450 = vst [vmem:[%s4 + $0xe0] sm:$0xff] %v386
  %451 = vst [vmem:[%s4 + $0xe8] sm:$0xff] %v387
  %452 = vst [vmem:[%s4 + $0xf0] sm:$0xff] %v388
  %453 = vst [vmem:[%s4 + $0xf8] sm:$0xff] %v389
  %454 = vst [vmem:[%s4 + $0x100] sm:$0xff] %v390
  %455 = vst [vmem:[%s4 + $0x108] sm:$0xff] %v391
  %456 = vst [vmem:[%s4 + $0x110] sm:$0xff] %v392
  %457 = vst [vmem:[%s4 + $0x118] sm:$0xff] %v393
  %458 = vst [vmem:[%s4 + $0x120] sm:$0xff] %v394
  %459 = vst [vmem:[%s4 + $0x128] sm:$0xff] %v395
  %460 = vst [vmem:[%s4 + $0x130] sm:$0xff] %v396
  %461 = vst [vmem:[%s4 + $0x138] sm:$0xff] %v397
  %462 = vst [vmem:[%s4 + $0x140] sm:$0xff] %v398
  %463 = vst [vmem:[%s4 + $0x148] sm:$0xff] %v399
  %464 = vst [vmem:[%s4 + $0x150] sm:$0xff] %v400
  %465 = vst [vmem:[%s4 + $0x158] sm:$0xff] %v401
  %466 = vst [vmem:[%s4 + $0x160] sm:$0xff] %v402
  %467 = vst [vmem:[%s4 + $0x168] sm:$0xff] %v403
  %468 = vst [vmem:[%s4 + $0x170] sm:$0xff] %v404
  %469 = vst [vmem:[%s4 + $0x178] sm:$0xff] %v405
  %470 = vst [vmem:[%s4 + $0x180] sm:$0xff] %v406
  %471 = vst [vmem:[%s4 + $0x188] sm:$0xff] %v407
  %472 = vst [vmem:[%s4 + $0x190] sm:$0xff] %v408
  %473 = vst [vmem:[%s4 + $0x198] sm:$0xff] %v409
  %474 = vst [vmem:[%s4 + $0x1a0] sm:$0xff] %v410
  %475 = vst [vmem:[%s4 + $0x1a8] sm:$0xff] %v411
  %476 = vst [vmem:[%s4 + $0x1b0] sm:$0xff] %v412
  %477 = vst [vmem:[%s4 + $0x1b8] sm:$0xff] %v413
  %478 = vst [vmem:[%s4 + $0x1c0] sm:$0xff] %v414
  %479 = vst [vmem:[%s4 + $0x1c8] sm:$0xff] %v415
  %480 = vst [vmem:[%s4 + $0x1d0] sm:$0xff] %v416
  %481 = vst [vmem:[%s4 + $0x1d8] sm:$0xff] %v417
  %482 = vst [vmem:[%s4 + $0x1e0] sm:$0xff] %v418
  %483 = vst [vmem:[%s4 + $0x1e8] sm:$0xff] %v419
  %484 = vst [vmem:[%s4 + $0x1f0] sm:$0xff] %v420
  %485 = vst [vmem:[%s4 + $0x1f8] sm:$0xff] %v421
  // Predicated region
  $region18: #{conv_transpose_layer.15} parent=0 // pred_check
    _
  $region19: #{conv_transpose_layer.15} parent=0 // pred_check_branch
    %487 = sbr.rel (0) target = $region21
  $region20: #{conv_transpose_layer.15} parent=0 // pred_region
    _
  $region21: #{conv_transpose_layer.15} parent=0 // pred_fallthru
    _
  // Predicated region
  $region22: #{conv_transpose_layer.15} parent=0 // pred_check
    _
  $region23: #{conv_transpose_layer.15} parent=0 // pred_check_branch
    %489 = sbr.rel (0) target = $region25
  $region24: #{conv_transpose_layer.15} parent=0 // pred_region
    _
  $region25: #{conv_transpose_layer.15} parent=0 // pred_fallthru
    _

// kernel: conv_transpose_layer.10
$region0: #{conv_transpose_layer.10}
  #allocation0 [shape = 'u32[]', space=smem, size = 0x4, offset = 0x4, fixed_abs, tag = 'smem constant byte address 0x4 - core index']
  #allocation1 [shape = 'u32[144,128]{1,0:T(1,128)}', space=vmem, size = 0x12000, scoped, tag = 'internal scratch']
  %s0 = inlined_call_operand.vmem [shape: bf16[512,8], index: 0, kind: input, shape index: {}]
  %s1 = inlined_call_operand.vmem [shape: bf16[8,128], index: 1, kind: input, shape index: {}]
  %s2 = inlined_call_operand.vmem [shape: f32[1,128], index: 2, kind: input, shape index: {}]
  %s3 = inlined_call_operand.vmem [shape: f32[512,128], index: 3, kind: output, shape index: {0}]
  %s4 = inlined_call_operand.vmem [shape: f32[1,8,128], index: 4, kind: output, shape index: {1}]
  %5 = xla_tuple %s3, %s4
  %s6 = sld [smem:[#allocation0]]
  $region30: #{conv_transpose_layer.10} parent=0
    _
  %s8 = ssub.s32 1, %s6
  %s9 = scalar_select 0, %s8, %s6
  // Predicated region
  $region2: #{conv_transpose_layer.10} parent=0 // pred_check
    _
  $region3: #{conv_transpose_layer.10} parent=0 // pred_check_branch
    %11 = sbr.rel (0) target = $region5
  $region4: #{conv_transpose_layer.10} parent=0 // pred_region
    _
  $region5: #{conv_transpose_layer.10} parent=0 // pred_fallthru
    _
  // Predicated region
  $region6: #{conv_transpose_layer.10} parent=0 // pred_check
    _
  $region7: #{conv_transpose_layer.10} parent=0 // pred_check_branch
    %13 = sbr.rel (0) target = $region9
  $region8: #{conv_transpose_layer.10} parent=0 // pred_region
    _
  $region9: #{conv_transpose_layer.10} parent=0 // pred_fallthru
    _
  // Predicated region
  $region10: #{conv_transpose_layer.10} parent=0 // pred_check
    _
  $region11: #{conv_transpose_layer.10} parent=0 // pred_check_branch
    %15 = sbr.rel (0) target = $region13
  $region12: #{conv_transpose_layer.10} parent=0 // pred_region
    _
  $region13: #{conv_transpose_layer.10} parent=0 // pred_fallthru
    _
  %v17 = vld [vmem:[%s0] sm:$0xf]
  %v18 = vld [vmem:[%s0 + $0x4] sm:$0xf]
  %v19 = vld [vmem:[%s0 + $0x8] sm:$0xf]
  %v20 = vld [vmem:[%s0 + $0xc] sm:$0xf]
  %v21 = vld [vmem:[%s0 + $0x10] sm:$0xf]
  %v22 = vld [vmem:[%s0 + $0x14] sm:$0xf]
  %v23 = vld [vmem:[%s0 + $0x18] sm:$0xf]
  %v24 = vld [vmem:[%s0 + $0x1c] sm:$0xf]
  %v25 = vld [vmem:[%s0 + $0x20] sm:$0xf]
  %v26 = vld [vmem:[%s0 + $0x24] sm:$0xf]
  %v27 = vld [vmem:[%s0 + $0x28] sm:$0xf]
  %v28 = vld [vmem:[%s0 + $0x2c] sm:$0xf]
  %v29 = vld [vmem:[%s0 + $0x30] sm:$0xf]
  %v30 = vld [vmem:[%s0 + $0x34] sm:$0xf]
  %v31 = vld [vmem:[%s0 + $0x38] sm:$0xf]
  %v32 = vld [vmem:[%s0 + $0x3c] sm:$0xf]
  %v33 = vld [vmem:[%s0 + $0x40] sm:$0xf]
  %v34 = vld [vmem:[%s0 + $0x44] sm:$0xf]
  %v35 = vld [vmem:[%s0 + $0x48] sm:$0xf]
  %v36 = vld [vmem:[%s0 + $0x4c] sm:$0xf]
  %v37 = vld [vmem:[%s0 + $0x50] sm:$0xf]
  %v38 = vld [vmem:[%s0 + $0x54] sm:$0xf]
  %v39 = vld [vmem:[%s0 + $0x58] sm:$0xf]
  %v40 = vld [vmem:[%s0 + $0x5c] sm:$0xf]
  %v41 = vld [vmem:[%s0 + $0x60] sm:$0xf]
  %v42 = vld [vmem:[%s0 + $0x64] sm:$0xf]
  %v43 = vld [vmem:[%s0 + $0x68] sm:$0xf]
  %v44 = vld [vmem:[%s0 + $0x6c] sm:$0xf]
  %v45 = vld [vmem:[%s0 + $0x70] sm:$0xf]
  %v46 = vld [vmem:[%s0 + $0x74] sm:$0xf]
  %v47 = vld [vmem:[%s0 + $0x78] sm:$0xf]
  %v48 = vld [vmem:[%s0 + $0x7c] sm:$0xf]
  %v49 = vld [vmem:[%s0 + $0x80] sm:$0xf]
  %v50 = vld [vmem:[%s0 + $0x84] sm:$0xf]
  %v51 = vld [vmem:[%s0 + $0x88] sm:$0xf]
  %v52 = vld [vmem:[%s0 + $0x8c] sm:$0xf]
  %v53 = vld [vmem:[%s0 + $0x90] sm:$0xf]
  %v54 = vld [vmem:[%s0 + $0x94] sm:$0xf]
  %v55 = vld [vmem:[%s0 + $0x98] sm:$0xf]
  %v56 = vld [vmem:[%s0 + $0x9c] sm:$0xf]
  %v57 = vld [vmem:[%s0 + $0xa0] sm:$0xf]
  %v58 = vld [vmem:[%s0 + $0xa4] sm:$0xf]
  %v59 = vld [vmem:[%s0 + $0xa8] sm:$0xf]
  %v60 = vld [vmem:[%s0 + $0xac] sm:$0xf]
  %v61 = vld [vmem:[%s0 + $0xb0] sm:$0xf]
  %v62 = vld [vmem:[%s0 + $0xb4] sm:$0xf]
  %v63 = vld [vmem:[%s0 + $0xb8] sm:$0xf]
  %v64 = vld [vmem:[%s0 + $0xbc] sm:$0xf]
  %v65 = vld [vmem:[%s0 + $0xc0] sm:$0xf]
  %v66 = vld [vmem:[%s0 + $0xc4] sm:$0xf]
  %v67 = vld [vmem:[%s0 + $0xc8] sm:$0xf]
  %v68 = vld [vmem:[%s0 + $0xcc] sm:$0xf]
  %v69 = vld [vmem:[%s0 + $0xd0] sm:$0xf]
  %v70 = vld [vmem:[%s0 + $0xd4] sm:$0xf]
  %v71 = vld [vmem:[%s0 + $0xd8] sm:$0xf]
  %v72 = vld [vmem:[%s0 + $0xdc] sm:$0xf]
  %v73 = vld [vmem:[%s0 + $0xe0] sm:$0xf]
  %v74 = vld [vmem:[%s0 + $0xe4] sm:$0xf]
  %v75 = vld [vmem:[%s0 + $0xe8] sm:$0xf]
  %v76 = vld [vmem:[%s0 + $0xec] sm:$0xf]
  %v77 = vld [vmem:[%s0 + $0xf0] sm:$0xf]
  %v78 = vld [vmem:[%s0 + $0xf4] sm:$0xf]
  %v79 = vld [vmem:[%s0 + $0xf8] sm:$0xf]
  %v80 = vld [vmem:[%s0 + $0xfc] sm:$0xf]
  %v81 = vld [vmem:[%s1] sm:$0xf]
  %v82 = vld [vmem:[%s2] sm:$0x1]
  %v84 = vlaneseq
  %v85 = vshrl.u32 %v84, 7
  %v86 = vsub.s32 0, %v85
  %v87 = vrot.slane %v82, %v86
  %v153 = vunpack.c.l.b16 %v17
  %v154 = vunpack.c.l.b16 %v18
  %v155 = vunpack.c.l.b16 %v19
  %v156 = vunpack.c.l.b16 %v20
  %v157 = vunpack.c.l.b16 %v21
  %v158 = vunpack.c.l.b16 %v22
  %v159 = vunpack.c.l.b16 %v23
  %v160 = vunpack.c.l.b16 %v24
  %v161 = vunpack.c.l.b16 %v25
  %v162 = vunpack.c.l.b16 %v26
  %v163 = vunpack.c.l.b16 %v27
  %v164 = vunpack.c.l.b16 %v28
  %v165 = vunpack.c.l.b16 %v29
  %v166 = vunpack.c.l.b16 %v30
  %v167 = vunpack.c.l.b16 %v31
  %v168 = vunpack.c.l.b16 %v32
  %v169 = vunpack.c.l.b16 %v33
  %v170 = vunpack.c.l.b16 %v34
  %v171 = vunpack.c.l.b16 %v35
  %v172 = vunpack.c.l.b16 %v36
  %v173 = vunpack.c.l.b16 %v37
  %v174 = vunpack.c.l.b16 %v38
  %v175 = vunpack.c.l.b16 %v39
  %v176 = vunpack.c.l.b16 %v40
  %v177 = vunpack.c.l.b16 %v41
  %v178 = vunpack.c.l.b16 %v42
  %v179 = vunpack.c.l.b16 %v43
  %v180 = vunpack.c.l.b16 %v44
  %v181 = vunpack.c.l.b16 %v45
  %v182 = vunpack.c.l.b16 %v46
  %v183 = vunpack.c.l.b16 %v47
  %v184 = vunpack.c.l.b16 %v48
  %v185 = vunpack.c.l.b16 %v49
  %v186 = vunpack.c.l.b16 %v50
  %v187 = vunpack.c.l.b16 %v51
  %v188 = vunpack.c.l.b16 %v52
  %v189 = vunpack.c.l.b16 %v53
  %v190 = vunpack.c.l.b16 %v54
  %v191 = vunpack.c.l.b16 %v55
  %v192 = vunpack.c.l.b16 %v56
  %v193 = vunpack.c.l.b16 %v57
  %v194 = vunpack.c.l.b16 %v58
  %v195 = vunpack.c.l.b16 %v59
  %v196 = vunpack.c.l.b16 %v60
  %v197 = vunpack.c.l.b16 %v61
  %v198 = vunpack.c.l.b16 %v62
  %v199 = vunpack.c.l.b16 %v63
  %v200 = vunpack.c.l.b16 %v64
  %v201 = vunpack.c.l.b16 %v65
  %v202 = vunpack.c.l.b16 %v66
  %v203 = vunpack.c.l.b16 %v67
  %v204 = vunpack.c.l.b16 %v68
  %v205 = vunpack.c.l.b16 %v69
  %v206 = vunpack.c.l.b16 %v70
  %v207 = vunpack.c.l.b16 %v71
  %v208 = vunpack.c.l.b16 %v72
  %v209 = vunpack.c.l.b16 %v73
  %v210 = vunpack.c.l.b16 %v74
  %v211 = vunpack.c.l.b16 %v75
  %v212 = vunpack.c.l.b16 %v76
  %v213 = vunpack.c.l.b16 %v77
  %v214 = vunpack.c.l.b16 %v78
  %v215 = vunpack.c.l.b16 %v79
  %v216 = vunpack.c.l.b16 %v80
  %v217 = vpack.c.b16 %v154, %v153
  %v218 = vpack.c.b16 %v156, %v155
  %v219 = vpack.c.b16 %v158, %v157
  %v220 = vpack.c.b16 %v160, %v159
  %v221 = vpack.c.b16 %v162, %v161
  %v222 = vpack.c.b16 %v164, %v163
  %v223 = vpack.c.b16 %v166, %v165
  %v224 = vpack.c.b16 %v168, %v167
  %v225 = vpack.c.b16 %v170, %v169
  %v226 = vpack.c.b16 %v172, %v171
  %v227 = vpack.c.b16 %v174, %v173
  %v228 = vpack.c.b16 %v176, %v175
  %v229 = vpack.c.b16 %v178, %v177
  %v230 = vpack.c.b16 %v180, %v179
  %v231 = vpack.c.b16 %v182, %v181
  %v232 = vpack.c.b16 %v184, %v183
  %v233 = vpack.c.b16 %v186, %v185
  %v234 = vpack.c.b16 %v188, %v187
  %v235 = vpack.c.b16 %v190, %v189
  %v236 = vpack.c.b16 %v192, %v191
  %v237 = vpack.c.b16 %v194, %v193
  %v238 = vpack.c.b16 %v196, %v195
  %v239 = vpack.c.b16 %v198, %v197
  %v240 = vpack.c.b16 %v200, %v199
  %v241 = vpack.c.b16 %v202, %v201
  %v242 = vpack.c.b16 %v204, %v203
  %v243 = vpack.c.b16 %v206, %v205
  %v244 = vpack.c.b16 %v208, %v207
  %v245 = vpack.c.b16 %v210, %v209
  %v246 = vpack.c.b16 %v212, %v211
  %v247 = vpack.c.b16 %v214, %v213
  %v248 = vpack.c.b16 %v216, %v215
  %vm249 = vcmask 64512
  %v251 = vsel %vm249, %v217, 0
  %v254 = vsel %vm249, %v218, 0
  %v257 = vsel %vm249, %v219, 0
  %v260 = vsel %vm249, %v220, 0
  %v263 = vsel %vm249, %v221, 0
  %v266 = vsel %vm249, %v222, 0
  %v269 = vsel %vm249, %v223, 0
  %v272 = vsel %vm249, %v224, 0
  %v275 = vsel %vm249, %v225, 0
  %v278 = vsel %vm249, %v226, 0
  %v281 = vsel %vm249, %v227, 0
  %v284 = vsel %vm249, %v228, 0
  %v287 = vsel %vm249, %v229, 0
  %v290 = vsel %vm249, %v230, 0
  %v293 = vsel %vm249, %v231, 0
  %v296 = vsel %vm249, %v232, 0
  %v299 = vsel %vm249, %v233, 0
  %v302 = vsel %vm249, %v234, 0
  %v305 = vsel %vm249, %v235, 0
  %v308 = vsel %vm249, %v236, 0
  %v311 = vsel %vm249, %v237, 0
  %v314 = vsel %vm249, %v238, 0
  %v317 = vsel %vm249, %v239, 0
  %v320 = vsel %vm249, %v240, 0
  %v323 = vsel %vm249, %v241, 0
  %v326 = vsel %vm249, %v242, 0
  %v329 = vsel %vm249, %v243, 0
  %v332 = vsel %vm249, %v244, 0
  %v335 = vsel %vm249, %v245, 0
  %v338 = vsel %vm249, %v246, 0
  %v341 = vsel %vm249, %v247, 0
  %v344 = vsel %vm249, %v248, 0
  %vm346 = vcmask 1043456
  %v348 = vsel %vm346, %v81, 0
  %350 = vmatprep.subr.bf16.mxu0 0
  %351 = vmatpush1.bf16.msra.mxu0 0
  %352 = vmatprep.subr.bf16.mxu0 0
  %353 = vmatpush1.bf16.msra.mxu0 0
  %354 = vmatprep.subr.bf16.mxu0 0
  %355 = vmatpush1.bf16.msra.mxu0 0
  %356 = vmatprep.subr.bf16.mxu0 0
  %357 = vmatpush1.bf16.msra.mxu0 0
  %358 = vmatprep.subr.bf16.mxu0 0
  %359 = vmatpush1.bf16.msra.mxu0 0
  %360 = vmatprep.subr.bf16.mxu0 0
  %361 = vmatpush1.bf16.msra.mxu0 0
  %362 = vmatprep.subr.bf16.mxu0 0
  %363 = vmatpush1.bf16.msra.mxu0 0
  %364 = vmatprep.subr.bf16.mxu0 0
  %365 = vmatpush1.bf16.msra.mxu0 %v348
  %366 = vmatprep.subr.bf16.mxu0 0
  %367 = vmatpush2.bf16.msra.mxu0 0
  %368 = vmatprep.subr.bf16.mxu0 0
  %369 = vmatpush2.bf16.msra.mxu0 0
  %370 = vmatprep.subr.bf16.mxu0 0
  %371 = vmatpush2.bf16.msra.mxu0 0
  %372 = vmatprep.subr.bf16.mxu0 0
  %373 = vmatpush2.bf16.msra.mxu0 0
  %374 = vmatprep.subr.bf16.mxu0 0
  %375 = vmatpush2.bf16.msra.mxu0 0
  %376 = vmatprep.subr.bf16.mxu0 0
  %377 = vmatpush2.bf16.msra.mxu0 0
  %378 = vmatprep.subr.bf16.mxu0 0
  %379 = vmatpush2.bf16.msra.mxu0 0
  %380 = vmatprep.subr.bf16.mxu0 0
  %381 = vmatpush2.bf16.msra.mxu0 0
  %382 = vmatprep.mubr.bf16.mxu0 0
  %383 = vmatmul.mubr.bf16.gmra.mxu0 %v251
  %v384 = vpop.f32.mrf.mxu0
  %v385 = vadd.f32 %v87, %v384
  %v386 = vpop.f32.mrf.mxu0
  %v387 = vpop.f32.mrf.mxu0
  %v388 = vadd.f32 %v87, %v387
  %v389 = vpop.f32.mrf.mxu0
  %390 = vmatprep.mubr.bf16.mxu0 0
  %391 = vmatmul.mubr.bf16.gmra.mxu0 %v254
  %v392 = vpop.f32.mrf.mxu0
  %v393 = vadd.f32 %v87, %v392
  %v394 = vpop.f32.mrf.mxu0
  %v395 = vpop.f32.mrf.mxu0
  %v396 = vadd.f32 %v87, %v395
  %v397 = vpop.f32.mrf.mxu0
  %398 = vmatprep.mubr.bf16.mxu0 0
  %399 = vmatmul.mubr.bf16.gmra.mxu0 %v257
  %v400 = vpop.f32.mrf.mxu0
  %v401 = vadd.f32 %v87, %v400
  %v402 = vpop.f32.mrf.mxu0
  %v403 = vpop.f32.mrf.mxu0
  %v404 = vadd.f32 %v87, %v403
  %v405 = vpop.f32.mrf.mxu0
  %406 = vmatprep.mubr.bf16.mxu0 0
  %407 = vmatmul.mubr.bf16.gmra.mxu0 %v260
  %v408 = vpop.f32.mrf.mxu0
  %v409 = vadd.f32 %v87, %v408
  %v410 = vpop.f32.mrf.mxu0
  %v411 = vpop.f32.mrf.mxu0
  %v412 = vadd.f32 %v87, %v411
  %v413 = vpop.f32.mrf.mxu0
  %414 = vmatprep.mubr.bf16.mxu0 0
  %415 = vmatmul.mubr.bf16.gmra.mxu0 %v263
  %v416 = vpop.f32.mrf.mxu0
  %v417 = vadd.f32 %v87, %v416
  %v418 = vpop.f32.mrf.mxu0
  %v419 = vpop.f32.mrf.mxu0
  %v420 = vadd.f32 %v87, %v419
  %v421 = vpop.f32.mrf.mxu0
  %422 = vmatprep.mubr.bf16.mxu0 0
  %423 = vmatmul.mubr.bf16.gmra.mxu0 %v266
  %v424 = vpop.f32.mrf.mxu0
  %v425 = vadd.f32 %v87, %v424
  %v426 = vpop.f32.mrf.mxu0
  %v427 = vpop.f32.mrf.mxu0
  %v428 = vadd.f32 %v87, %v427
  %v429 = vpop.f32.mrf.mxu0
  %430 = vmatprep.mubr.bf16.mxu0 0
  %431 = vmatmul.mubr.bf16.gmra.mxu0 %v269
  %v432 = vpop.f32.mrf.mxu0
  %v433 = vadd.f32 %v87, %v432
  %v434 = vpop.f32.mrf.mxu0
  %v435 = vpop.f32.mrf.mxu0
  %v436 = vadd.f32 %v87, %v435
  %v437 = vpop.f32.mrf.mxu0
  %438 = vmatprep.mubr.bf16.mxu0 0
  %439 = vmatmul.mubr.bf16.gmra.mxu0 %v272
  %v440 = vpop.f32.mrf.mxu0
  %v441 = vadd.f32 %v87, %v440
  %v442 = vpop.f32.mrf.mxu0
  %v443 = vpop.f32.mrf.mxu0
  %v444 = vadd.f32 %v87, %v443
  %v445 = vpop.f32.mrf.mxu0
  %446 = vmatprep.mubr.bf16.mxu0 0
  %447 = vmatmul.mubr.bf16.gmra.mxu0 %v275
  %v448 = vpop.f32.mrf.mxu0
  %v449 = vadd.f32 %v87, %v448
  %v450 = vpop.f32.mrf.mxu0
  %v451 = vpop.f32.mrf.mxu0
  %v452 = vadd.f32 %v87, %v451
  %v453 = vpop.f32.mrf.mxu0
  %454 = vmatprep.mubr.bf16.mxu0 0
  %455 = vmatmul.mubr.bf16.gmra.mxu0 %v278
  %v456 = vpop.f32.mrf.mxu0
  %v457 = vadd.f32 %v87, %v456
  %v458 = vpop.f32.mrf.mxu0
  %v459 = vpop.f32.mrf.mxu0
  %v460 = vadd.f32 %v87, %v459
  %v461 = vpop.f32.mrf.mxu0
  %462 = vmatprep.mubr.bf16.mxu0 0
  %463 = vmatmul.mubr.bf16.gmra.mxu0 %v281
  %v464 = vpop.f32.mrf.mxu0
  %v465 = vadd.f32 %v87, %v464
  %v466 = vpop.f32.mrf.mxu0
  %v467 = vpop.f32.mrf.mxu0
  %v468 = vadd.f32 %v87, %v467
  %v469 = vpop.f32.mrf.mxu0
  %470 = vmatprep.mubr.bf16.mxu0 0
  %471 = vmatmul.mubr.bf16.gmra.mxu0 %v284
  %v472 = vpop.f32.mrf.mxu0
  %v473 = vadd.f32 %v87, %v472
  %v474 = vpop.f32.mrf.mxu0
  %v475 = vpop.f32.mrf.mxu0
  %v476 = vadd.f32 %v87, %v475
  %v477 = vpop.f32.mrf.mxu0
  %478 = vmatprep.mubr.bf16.mxu0 0
  %479 = vmatmul.mubr.bf16.gmra.mxu0 %v287
  %v480 = vpop.f32.mrf.mxu0
  %v481 = vadd.f32 %v87, %v480
  %v482 = vpop.f32.mrf.mxu0
  %v483 = vpop.f32.mrf.mxu0
  %v484 = vadd.f32 %v87, %v483
  %v485 = vpop.f32.mrf.mxu0
  %486 = vmatprep.mubr.bf16.mxu0 0
  %487 = vmatmul.mubr.bf16.gmra.mxu0 %v290
  %v488 = vpop.f32.mrf.mxu0
  %v489 = vadd.f32 %v87, %v488
  %v490 = vpop.f32.mrf.mxu0
  %v491 = vpop.f32.mrf.mxu0
  %v492 = vadd.f32 %v87, %v491
  %v493 = vpop.f32.mrf.mxu0
  %494 = vmatprep.mubr.bf16.mxu0 0
  %495 = vmatmul.mubr.bf16.gmra.mxu0 %v293
  %v496 = vpop.f32.mrf.mxu0
  %v497 = vadd.f32 %v87, %v496
  %v498 = vpop.f32.mrf.mxu0
  %v499 = vpop.f32.mrf.mxu0
  %v500 = vadd.f32 %v87, %v499
  %v501 = vpop.f32.mrf.mxu0
  %502 = vmatprep.mubr.bf16.mxu0 0
  %503 = vmatmul.mubr.bf16.gmra.mxu0 %v296
  %v504 = vpop.f32.mrf.mxu0
  %v505 = vadd.f32 %v87, %v504
  %v506 = vpop.f32.mrf.mxu0
  %v507 = vpop.f32.mrf.mxu0
  %v508 = vadd.f32 %v87, %v507
  %v509 = vpop.f32.mrf.mxu0
  %510 = vmatprep.mubr.bf16.mxu0 0
  %511 = vmatmul.mubr.bf16.gmra.mxu0 %v299
  %v512 = vpop.f32.mrf.mxu0
  %v513 = vadd.f32 %v87, %v512
  %v514 = vpop.f32.mrf.mxu0
  %v515 = vpop.f32.mrf.mxu0
  %v516 = vadd.f32 %v87, %v515
  %v517 = vpop.f32.mrf.mxu0
  %518 = vmatprep.mubr.bf16.mxu0 0
  %519 = vmatmul.mubr.bf16.gmra.mxu0 %v302
  %v520 = vpop.f32.mrf.mxu0
  %v521 = vadd.f32 %v87, %v520
  %v522 = vpop.f32.mrf.mxu0
  %v523 = vpop.f32.mrf.mxu0
  %v524 = vadd.f32 %v87, %v523
  %v525 = vpop.f32.mrf.mxu0
  %526 = vmatprep.mubr.bf16.mxu0 0
  %527 = vmatmul.mubr.bf16.gmra.mxu0 %v305
  %v528 = vpop.f32.mrf.mxu0
  %v529 = vadd.f32 %v87, %v528
  %v530 = vpop.f32.mrf.mxu0
  %v531 = vpop.f32.mrf.mxu0
  %v532 = vadd.f32 %v87, %v531
  %v533 = vpop.f32.mrf.mxu0
  %534 = vmatprep.mubr.bf16.mxu0 0
  %535 = vmatmul.mubr.bf16.gmra.mxu0 %v308
  %v536 = vpop.f32.mrf.mxu0
  %v537 = vadd.f32 %v87, %v536
  %v538 = vpop.f32.mrf.mxu0
  %v539 = vpop.f32.mrf.mxu0
  %v540 = vadd.f32 %v87, %v539
  %v541 = vpop.f32.mrf.mxu0
  %542 = vmatprep.mubr.bf16.mxu0 0
  %543 = vmatmul.mubr.bf16.gmra.mxu0 %v311
  %v544 = vpop.f32.mrf.mxu0
  %v545 = vadd.f32 %v87, %v544
  %v546 = vpop.f32.mrf.mxu0
  %v547 = vpop.f32.mrf.mxu0
  %v548 = vadd.f32 %v87, %v547
  %v549 = vpop.f32.mrf.mxu0
  %550 = vmatprep.mubr.bf16.mxu0 0
  %551 = vmatmul.mubr.bf16.gmra.mxu0 %v314
  %v552 = vpop.f32.mrf.mxu0
  %v553 = vadd.f32 %v87, %v552
  %v554 = vpop.f32.mrf.mxu0
  %v555 = vpop.f32.mrf.mxu0
  %v556 = vadd.f32 %v87, %v555
  %v557 = vpop.f32.mrf.mxu0
  %558 = vmatprep.mubr.bf16.mxu0 0
  %559 = vmatmul.mubr.bf16.gmra.mxu0 %v317
  %v560 = vpop.f32.mrf.mxu0
  %v561 = vadd.f32 %v87, %v560
  %v562 = vpop.f32.mrf.mxu0
  %v563 = vpop.f32.mrf.mxu0
  %v564 = vadd.f32 %v87, %v563
  %v565 = vpop.f32.mrf.mxu0
  %566 = vmatprep.mubr.bf16.mxu0 0
  %567 = vmatmul.mubr.bf16.gmra.mxu0 %v320
  %v568 = vpop.f32.mrf.mxu0
  %v569 = vadd.f32 %v87, %v568
  %v570 = vpop.f32.mrf.mxu0
  %v571 = vpop.f32.mrf.mxu0
  %v572 = vadd.f32 %v87, %v571
  %v573 = vpop.f32.mrf.mxu0
  %574 = vmatprep.mubr.bf16.mxu0 0
  %575 = vmatmul.mubr.bf16.gmra.mxu0 %v323
  %v576 = vpop.f32.mrf.mxu0
  %v577 = vadd.f32 %v87, %v576
  %v578 = vpop.f32.mrf.mxu0
  %v579 = vpop.f32.mrf.mxu0
  %v580 = vadd.f32 %v87, %v579
  %v581 = vpop.f32.mrf.mxu0
  %582 = vmatprep.mubr.bf16.mxu0 0
  %583 = vmatmul.mubr.bf16.gmra.mxu0 %v326
  %v584 = vpop.f32.mrf.mxu0
  %v585 = vadd.f32 %v87, %v584
  %v586 = vpop.f32.mrf.mxu0
  %v587 = vpop.f32.mrf.mxu0
  %v588 = vadd.f32 %v87, %v587
  %v589 = vpop.f32.mrf.mxu0
  %590 = vmatprep.mubr.bf16.mxu0 0
  %591 = vmatmul.mubr.bf16.gmra.mxu0 %v329
  %v592 = vpop.f32.mrf.mxu0
  %v593 = vadd.f32 %v87, %v592
  %v594 = vpop.f32.mrf.mxu0
  %v595 = vpop.f32.mrf.mxu0
  %v596 = vadd.f32 %v87, %v595
  %v597 = vpop.f32.mrf.mxu0
  %598 = vmatprep.mubr.bf16.mxu0 0
  %599 = vmatmul.mubr.bf16.gmra.mxu0 %v332
  %v600 = vpop.f32.mrf.mxu0
  %v601 = vadd.f32 %v87, %v600
  %v602 = vpop.f32.mrf.mxu0
  %v603 = vpop.f32.mrf.mxu0
  %v604 = vadd.f32 %v87, %v603
  %v605 = vpop.f32.mrf.mxu0
  %606 = vmatprep.mubr.bf16.mxu0 0
  %607 = vmatmul.mubr.bf16.gmra.mxu0 %v335
  %v608 = vpop.f32.mrf.mxu0
  %v609 = vadd.f32 %v87, %v608
  %v610 = vpop.f32.mrf.mxu0
  %v611 = vpop.f32.mrf.mxu0
  %v612 = vadd.f32 %v87, %v611
  %v613 = vpop.f32.mrf.mxu0
  %614 = vmatprep.mubr.bf16.mxu0 0
  %615 = vmatmul.mubr.bf16.gmra.mxu0 %v338
  %v616 = vpop.f32.mrf.mxu0
  %v617 = vadd.f32 %v87, %v616
  %v618 = vpop.f32.mrf.mxu0
  %v619 = vpop.f32.mrf.mxu0
  %v620 = vadd.f32 %v87, %v619
  %v621 = vpop.f32.mrf.mxu0
  %622 = vmatprep.mubr.bf16.mxu0 0
  %623 = vmatmul.mubr.bf16.gmra.mxu0 %v341
  %v624 = vpop.f32.mrf.mxu0
  %v625 = vadd.f32 %v87, %v624
  %v626 = vpop.f32.mrf.mxu0
  %v627 = vpop.f32.mrf.mxu0
  %v628 = vadd.f32 %v87, %v627
  %v629 = vpop.f32.mrf.mxu0
  %630 = vmatprep.mubr.bf16.mxu0 0
  %631 = vmatmul.mubr.bf16.gmra.mxu0 %v344
  %v632 = vpop.f32.mrf.mxu0
  %v633 = vadd.f32 %v87, %v632
  %v634 = vpop.f32.mrf.mxu0
  %v635 = vpop.f32.mrf.mxu0
  %v636 = vadd.f32 %v87, %v635
  %v637 = vpop.f32.mrf.mxu0
  %638 = vdwg.mxu0
  %639 = vst [vmem:[%s3] sm:$0xff] %v385
  %640 = vst [vmem:[%s3 + $0x8] sm:$0xff] %v388
  %641 = vst [vmem:[%s3 + $0x10] sm:$0xff] %v393
  %642 = vst [vmem:[%s3 + $0x18] sm:$0xff] %v396
  %643 = vst [vmem:[%s3 + $0x20] sm:$0xff] %v401
  %644 = vst [vmem:[%s3 + $0x28] sm:$0xff] %v404
  %645 = vst [vmem:[%s3 + $0x30] sm:$0xff] %v409
  %646 = vst [vmem:[%s3 + $0x38] sm:$0xff] %v412
  %647 = vst [vmem:[%s3 + $0x40] sm:$0xff] %v417
  %648 = vst [vmem:[%s3 + $0x48] sm:$0xff] %v420
  %649 = vst [vmem:[%s3 + $0x50] sm:$0xff] %v425
  %650 = vst [vmem:[%s3 + $0x58] sm:$0xff] %v428
  %651 = vst [vmem:[%s3 + $0x60] sm:$0xff] %v433
  %652 = vst [vmem:[%s3 + $0x68] sm:$0xff] %v436
  %653 = vst [vmem:[%s3 + $0x70] sm:$0xff] %v441
  %654 = vst [vmem:[%s3 + $0x78] sm:$0xff] %v444
  %655 = vst [vmem:[%s3 + $0x80] sm:$0xff] %v449
  %656 = vst [vmem:[%s3 + $0x88] sm:$0xff] %v452
  %657 = vst [vmem:[%s3 + $0x90] sm:$0xff] %v457
  %658 = vst [vmem:[%s3 + $0x98] sm:$0xff] %v460
  %659 = vst [vmem:[%s3 + $0xa0] sm:$0xff] %v465
  %660 = vst [vmem:[%s3 + $0xa8] sm:$0xff] %v468
  %661 = vst [vmem:[%s3 + $0xb0] sm:$0xff] %v473
  %662 = vst [vmem:[%s3 + $0xb8] sm:$0xff] %v476
  %663 = vst [vmem:[%s3 + $0xc0] sm:$0xff] %v481
  %664 = vst [vmem:[%s3 + $0xc8] sm:$0xff] %v484
  %665 = vst [vmem:[%s3 + $0xd0] sm:$0xff] %v489
  %666 = vst [vmem:[%s3 + $0xd8] sm:$0xff] %v492
  %667 = vst [vmem:[%s3 + $0xe0] sm:$0xff] %v497
  %668 = vst [vmem:[%s3 + $0xe8] sm:$0xff] %v500
  %669 = vst [vmem:[%s3 + $0xf0] sm:$0xff] %v505
  %670 = vst [vmem:[%s3 + $0xf8] sm:$0xff] %v508
  %671 = vst [vmem:[%s3 + $0x100] sm:$0xff] %v513
  %672 = vst [vmem:[%s3 + $0x108] sm:$0xff] %v516
  %673 = vst [vmem:[%s3 + $0x110] sm:$0xff] %v521
  %674 = vst [vmem:[%s3 + $0x118] sm:$0xff] %v524
  %675 = vst [vmem:[%s3 + $0x120] sm:$0xff] %v529
  %676 = vst [vmem:[%s3 + $0x128] sm:$0xff] %v532
  %677 = vst [vmem:[%s3 + $0x130] sm:$0xff] %v537
  %678 = vst [vmem:[%s3 + $0x138] sm:$0xff] %v540
  %679 = vst [vmem:[%s3 + $0x140] sm:$0xff] %v545
  %680 = vst [vmem:[%s3 + $0x148] sm:$0xff] %v548
  %681 = vst [vmem:[%s3 + $0x150] sm:$0xff] %v553
  %682 = vst [vmem:[%s3 + $0x158] sm:$0xff] %v556
  %683 = vst [vmem:[%s3 + $0x160] sm:$0xff] %v561
  %684 = vst [vmem:[%s3 + $0x168] sm:$0xff] %v564
  %685 = vst [vmem:[%s3 + $0x170] sm:$0xff] %v569
  %686 = vst [vmem:[%s3 + $0x178] sm:$0xff] %v572
  %687 = vst [vmem:[%s3 + $0x180] sm:$0xff] %v577
  %688 = vst [vmem:[%s3 + $0x188] sm:$0xff] %v580
  %689 = vst [vmem:[%s3 + $0x190] sm:$0xff] %v585
  %690 = vst [vmem:[%s3 + $0x198] sm:$0xff] %v588
  %691 = vst [vmem:[%s3 + $0x1a0] sm:$0xff] %v593
  %692 = vst [vmem:[%s3 + $0x1a8] sm:$0xff] %v596
  %693 = vst [vmem:[%s3 + $0x1b0] sm:$0xff] %v601
  %694 = vst [vmem:[%s3 + $0x1b8] sm:$0xff] %v604
  %695 = vst [vmem:[%s3 + $0x1c0] sm:$0xff] %v609
  %696 = vst [vmem:[%s3 + $0x1c8] sm:$0xff] %v612
  %697 = vst [vmem:[%s3 + $0x1d0] sm:$0xff] %v617
  %698 = vst [vmem:[%s3 + $0x1d8] sm:$0xff] %v620
  %699 = vst [vmem:[%s3 + $0x1e0] sm:$0xff] %v625
  %700 = vst [vmem:[%s3 + $0x1e8] sm:$0xff] %v628
  %701 = vst [vmem:[%s3 + $0x1f0] sm:$0xff] %v633
  %702 = vst [vmem:[%s3 + $0x1f8] sm:$0xff] %v636
  %s703 = smul.u32 0, 512
  %v704 = vlaneseq
  %v705 = vshrl.u32 %v704, 7
  %v706 = vadd.s32 %v705, 8
  %v707 = vadd.s32 %v705, 16
  %v708 = vadd.s32 %v705, 24
  %v709 = vadd.s32 %v705, 32
  %v710 = vadd.s32 %v705, 40
  %v711 = vadd.s32 %v705, 48
  %v712 = vadd.s32 %v705, 56
  %v713 = vadd.s32 %v705, 64
  %v714 = vadd.s32 %v705, 72
  %v715 = vadd.s32 %v705, 80
  %v716 = vadd.s32 %v705, 88
  %v717 = vadd.s32 %v705, 96
  %v718 = vadd.s32 %v705, 104
  %v719 = vadd.s32 %v705, 112
  %v720 = vadd.s32 %v705, 120
  %v721 = vadd.s32 %v705, 128
  %v722 = vadd.s32 %v705, 136
  %v723 = vadd.s32 %v705, 144
  %v724 = vadd.s32 %v705, 152
  %v725 = vadd.s32 %v705, 160
  %v726 = vadd.s32 %v705, 168
  %v727 = vadd.s32 %v705, 176
  %v728 = vadd.s32 %v705, 184
  %v729 = vadd.s32 %v705, 192
  %v730 = vadd.s32 %v705, 200
  %v731 = vadd.s32 %v705, 208
  %v732 = vadd.s32 %v705, 216
  %v733 = vadd.s32 %v705, 224
  %v734 = vadd.s32 %v705, 232
  %v735 = vadd.s32 %v705, 240
  %v736 = vadd.s32 %v705, 248
  %v737 = vadd.s32 %v705, 256
  %v738 = vadd.s32 %v705, 264
  %v739 = vadd.s32 %v705, 272
  %v740 = vadd.s32 %v705, 280
  %v741 = vadd.s32 %v705, 288
  %v742 = vadd.s32 %v705, 296
  %v743 = vadd.s32 %v705, 304
  %v744 = vadd.s32 %v705, 312
  %v745 = vadd.s32 %v705, 320
  %v746 = vadd.s32 %v705, 328
  %v747 = vadd.s32 %v705, 336
  %v748 = vadd.s32 %v705, 344
  %v749 = vadd.s32 %v705, 352
  %v750 = vadd.s32 %v705, 360
  %v751 = vadd.s32 %v705, 368
  %v752 = vadd.s32 %v705, 376
  %v753 = vadd.s32 %v705, 384
  %v754 = vadd.s32 %v705, 392
  %v755 = vadd.s32 %v705, 400
  %v756 = vadd.s32 %v705, 408
  %v757 = vadd.s32 %v705, 416
  %v758 = vadd.s32 %v705, 424
  %v759 = vadd.s32 %v705, 432
  %v760 = vadd.s32 %v705, 440
  %v761 = vadd.s32 %v705, 448
  %v762 = vadd.s32 %v705, 456
  %v763 = vadd.s32 %v705, 464
  %v764 = vadd.s32 %v705, 472
  %v765 = vadd.s32 %v705, 480
  %v766 = vadd.s32 %v705, 488
  %v767 = vadd.s32 %v705, 496
  %v768 = vadd.s32 %v705, 504
  %v769 = vstv %s703
  %v770 = vadd.s32 %v769, %v705
  %v771 = vadd.s32 %v769, %v706
  %v772 = vadd.s32 %v769, %v707
  %v773 = vadd.s32 %v769, %v708
  %v774 = vadd.s32 %v769, %v709
  %v775 = vadd.s32 %v769, %v710
  %v776 = vadd.s32 %v769, %v711
  %v777 = vadd.s32 %v769, %v712
  %v778 = vadd.s32 %v769, %v713
  %v779 = vadd.s32 %v769, %v714
  %v780 = vadd.s32 %v769, %v715
  %v781 = vadd.s32 %v769, %v716
  %v782 = vadd.s32 %v769, %v717
  %v783 = vadd.s32 %v769, %v718
  %v784 = vadd.s32 %v769, %v719
  %v785 = vadd.s32 %v769, %v720
  %v786 = vadd.s32 %v769, %v721
  %v787 = vadd.s32 %v769, %v722
  %v788 = vadd.s32 %v769, %v723
  %v789 = vadd.s32 %v769, %v724
  %v790 = vadd.s32 %v769, %v725
  %v791 = vadd.s32 %v769, %v726
  %v792 = vadd.s32 %v769, %v727
  %v793 = vadd.s32 %v769, %v728
  %v794 = vadd.s32 %v769, %v729
  %v795 = vadd.s32 %v769, %v730
  %v796 = vadd.s32 %v769, %v731
  %v797 = vadd.s32 %v769, %v732
  %v798 = vadd.s32 %v769, %v733
  %v799 = vadd.s32 %v769, %v734
  %v800 = vadd.s32 %v769, %v735
  %v801 = vadd.s32 %v769, %v736
  %v802 = vadd.s32 %v769, %v737
  %v803 = vadd.s32 %v769, %v738
  %v804 = vadd.s32 %v769, %v739
  %v805 = vadd.s32 %v769, %v740
  %v806 = vadd.s32 %v769, %v741
  %v807 = vadd.s32 %v769, %v742
  %v808 = vadd.s32 %v769, %v743
  %v809 = vadd.s32 %v769, %v744
  %v810 = vadd.s32 %v769, %v745
  %v811 = vadd.s32 %v769, %v746
  %v812 = vadd.s32 %v769, %v747
  %v813 = vadd.s32 %v769, %v748
  %v814 = vadd.s32 %v769, %v749
  %v815 = vadd.s32 %v769, %v750
  %v816 = vadd.s32 %v769, %v751
  %v817 = vadd.s32 %v769, %v752
  %v818 = vadd.s32 %v769, %v753
  %v819 = vadd.s32 %v769, %v754
  %v820 = vadd.s32 %v769, %v755
  %v821 = vadd.s32 %v769, %v756
  %v822 = vadd.s32 %v769, %v757
  %v823 = vadd.s32 %v769, %v758
  %v824 = vadd.s32 %v769, %v759
  %v825 = vadd.s32 %v769, %v760
  %v826 = vadd.s32 %v769, %v761
  %v827 = vadd.s32 %v769, %v762
  %v828 = vadd.s32 %v769, %v763
  %v829 = vadd.s32 %v769, %v764
  %v830 = vadd.s32 %v769, %v765
  %v831 = vadd.s32 %v769, %v766
  %v832 = vadd.s32 %v769, %v767
  %v833 = vadd.s32 %v769, %v768
  %vm834 = vcmp.lt.s32.totalorder %v770, 512
  %vm835 = vcmp.lt.s32.totalorder %v771, 512
  %vm836 = vcmp.lt.s32.totalorder %v772, 512
  %vm837 = vcmp.lt.s32.totalorder %v773, 512
  %vm838 = vcmp.lt.s32.totalorder %v774, 512
  %vm839 = vcmp.lt.s32.totalorder %v775, 512
  %vm840 = vcmp.lt.s32.totalorder %v776, 512
  %vm841 = vcmp.lt.s32.totalorder %v777, 512
  %vm842 = vcmp.lt.s32.totalorder %v778, 512
  %vm843 = vcmp.lt.s32.totalorder %v779, 512
  %vm844 = vcmp.lt.s32.totalorder %v780, 512
  %vm845 = vcmp.lt.s32.totalorder %v781, 512
  %vm846 = vcmp.lt.s32.totalorder %v782, 512
  %vm847 = vcmp.lt.s32.totalorder %v783, 512
  %vm848 = vcmp.lt.s32.totalorder %v784, 512
  %vm849 = vcmp.lt.s32.totalorder %v785, 512
  %vm850 = vcmp.lt.s32.totalorder %v786, 512
  %vm851 = vcmp.lt.s32.totalorder %v787, 512
  %vm852 = vcmp.lt.s32.totalorder %v788, 512
  %vm853 = vcmp.lt.s32.totalorder %v789, 512
  %vm854 = vcmp.lt.s32.totalorder %v790, 512
  %vm855 = vcmp.lt.s32.totalorder %v791, 512
  %vm856 = vcmp.lt.s32.totalorder %v792, 512
  %vm857 = vcmp.lt.s32.totalorder %v793, 512
  %vm858 = vcmp.lt.s32.totalorder %v794, 512
  %vm859 = vcmp.lt.s32.totalorder %v795, 512
  %vm860 = vcmp.lt.s32.totalorder %v796, 512
  %vm861 = vcmp.lt.s32.totalorder %v797, 512
  %vm862 = vcmp.lt.s32.totalorder %v798, 512
  %vm863 = vcmp.lt.s32.totalorder %v799, 512
  %vm864 = vcmp.lt.s32.totalorder %v800, 512
  %vm865 = vcmp.lt.s32.totalorder %v801, 512
  %vm866 = vcmp.lt.s32.totalorder %v802, 512
  %vm867 = vcmp.lt.s32.totalorder %v803, 512
  %vm868 = vcmp.lt.s32.totalorder %v804, 512
  %vm869 = vcmp.lt.s32.totalorder %v805, 512
  %vm870 = vcmp.lt.s32.totalorder %v806, 512
  %vm871 = vcmp.lt.s32.totalorder %v807, 512
  %vm872 = vcmp.lt.s32.totalorder %v808, 512
  %vm873 = vcmp.lt.s32.totalorder %v809, 512
  %vm874 = vcmp.lt.s32.totalorder %v810, 512
  %vm875 = vcmp.lt.s32.totalorder %v811, 512
  %vm876 = vcmp.lt.s32.totalorder %v812, 512
  %vm877 = vcmp.lt.s32.totalorder %v813, 512
  %vm878 = vcmp.lt.s32.totalorder %v814, 512
  %vm879 = vcmp.lt.s32.totalorder %v815, 512
  %vm880 = vcmp.lt.s32.totalorder %v816, 512
  %vm881 = vcmp.lt.s32.totalorder %v817, 512
  %vm882 = vcmp.lt.s32.totalorder %v818, 512
  %vm883 = vcmp.lt.s32.totalorder %v819, 512
  %vm884 = vcmp.lt.s32.totalorder %v820, 512
  %vm885 = vcmp.lt.s32.totalorder %v821, 512
  %vm886 = vcmp.lt.s32.totalorder %v822, 512
  %vm887 = vcmp.lt.s32.totalorder %v823, 512
  %vm888 = vcmp.lt.s32.totalorder %v824, 512
  %vm889 = vcmp.lt.s32.totalorder %v825, 512
  %vm890 = vcmp.lt.s32.totalorder %v826, 512
  %vm891 = vcmp.lt.s32.totalorder %v827, 512
  %vm892 = vcmp.lt.s32.totalorder %v828, 512
  %vm893 = vcmp.lt.s32.totalorder %v829, 512
  %vm894 = vcmp.lt.s32.totalorder %v830, 512
  %vm895 = vcmp.lt.s32.totalorder %v831, 512
  %vm896 = vcmp.lt.s32.totalorder %v832, 512
  %vm897 = vcmp.lt.s32.totalorder %v833, 512
  %v898 = vsel %vm834, 1, 0
  %v899 = vsel %vm835, 1, 0
  %v900 = vsel %vm836, 1, 0
  %v901 = vsel %vm837, 1, 0
  %v902 = vsel %vm838, 1, 0
  %v903 = vsel %vm839, 1, 0
  %v904 = vsel %vm840, 1, 0
  %v905 = vsel %vm841, 1, 0
  %v906 = vsel %vm842, 1, 0
  %v907 = vsel %vm843, 1, 0
  %v908 = vsel %vm844, 1, 0
  %v909 = vsel %vm845, 1, 0
  %v910 = vsel %vm846, 1, 0
  %v911 = vsel %vm847, 1, 0
  %v912 = vsel %vm848, 1, 0
  %v913 = vsel %vm849, 1, 0
  %v914 = vsel %vm850, 1, 0
  %v915 = vsel %vm851, 1, 0
  %v916 = vsel %vm852, 1, 0
  %v917 = vsel %vm853, 1, 0
  %v918 = vsel %vm854, 1, 0
  %v919 = vsel %vm855, 1, 0
  %v920 = vsel %vm856, 1, 0
  %v921 = vsel %vm857, 1, 0
  %v922 = vsel %vm858, 1, 0
  %v923 = vsel %vm859, 1, 0
  %v924 = vsel %vm860, 1, 0
  %v925 = vsel %vm861, 1, 0
  %v926 = vsel %vm862, 1, 0
  %v927 = vsel %vm863, 1, 0
  %v928 = vsel %vm864, 1, 0
  %v929 = vsel %vm865, 1, 0
  %v930 = vsel %vm866, 1, 0
  %v931 = vsel %vm867, 1, 0
  %v932 = vsel %vm868, 1, 0
  %v933 = vsel %vm869, 1, 0
  %v934 = vsel %vm870, 1, 0
  %v935 = vsel %vm871, 1, 0
  %v936 = vsel %vm872, 1, 0
  %v937 = vsel %vm873, 1, 0
  %v938 = vsel %vm874, 1, 0
  %v939 = vsel %vm875, 1, 0
  %v940 = vsel %vm876, 1, 0
  %v941 = vsel %vm877, 1, 0
  %v942 = vsel %vm878, 1, 0
  %v943 = vsel %vm879, 1, 0
  %v944 = vsel %vm880, 1, 0
  %v945 = vsel %vm881, 1, 0
  %v946 = vsel %vm882, 1, 0
  %v947 = vsel %vm883, 1, 0
  %v948 = vsel %vm884, 1, 0
  %v949 = vsel %vm885, 1, 0
  %v950 = vsel %vm886, 1, 0
  %v951 = vsel %vm887, 1, 0
  %v952 = vsel %vm888, 1, 0
  %v953 = vsel %vm889, 1, 0
  %v954 = vsel %vm890, 1, 0
  %v955 = vsel %vm891, 1, 0
  %v956 = vsel %vm892, 1, 0
  %v957 = vsel %vm893, 1, 0
  %v958 = vsel %vm894, 1, 0
  %v959 = vsel %vm895, 1, 0
  %v960 = vsel %vm896, 1, 0
  %v961 = vsel %vm897, 1, 0
  %vm962 = vcmp.eq.s32.totalorder %v898, 1
  %vm963 = vcmp.eq.s32.totalorder %v899, 1
  %vm964 = vcmp.eq.s32.totalorder %v900, 1
  %vm965 = vcmp.eq.s32.totalorder %v901, 1
  %vm966 = vcmp.eq.s32.totalorder %v902, 1
  %vm967 = vcmp.eq.s32.totalorder %v903, 1
  %vm968 = vcmp.eq.s32.totalorder %v904, 1
  %vm969 = vcmp.eq.s32.totalorder %v905, 1
  %vm970 = vcmp.eq.s32.totalorder %v906, 1
  %vm971 = vcmp.eq.s32.totalorder %v907, 1
  %vm972 = vcmp.eq.s32.totalorder %v908, 1
  %vm973 = vcmp.eq.s32.totalorder %v909, 1
  %vm974 = vcmp.eq.s32.totalorder %v910, 1
  %vm975 = vcmp.eq.s32.totalorder %v911, 1
  %vm976 = vcmp.eq.s32.totalorder %v912, 1
  %vm977 = vcmp.eq.s32.totalorder %v913, 1
  %vm978 = vcmp.eq.s32.totalorder %v914, 1
  %vm979 = vcmp.eq.s32.totalorder %v915, 1
  %vm980 = vcmp.eq.s32.totalorder %v916, 1
  %vm981 = vcmp.eq.s32.totalorder %v917, 1
  %vm982 = vcmp.eq.s32.totalorder %v918, 1
  %vm983 = vcmp.eq.s32.totalorder %v919, 1
  %vm984 = vcmp.eq.s32.totalorder %v920, 1
  %vm985 = vcmp.eq.s32.totalorder %v921, 1
  %vm986 = vcmp.eq.s32.totalorder %v922, 1
  %vm987 = vcmp.eq.s32.totalorder %v923, 1
  %vm988 = vcmp.eq.s32.totalorder %v924, 1
  %vm989 = vcmp.eq.s32.totalorder %v925, 1
  %vm990 = vcmp.eq.s32.totalorder %v926, 1
  %vm991 = vcmp.eq.s32.totalorder %v927, 1
  %vm992 = vcmp.eq.s32.totalorder %v928, 1
  %vm993 = vcmp.eq.s32.totalorder %v929, 1
  %vm994 = vcmp.eq.s32.totalorder %v930, 1
  %vm995 = vcmp.eq.s32.totalorder %v931, 1
  %vm996 = vcmp.eq.s32.totalorder %v932, 1
  %vm997 = vcmp.eq.s32.totalorder %v933, 1
  %vm998 = vcmp.eq.s32.totalorder %v934, 1
  %vm999 = vcmp.eq.s32.totalorder %v935, 1
  %vm1000 = vcmp.eq.s32.totalorder %v936, 1
  %vm1001 = vcmp.eq.s32.totalorder %v937, 1
  %vm1002 = vcmp.eq.s32.totalorder %v938, 1
  %vm1003 = vcmp.eq.s32.totalorder %v939, 1
  %vm1004 = vcmp.eq.s32.totalorder %v940, 1
  %vm1005 = vcmp.eq.s32.totalorder %v941, 1
  %vm1006 = vcmp.eq.s32.totalorder %v942, 1
  %vm1007 = vcmp.eq.s32.totalorder %v943, 1
  %vm1008 = vcmp.eq.s32.totalorder %v944, 1
  %vm1009 = vcmp.eq.s32.totalorder %v945, 1
  %vm1010 = vcmp.eq.s32.totalorder %v946, 1
  %vm1011 = vcmp.eq.s32.totalorder %v947, 1
  %vm1012 = vcmp.eq.s32.totalorder %v948, 1
  %vm1013 = vcmp.eq.s32.totalorder %v949, 1
  %vm1014 = vcmp.eq.s32.totalorder %v950, 1
  %vm1015 = vcmp.eq.s32.totalorder %v951, 1
  %vm1016 = vcmp.eq.s32.totalorder %v952, 1
  %vm1017 = vcmp.eq.s32.totalorder %v953, 1
  %vm1018 = vcmp.eq.s32.totalorder %v954, 1
  %vm1019 = vcmp.eq.s32.totalorder %v955, 1
  %vm1020 = vcmp.eq.s32.totalorder %v956, 1
  %vm1021 = vcmp.eq.s32.totalorder %v957, 1
  %vm1022 = vcmp.eq.s32.totalorder %v958, 1
  %vm1023 = vcmp.eq.s32.totalorder %v959, 1
  %vm1024 = vcmp.eq.s32.totalorder %v960, 1
  %vm1025 = vcmp.eq.s32.totalorder %v961, 1
  %v1026 = vsel %vm962, %v385, 0.0
  %v1027 = vsel %vm963, %v388, 0.0
  %v1028 = vsel %vm964, %v393, 0.0
  %v1029 = vsel %vm965, %v396, 0.0
  %v1030 = vsel %vm966, %v401, 0.0
  %v1031 = vsel %vm967, %v404, 0.0
  %v1032 = vsel %vm968, %v409, 0.0
  %v1033 = vsel %vm969, %v412, 0.0
  %v1034 = vsel %vm970, %v417, 0.0
  %v1035 = vsel %vm971, %v420, 0.0
  %v1036 = vsel %vm972, %v425, 0.0
  %v1037 = vsel %vm973, %v428, 0.0
  %v1038 = vsel %vm974, %v433, 0.0
  %v1039 = vsel %vm975, %v436, 0.0
  %v1040 = vsel %vm976, %v441, 0.0
  %v1041 = vsel %vm977, %v444, 0.0
  %v1042 = vsel %vm978, %v449, 0.0
  %v1043 = vsel %vm979, %v452, 0.0
  %v1044 = vsel %vm980, %v457, 0.0
  %v1045 = vsel %vm981, %v460, 0.0
  %v1046 = vsel %vm982, %v465, 0.0
  %v1047 = vsel %vm983, %v468, 0.0
  %v1048 = vsel %vm984, %v473, 0.0
  %v1049 = vsel %vm985, %v476, 0.0
  %v1050 = vsel %vm986, %v481, 0.0
  %v1051 = vsel %vm987, %v484, 0.0
  %v1052 = vsel %vm988, %v489, 0.0
  %v1053 = vsel %vm989, %v492, 0.0
  %v1054 = vsel %vm990, %v497, 0.0
  %v1055 = vsel %vm991, %v500, 0.0
  %v1056 = vsel %vm992, %v505, 0.0
  %v1057 = vsel %vm993, %v508, 0.0
  %v1058 = vsel %vm994, %v513, 0.0
  %v1059 = vsel %vm995, %v516, 0.0
  %v1060 = vsel %vm996, %v521, 0.0
  %v1061 = vsel %vm997, %v524, 0.0
  %v1062 = vsel %vm998, %v529, 0.0
  %v1063 = vsel %vm999, %v532, 0.0
  %v1064 = vsel %vm1000, %v537, 0.0
  %v1065 = vsel %vm1001, %v540, 0.0
  %v1066 = vsel %vm1002, %v545, 0.0
  %v1067 = vsel %vm1003, %v548, 0.0
  %v1068 = vsel %vm1004, %v553, 0.0
  %v1069 = vsel %vm1005, %v556, 0.0
  %v1070 = vsel %vm1006, %v561, 0.0
  %v1071 = vsel %vm1007, %v564, 0.0
  %v1072 = vsel %vm1008, %v569, 0.0
  %v1073 = vsel %vm1009, %v572, 0.0
  %v1074 = vsel %vm1010, %v577, 0.0
  %v1075 = vsel %vm1011, %v580, 0.0
  %v1076 = vsel %vm1012, %v585, 0.0
  %v1077 = vsel %vm1013, %v588, 0.0
  %v1078 = vsel %vm1014, %v593, 0.0
  %v1079 = vsel %vm1015, %v596, 0.0
  %v1080 = vsel %vm1016, %v601, 0.0
  %v1081 = vsel %vm1017, %v604, 0.0
  %v1082 = vsel %vm1018, %v609, 0.0
  %v1083 = vsel %vm1019, %v612, 0.0
  %v1084 = vsel %vm1020, %v617, 0.0
  %v1085 = vsel %vm1021, %v620, 0.0
  %v1086 = vsel %vm1022, %v625, 0.0
  %v1087 = vsel %vm1023, %v628, 0.0
  %v1088 = vsel %vm1024, %v633, 0.0
  %v1089 = vsel %vm1025, %v636, 0.0
  %v1090 = vadd.f32 %v1026, %v1027
  %v1091 = vadd.f32 %v1090, %v1028
  %v1092 = vadd.f32 %v1091, %v1029
  %v1093 = vadd.f32 %v1092, %v1030
  %v1094 = vadd.f32 %v1093, %v1031
  %v1095 = vadd.f32 %v1094, %v1032
  %v1096 = vadd.f32 %v1095, %v1033
  %v1097 = vadd.f32 %v1096, %v1034
  %v1098 = vadd.f32 %v1097, %v1035
  %v1099 = vadd.f32 %v1098, %v1036
  %v1100 = vadd.f32 %v1099, %v1037
  %v1101 = vadd.f32 %v1100, %v1038
  %v1102 = vadd.f32 %v1101, %v1039
  %v1103 = vadd.f32 %v1102, %v1040
  %v1104 = vadd.f32 %v1103, %v1041
  %v1105 = vadd.f32 %v1104, %v1042
  %v1106 = vadd.f32 %v1105, %v1043
  %v1107 = vadd.f32 %v1106, %v1044
  %v1108 = vadd.f32 %v1107, %v1045
  %v1109 = vadd.f32 %v1108, %v1046
  %v1110 = vadd.f32 %v1109, %v1047
  %v1111 = vadd.f32 %v1110, %v1048
  %v1112 = vadd.f32 %v1111, %v1049
  %v1113 = vadd.f32 %v1112, %v1050
  %v1114 = vadd.f32 %v1113, %v1051
  %v1115 = vadd.f32 %v1114, %v1052
  %v1116 = vadd.f32 %v1115, %v1053
  %v1117 = vadd.f32 %v1116, %v1054
  %v1118 = vadd.f32 %v1117, %v1055
  %v1119 = vadd.f32 %v1118, %v1056
  %v1120 = vadd.f32 %v1119, %v1057
  %v1121 = vadd.f32 %v1120, %v1058
  %v1122 = vadd.f32 %v1121, %v1059
  %v1123 = vadd.f32 %v1122, %v1060
  %v1124 = vadd.f32 %v1123, %v1061
  %v1125 = vadd.f32 %v1124, %v1062
  %v1126 = vadd.f32 %v1125, %v1063
  %v1127 = vadd.f32 %v1126, %v1064
  %v1128 = vadd.f32 %v1127, %v1065
  %v1129 = vadd.f32 %v1128, %v1066
  %v1130 = vadd.f32 %v1129, %v1067
  %v1131 = vadd.f32 %v1130, %v1068
  %v1132 = vadd.f32 %v1131, %v1069
  %v1133 = vadd.f32 %v1132, %v1070
  %v1134 = vadd.f32 %v1133, %v1071
  %v1135 = vadd.f32 %v1134, %v1072
  %v1136 = vadd.f32 %v1135, %v1073
  %v1137 = vadd.f32 %v1136, %v1074
  %v1138 = vadd.f32 %v1137, %v1075
  %v1139 = vadd.f32 %v1138, %v1076
  %v1140 = vadd.f32 %v1139, %v1077
  %v1141 = vadd.f32 %v1140, %v1078
  %v1142 = vadd.f32 %v1141, %v1079
  %v1143 = vadd.f32 %v1142, %v1080
  %v1144 = vadd.f32 %v1143, %v1081
  %v1145 = vadd.f32 %v1144, %v1082
  %v1146 = vadd.f32 %v1145, %v1083
  %v1147 = vadd.f32 %v1146, %v1084
  %v1148 = vadd.f32 %v1147, %v1085
  %v1149 = vadd.f32 %v1148, %v1086
  %v1150 = vadd.f32 %v1149, %v1087
  %v1151 = vadd.f32 %v1150, %v1088
  %v1152 = vadd.f32 %v1151, %v1089
  %v1153 = vrot.slane %v1152, 4
  %v1154 = vadd.f32 %v1152, %v1153
  %v1155 = vrot.slane %v1154, 2
  %v1156 = vadd.f32 %v1154, %v1155
  %v1157 = vrot.slane %v1156, 1
  %v1158 = vadd.f32 %v1156, %v1157
  %v1159 = vmul.f32 %v1026, %v1026
  %v1160 = vmul.f32 %v1027, %v1027
  %v1161 = vmul.f32 %v1028, %v1028
  %v1162 = vmul.f32 %v1029, %v1029
  %v1163 = vmul.f32 %v1030, %v1030
  %v1164 = vmul.f32 %v1031, %v1031
  %v1165 = vmul.f32 %v1032, %v1032
  %v1166 = vmul.f32 %v1033, %v1033
  %v1167 = vmul.f32 %v1034, %v1034
  %v1168 = vmul.f32 %v1035, %v1035
  %v1169 = vmul.f32 %v1036, %v1036
  %v1170 = vmul.f32 %v1037, %v1037
  %v1171 = vmul.f32 %v1038, %v1038
  %v1172 = vmul.f32 %v1039, %v1039
  %v1173 = vmul.f32 %v1040, %v1040
  %v1174 = vmul.f32 %v1041, %v1041
  %v1175 = vmul.f32 %v1042, %v1042
  %v1176 = vmul.f32 %v1043, %v1043
  %v1177 = vmul.f32 %v1044, %v1044
  %v1178 = vmul.f32 %v1045, %v1045
  %v1179 = vmul.f32 %v1046, %v1046
  %v1180 = vmul.f32 %v1047, %v1047
  %v1181 = vmul.f32 %v1048, %v1048
  %v1182 = vmul.f32 %v1049, %v1049
  %v1183 = vmul.f32 %v1050, %v1050
  %v1184 = vmul.f32 %v1051, %v1051
  %v1185 = vmul.f32 %v1052, %v1052
  %v1186 = vmul.f32 %v1053, %v1053
  %v1187 = vmul.f32 %v1054, %v1054
  %v1188 = vmul.f32 %v1055, %v1055
  %v1189 = vmul.f32 %v1056, %v1056
  %v1190 = vmul.f32 %v1057, %v1057
  %v1191 = vmul.f32 %v1058, %v1058
  %v1192 = vmul.f32 %v1059, %v1059
  %v1193 = vmul.f32 %v1060, %v1060
  %v1194 = vmul.f32 %v1061, %v1061
  %v1195 = vmul.f32 %v1062, %v1062
  %v1196 = vmul.f32 %v1063, %v1063
  %v1197 = vmul.f32 %v1064, %v1064
  %v1198 = vmul.f32 %v1065, %v1065
  %v1199 = vmul.f32 %v1066, %v1066
  %v1200 = vmul.f32 %v1067, %v1067
  %v1201 = vmul.f32 %v1068, %v1068
  %v1202 = vmul.f32 %v1069, %v1069
  %v1203 = vmul.f32 %v1070, %v1070
  %v1204 = vmul.f32 %v1071, %v1071
  %v1205 = vmul.f32 %v1072, %v1072
  %v1206 = vmul.f32 %v1073, %v1073
  %v1207 = vmul.f32 %v1074, %v1074
  %v1208 = vmul.f32 %v1075, %v1075
  %v1209 = vmul.f32 %v1076, %v1076
  %v1210 = vmul.f32 %v1077, %v1077
  %v1211 = vmul.f32 %v1078, %v1078
  %v1212 = vmul.f32 %v1079, %v1079
  %v1213 = vmul.f32 %v1080, %v1080
  %v1214 = vmul.f32 %v1081, %v1081
  %v1215 = vmul.f32 %v1082, %v1082
  %v1216 = vmul.f32 %v1083, %v1083
  %v1217 = vmul.f32 %v1084, %v1084
  %v1218 = vmul.f32 %v1085, %v1085
  %v1219 = vmul.f32 %v1086, %v1086
  %v1220 = vmul.f32 %v1087, %v1087
  %v1221 = vmul.f32 %v1088, %v1088
  %v1222 = vmul.f32 %v1089, %v1089
  %v1223 = vadd.f32 %v1159, %v1160
  %v1224 = vadd.f32 %v1223, %v1161
  %v1225 = vadd.f32 %v1224, %v1162
  %v1226 = vadd.f32 %v1225, %v1163
  %v1227 = vadd.f32 %v1226, %v1164
  %v1228 = vadd.f32 %v1227, %v1165
  %v1229 = vadd.f32 %v1228, %v1166
  %v1230 = vadd.f32 %v1229, %v1167
  %v1231 = vadd.f32 %v1230, %v1168
  %v1232 = vadd.f32 %v1231, %v1169
  %v1233 = vadd.f32 %v1232, %v1170
  %v1234 = vadd.f32 %v1233, %v1171
  %v1235 = vadd.f32 %v1234, %v1172
  %v1236 = vadd.f32 %v1235, %v1173
  %v1237 = vadd.f32 %v1236, %v1174
  %v1238 = vadd.f32 %v1237, %v1175
  %v1239 = vadd.f32 %v1238, %v1176
  %v1240 = vadd.f32 %v1239, %v1177
  %v1241 = vadd.f32 %v1240, %v1178
  %v1242 = vadd.f32 %v1241, %v1179
  %v1243 = vadd.f32 %v1242, %v1180
  %v1244 = vadd.f32 %v1243, %v1181
  %v1245 = vadd.f32 %v1244, %v1182
  %v1246 = vadd.f32 %v1245, %v1183
  %v1247 = vadd.f32 %v1246, %v1184
  %v1248 = vadd.f32 %v1247, %v1185
  %v1249 = vadd.f32 %v1248, %v1186
  %v1250 = vadd.f32 %v1249, %v1187
  %v1251 = vadd.f32 %v1250, %v1188
  %v1252 = vadd.f32 %v1251, %v1189
  %v1253 = vadd.f32 %v1252, %v1190
  %v1254 = vadd.f32 %v1253, %v1191
  %v1255 = vadd.f32 %v1254, %v1192
  %v1256 = vadd.f32 %v1255, %v1193
  %v1257 = vadd.f32 %v1256, %v1194
  %v1258 = vadd.f32 %v1257, %v1195
  %v1259 = vadd.f32 %v1258, %v1196
  %v1260 = vadd.f32 %v1259, %v1197
  %v1261 = vadd.f32 %v1260, %v1198
  %v1262 = vadd.f32 %v1261, %v1199
  %v1263 = vadd.f32 %v1262, %v1200
  %v1264 = vadd.f32 %v1263, %v1201
  %v1265 = vadd.f32 %v1264, %v1202
  %v1266 = vadd.f32 %v1265, %v1203
  %v1267 = vadd.f32 %v1266, %v1204
  %v1268 = vadd.f32 %v1267, %v1205
  %v1269 = vadd.f32 %v1268, %v1206
  %v1270 = vadd.f32 %v1269, %v1207
  %v1271 = vadd.f32 %v1270, %v1208
  %v1272 = vadd.f32 %v1271, %v1209
  %v1273 = vadd.f32 %v1272, %v1210
  %v1274 = vadd.f32 %v1273, %v1211
  %v1275 = vadd.f32 %v1274, %v1212
  %v1276 = vadd.f32 %v1275, %v1213
  %v1277 = vadd.f32 %v1276, %v1214
  %v1278 = vadd.f32 %v1277, %v1215
  %v1279 = vadd.f32 %v1278, %v1216
  %v1280 = vadd.f32 %v1279, %v1217
  %v1281 = vadd.f32 %v1280, %v1218
  %v1282 = vadd.f32 %v1281, %v1219
  %v1283 = vadd.f32 %v1282, %v1220
  %v1284 = vadd.f32 %v1283, %v1221
  %v1285 = vadd.f32 %v1284, %v1222
  %v1286 = vrot.slane %v1285, 4
  %v1287 = vadd.f32 %v1285, %v1286
  %v1288 = vrot.slane %v1287, 2
  %v1289 = vadd.f32 %v1287, %v1288
  %v1290 = vrot.slane %v1289, 1
  %v1291 = vadd.f32 %v1289, %v1290
  %vm1292 = vcmask 1040384
  %v1293 = vsel %vm1292, %v1158, %v1291
  %vm1294 = vcmask 1041408
  %v1295 = vsel %vm1294, %v1293, 0.0
  %1296 = vst [vmem:[%s4] sm:$0xff] %v1295
  // Predicated region
  $region14: #{conv_transpose_layer.10} parent=0 // pred_check
    _
  $region15: #{conv_transpose_layer.10} parent=0 // pred_check_branch
    %1298 = sbr.rel (0) target = $region17
  $region16: #{conv_transpose_layer.10} parent=0 // pred_region
    _
  $region17: #{conv_transpose_layer.10} parent=0 // pred_fallthru
    _
  // Predicated region
  $region18: #{conv_transpose_layer.10} parent=0 // pred_check
    _
  $region19: #{conv_transpose_layer.10} parent=0 // pred_check_branch
    %1300 = sbr.rel (0) target = $region21
  $region20: #{conv_transpose_layer.10} parent=0 // pred_region
    _
  $region21: #{conv_transpose_layer.10} parent=0 // pred_fallthru
    _
  // Predicated region
  $region22: #{conv_transpose_layer.10} parent=0 // pred_check
    _
  $region23: #{conv_transpose_layer.10} parent=0 // pred_check_branch
    %1302 = sbr.rel (0) target = $region25
  $region24: #{conv_transpose_layer.10} parent=0 // pred_region
    _
  $region25: #{conv_transpose_layer.10} parent=0 // pred_fallthru
    _
  // Predicated region
  $region26: #{conv_transpose_layer.10} parent=0 // pred_check
    _
  $region27: #{conv_transpose_layer.10} parent=0 // pred_check_branch
    %1304 = sbr.rel (0) target = $region29
  $region28: #{conv_transpose_layer.10} parent=0 // pred_region
    _
  $region29: #{conv_transpose_layer.10} parent=0 // pred_fallthru
    _

// kernel: conv_transpose_layer.11
$region0: #{conv_transpose_layer.11}
  #allocation0 [shape = 'u32[]', space=smem, size = 0x4, offset = 0x4, fixed_abs, tag = 'smem constant byte address 0x4 - core index']
  #allocation1 [shape = 'u32[144,128]{1,0:T(1,128)}', space=vmem, size = 0x12000, scoped, tag = 'internal scratch']
  %s0 = inlined_call_operand.vmem [shape: bf16[512,16], index: 0, kind: input, shape index: {}]
  %s1 = inlined_call_operand.vmem [shape: bf16[16,128], index: 1, kind: input, shape index: {}]
  %s2 = inlined_call_operand.vmem [shape: f32[1,128], index: 2, kind: input, shape index: {}]
  %s3 = inlined_call_operand.vmem [shape: f32[512,128], index: 3, kind: output, shape index: {0}]
  %s4 = inlined_call_operand.vmem [shape: f32[1,8,128], index: 4, kind: output, shape index: {1}]
  %5 = xla_tuple %s3, %s4
  %s6 = sld [smem:[#allocation0]]
  $region30: #{conv_transpose_layer.11} parent=0
    _
  %s8 = ssub.s32 1, %s6
  %s9 = scalar_select 0, %s8, %s6
  // Predicated region
  $region2: #{conv_transpose_layer.11} parent=0 // pred_check
    _
  $region3: #{conv_transpose_layer.11} parent=0 // pred_check_branch
    %11 = sbr.rel (0) target = $region5
  $region4: #{conv_transpose_layer.11} parent=0 // pred_region
    _
  $region5: #{conv_transpose_layer.11} parent=0 // pred_fallthru
    _
  // Predicated region
  $region6: #{conv_transpose_layer.11} parent=0 // pred_check
    _
  $region7: #{conv_transpose_layer.11} parent=0 // pred_check_branch
    %13 = sbr.rel (0) target = $region9
  $region8: #{conv_transpose_layer.11} parent=0 // pred_region
    _
  $region9: #{conv_transpose_layer.11} parent=0 // pred_fallthru
    _
  // Predicated region
  $region10: #{conv_transpose_layer.11} parent=0 // pred_check
    _
  $region11: #{conv_transpose_layer.11} parent=0 // pred_check_branch
    %15 = sbr.rel (0) target = $region13
  $region12: #{conv_transpose_layer.11} parent=0 // pred_region
    _
  $region13: #{conv_transpose_layer.11} parent=0 // pred_fallthru
    _
  %v17 = vld [vmem:[%s0] sm:$0xf]
  %v18 = vld [vmem:[%s0 + $0x4] sm:$0xf]
  %v19 = vld [vmem:[%s0 + $0x8] sm:$0xf]
  %v20 = vld [vmem:[%s0 + $0xc] sm:$0xf]
  %v21 = vld [vmem:[%s0 + $0x10] sm:$0xf]
  %v22 = vld [vmem:[%s0 + $0x14] sm:$0xf]
  %v23 = vld [vmem:[%s0 + $0x18] sm:$0xf]
  %v24 = vld [vmem:[%s0 + $0x1c] sm:$0xf]
  %v25 = vld [vmem:[%s0 + $0x20] sm:$0xf]
  %v26 = vld [vmem:[%s0 + $0x24] sm:$0xf]
  %v27 = vld [vmem:[%s0 + $0x28] sm:$0xf]
  %v28 = vld [vmem:[%s0 + $0x2c] sm:$0xf]
  %v29 = vld [vmem:[%s0 + $0x30] sm:$0xf]
  %v30 = vld [vmem:[%s0 + $0x34] sm:$0xf]
  %v31 = vld [vmem:[%s0 + $0x38] sm:$0xf]
  %v32 = vld [vmem:[%s0 + $0x3c] sm:$0xf]
  %v33 = vld [vmem:[%s0 + $0x40] sm:$0xf]
  %v34 = vld [vmem:[%s0 + $0x44] sm:$0xf]
  %v35 = vld [vmem:[%s0 + $0x48] sm:$0xf]
  %v36 = vld [vmem:[%s0 + $0x4c] sm:$0xf]
  %v37 = vld [vmem:[%s0 + $0x50] sm:$0xf]
  %v38 = vld [vmem:[%s0 + $0x54] sm:$0xf]
  %v39 = vld [vmem:[%s0 + $0x58] sm:$0xf]
  %v40 = vld [vmem:[%s0 + $0x5c] sm:$0xf]
  %v41 = vld [vmem:[%s0 + $0x60] sm:$0xf]
  %v42 = vld [vmem:[%s0 + $0x64] sm:$0xf]
  %v43 = vld [vmem:[%s0 + $0x68] sm:$0xf]
  %v44 = vld [vmem:[%s0 + $0x6c] sm:$0xf]
  %v45 = vld [vmem:[%s0 + $0x70] sm:$0xf]
  %v46 = vld [vmem:[%s0 + $0x74] sm:$0xf]
  %v47 = vld [vmem:[%s0 + $0x78] sm:$0xf]
  %v48 = vld [vmem:[%s0 + $0x7c] sm:$0xf]
  %v49 = vld [vmem:[%s0 + $0x80] sm:$0xf]
  %v50 = vld [vmem:[%s0 + $0x84] sm:$0xf]
  %v51 = vld [vmem:[%s0 + $0x88] sm:$0xf]
  %v52 = vld [vmem:[%s0 + $0x8c] sm:$0xf]
  %v53 = vld [vmem:[%s0 + $0x90] sm:$0xf]
  %v54 = vld [vmem:[%s0 + $0x94] sm:$0xf]
  %v55 = vld [vmem:[%s0 + $0x98] sm:$0xf]
  %v56 = vld [vmem:[%s0 + $0x9c] sm:$0xf]
  %v57 = vld [vmem:[%s0 + $0xa0] sm:$0xf]
  %v58 = vld [vmem:[%s0 + $0xa4] sm:$0xf]
  %v59 = vld [vmem:[%s0 + $0xa8] sm:$0xf]
  %v60 = vld [vmem:[%s0 + $0xac] sm:$0xf]
  %v61 = vld [vmem:[%s0 + $0xb0] sm:$0xf]
  %v62 = vld [vmem:[%s0 + $0xb4] sm:$0xf]
  %v63 = vld [vmem:[%s0 + $0xb8] sm:$0xf]
  %v64 = vld [vmem:[%s0 + $0xbc] sm:$0xf]
  %v65 = vld [vmem:[%s0 + $0xc0] sm:$0xf]
  %v66 = vld [vmem:[%s0 + $0xc4] sm:$0xf]
  %v67 = vld [vmem:[%s0 + $0xc8] sm:$0xf]
  %v68 = vld [vmem:[%s0 + $0xcc] sm:$0xf]
  %v69 = vld [vmem:[%s0 + $0xd0] sm:$0xf]
  %v70 = vld [vmem:[%s0 + $0xd4] sm:$0xf]
  %v71 = vld [vmem:[%s0 + $0xd8] sm:$0xf]
  %v72 = vld [vmem:[%s0 + $0xdc] sm:$0xf]
  %v73 = vld [vmem:[%s0 + $0xe0] sm:$0xf]
  %v74 = vld [vmem:[%s0 + $0xe4] sm:$0xf]
  %v75 = vld [vmem:[%s0 + $0xe8] sm:$0xf]
  %v76 = vld [vmem:[%s0 + $0xec] sm:$0xf]
  %v77 = vld [vmem:[%s0 + $0xf0] sm:$0xf]
  %v78 = vld [vmem:[%s0 + $0xf4] sm:$0xf]
  %v79 = vld [vmem:[%s0 + $0xf8] sm:$0xf]
  %v80 = vld [vmem:[%s0 + $0xfc] sm:$0xf]
  %v81 = vld [vmem:[%s1] sm:$0xf]
  %v82 = vld [vmem:[%s1 + $0x4] sm:$0xf]
  %v83 = vld [vmem:[%s2] sm:$0x1]
  %v85 = vlaneseq
  %v86 = vshrl.u32 %v85, 7
  %v87 = vsub.s32 0, %v86
  %v88 = vrot.slane %v83, %v87
  %v154 = vunpack.c.l.b16 %v17
  %v155 = vunpack.c.l.b16 %v18
  %v156 = vunpack.c.l.b16 %v19
  %v157 = vunpack.c.l.b16 %v20
  %v158 = vunpack.c.l.b16 %v21
  %v159 = vunpack.c.l.b16 %v22
  %v160 = vunpack.c.l.b16 %v23
  %v161 = vunpack.c.l.b16 %v24
  %v162 = vunpack.c.l.b16 %v25
  %v163 = vunpack.c.l.b16 %v26
  %v164 = vunpack.c.l.b16 %v27
  %v165 = vunpack.c.l.b16 %v28
  %v166 = vunpack.c.l.b16 %v29
  %v167 = vunpack.c.l.b16 %v30
  %v168 = vunpack.c.l.b16 %v31
  %v169 = vunpack.c.l.b16 %v32
  %v170 = vunpack.c.l.b16 %v33
  %v171 = vunpack.c.l.b16 %v34
  %v172 = vunpack.c.l.b16 %v35
  %v173 = vunpack.c.l.b16 %v36
  %v174 = vunpack.c.l.b16 %v37
  %v175 = vunpack.c.l.b16 %v38
  %v176 = vunpack.c.l.b16 %v39
  %v177 = vunpack.c.l.b16 %v40
  %v178 = vunpack.c.l.b16 %v41
  %v179 = vunpack.c.l.b16 %v42
  %v180 = vunpack.c.l.b16 %v43
  %v181 = vunpack.c.l.b16 %v44
  %v182 = vunpack.c.l.b16 %v45
  %v183 = vunpack.c.l.b16 %v46
  %v184 = vunpack.c.l.b16 %v47
  %v185 = vunpack.c.l.b16 %v48
  %v186 = vunpack.c.l.b16 %v49
  %v187 = vunpack.c.l.b16 %v50
  %v188 = vunpack.c.l.b16 %v51
  %v189 = vunpack.c.l.b16 %v52
  %v190 = vunpack.c.l.b16 %v53
  %v191 = vunpack.c.l.b16 %v54
  %v192 = vunpack.c.l.b16 %v55
  %v193 = vunpack.c.l.b16 %v56
  %v194 = vunpack.c.l.b16 %v57
  %v195 = vunpack.c.l.b16 %v58
  %v196 = vunpack.c.l.b16 %v59
  %v197 = vunpack.c.l.b16 %v60
  %v198 = vunpack.c.l.b16 %v61
  %v199 = vunpack.c.l.b16 %v62
  %v200 = vunpack.c.l.b16 %v63
  %v201 = vunpack.c.l.b16 %v64
  %v202 = vunpack.c.l.b16 %v65
  %v203 = vunpack.c.l.b16 %v66
  %v204 = vunpack.c.l.b16 %v67
  %v205 = vunpack.c.l.b16 %v68
  %v206 = vunpack.c.l.b16 %v69
  %v207 = vunpack.c.l.b16 %v70
  %v208 = vunpack.c.l.b16 %v71
  %v209 = vunpack.c.l.b16 %v72
  %v210 = vunpack.c.l.b16 %v73
  %v211 = vunpack.c.l.b16 %v74
  %v212 = vunpack.c.l.b16 %v75
  %v213 = vunpack.c.l.b16 %v76
  %v214 = vunpack.c.l.b16 %v77
  %v215 = vunpack.c.l.b16 %v78
  %v216 = vunpack.c.l.b16 %v79
  %v217 = vunpack.c.l.b16 %v80
  %v218 = vpack.c.b16 %v155, %v154
  %v219 = vpack.c.b16 %v157, %v156
  %v220 = vpack.c.b16 %v159, %v158
  %v221 = vpack.c.b16 %v161, %v160
  %v222 = vpack.c.b16 %v163, %v162
  %v223 = vpack.c.b16 %v165, %v164
  %v224 = vpack.c.b16 %v167, %v166
  %v225 = vpack.c.b16 %v169, %v168
  %v226 = vpack.c.b16 %v171, %v170
  %v227 = vpack.c.b16 %v173, %v172
  %v228 = vpack.c.b16 %v175, %v174
  %v229 = vpack.c.b16 %v177, %v176
  %v230 = vpack.c.b16 %v179, %v178
  %v231 = vpack.c.b16 %v181, %v180
  %v232 = vpack.c.b16 %v183, %v182
  %v233 = vpack.c.b16 %v185, %v184
  %v234 = vpack.c.b16 %v187, %v186
  %v235 = vpack.c.b16 %v189, %v188
  %v236 = vpack.c.b16 %v191, %v190
  %v237 = vpack.c.b16 %v193, %v192
  %v238 = vpack.c.b16 %v195, %v194
  %v239 = vpack.c.b16 %v197, %v196
  %v240 = vpack.c.b16 %v199, %v198
  %v241 = vpack.c.b16 %v201, %v200
  %v242 = vpack.c.b16 %v203, %v202
  %v243 = vpack.c.b16 %v205, %v204
  %v244 = vpack.c.b16 %v207, %v206
  %v245 = vpack.c.b16 %v209, %v208
  %v246 = vpack.c.b16 %v211, %v210
  %v247 = vpack.c.b16 %v213, %v212
  %v248 = vpack.c.b16 %v215, %v214
  %v249 = vpack.c.b16 %v217, %v216
  %v252 = vunpack.c.l.b16 %v81
  %v253 = vunpack.c.l.b16 %v82
  %v254 = vpack.c.b16 %v253, %v252
  %vm256 = vcmask 130048
  %v258 = vsel %vm256, %v218, 0
  %v261 = vsel %vm256, %v219, 0
  %v264 = vsel %vm256, %v220, 0
  %v267 = vsel %vm256, %v221, 0
  %v270 = vsel %vm256, %v222, 0
  %v273 = vsel %vm256, %v223, 0
  %v276 = vsel %vm256, %v224, 0
  %v279 = vsel %vm256, %v225, 0
  %v282 = vsel %vm256, %v226, 0
  %v285 = vsel %vm256, %v227, 0
  %v288 = vsel %vm256, %v228, 0
  %v291 = vsel %vm256, %v229, 0
  %v294 = vsel %vm256, %v230, 0
  %v297 = vsel %vm256, %v231, 0
  %v300 = vsel %vm256, %v232, 0
  %v303 = vsel %vm256, %v233, 0
  %v306 = vsel %vm256, %v234, 0
  %v309 = vsel %vm256, %v235, 0
  %v312 = vsel %vm256, %v236, 0
  %v315 = vsel %vm256, %v237, 0
  %v318 = vsel %vm256, %v238, 0
  %v321 = vsel %vm256, %v239, 0
  %v324 = vsel %vm256, %v240, 0
  %v327 = vsel %vm256, %v241, 0
  %v330 = vsel %vm256, %v242, 0
  %v333 = vsel %vm256, %v243, 0
  %v336 = vsel %vm256, %v244, 0
  %v339 = vsel %vm256, %v245, 0
  %v342 = vsel %vm256, %v246, 0
  %v345 = vsel %vm256, %v247, 0
  %v348 = vsel %vm256, %v248, 0
  %v351 = vsel %vm256, %v249, 0
  %353 = vmatprep.subr.bf16.mxu0 0
  %354 = vmatpush1.bf16.msra.mxu0 0
  %355 = vmatprep.subr.bf16.mxu0 0
  %356 = vmatpush1.bf16.msra.mxu0 0
  %357 = vmatprep.subr.bf16.mxu0 0
  %358 = vmatpush1.bf16.msra.mxu0 0
  %359 = vmatprep.subr.bf16.mxu0 0
  %360 = vmatpush1.bf16.msra.mxu0 0
  %361 = vmatprep.subr.bf16.mxu0 0
  %362 = vmatpush1.bf16.msra.mxu0 0
  %363 = vmatprep.subr.bf16.mxu0 0
  %364 = vmatpush1.bf16.msra.mxu0 0
  %365 = vmatprep.subr.bf16.mxu0 0
  %366 = vmatpush1.bf16.msra.mxu0 0
  %367 = vmatprep.subr.bf16.mxu0 0
  %368 = vmatpush1.bf16.msra.mxu0 %v254
  %369 = vmatprep.subr.bf16.mxu0 0
  %370 = vmatpush2.bf16.msra.mxu0 0
  %371 = vmatprep.subr.bf16.mxu0 0
  %372 = vmatpush2.bf16.msra.mxu0 0
  %373 = vmatprep.subr.bf16.mxu0 0
  %374 = vmatpush2.bf16.msra.mxu0 0
  %375 = vmatprep.subr.bf16.mxu0 0
  %376 = vmatpush2.bf16.msra.mxu0 0
  %377 = vmatprep.subr.bf16.mxu0 0
  %378 = vmatpush2.bf16.msra.mxu0 0
  %379 = vmatprep.subr.bf16.mxu0 0
  %380 = vmatpush2.bf16.msra.mxu0 0
  %381 = vmatprep.subr.bf16.mxu0 0
  %382 = vmatpush2.bf16.msra.mxu0 0
  %383 = vmatprep.subr.bf16.mxu0 0
  %384 = vmatpush2.bf16.msra.mxu0 0
  %385 = vmatprep.mubr.bf16.mxu0 0
  %386 = vmatmul.mubr.bf16.gmra.mxu0 %v258
  %v387 = vpop.f32.mrf.mxu0
  %v388 = vadd.f32 %v88, %v387
  %v389 = vpop.f32.mrf.mxu0
  %v390 = vpop.f32.mrf.mxu0
  %v391 = vadd.f32 %v88, %v390
  %v392 = vpop.f32.mrf.mxu0
  %393 = vmatprep.mubr.bf16.mxu0 0
  %394 = vmatmul.mubr.bf16.gmra.mxu0 %v261
  %v395 = vpop.f32.mrf.mxu0
  %v396 = vadd.f32 %v88, %v395
  %v397 = vpop.f32.mrf.mxu0
  %v398 = vpop.f32.mrf.mxu0
  %v399 = vadd.f32 %v88, %v398
  %v400 = vpop.f32.mrf.mxu0
  %401 = vmatprep.mubr.bf16.mxu0 0
  %402 = vmatmul.mubr.bf16.gmra.mxu0 %v264
  %v403 = vpop.f32.mrf.mxu0
  %v404 = vadd.f32 %v88, %v403
  %v405 = vpop.f32.mrf.mxu0
  %v406 = vpop.f32.mrf.mxu0
  %v407 = vadd.f32 %v88, %v406
  %v408 = vpop.f32.mrf.mxu0
  %409 = vmatprep.mubr.bf16.mxu0 0
  %410 = vmatmul.mubr.bf16.gmra.mxu0 %v267
  %v411 = vpop.f32.mrf.mxu0
  %v412 = vadd.f32 %v88, %v411
  %v413 = vpop.f32.mrf.mxu0
  %v414 = vpop.f32.mrf.mxu0
  %v415 = vadd.f32 %v88, %v414
  %v416 = vpop.f32.mrf.mxu0
  %417 = vmatprep.mubr.bf16.mxu0 0
  %418 = vmatmul.mubr.bf16.gmra.mxu0 %v270
  %v419 = vpop.f32.mrf.mxu0
  %v420 = vadd.f32 %v88, %v419
  %v421 = vpop.f32.mrf.mxu0
  %v422 = vpop.f32.mrf.mxu0
  %v423 = vadd.f32 %v88, %v422
  %v424 = vpop.f32.mrf.mxu0
  %425 = vmatprep.mubr.bf16.mxu0 0
  %426 = vmatmul.mubr.bf16.gmra.mxu0 %v273
  %v427 = vpop.f32.mrf.mxu0
  %v428 = vadd.f32 %v88, %v427
  %v429 = vpop.f32.mrf.mxu0
  %v430 = vpop.f32.mrf.mxu0
  %v431 = vadd.f32 %v88, %v430
  %v432 = vpop.f32.mrf.mxu0
  %433 = vmatprep.mubr.bf16.mxu0 0
  %434 = vmatmul.mubr.bf16.gmra.mxu0 %v276
  %v435 = vpop.f32.mrf.mxu0
  %v436 = vadd.f32 %v88, %v435
  %v437 = vpop.f32.mrf.mxu0
  %v438 = vpop.f32.mrf.mxu0
  %v439 = vadd.f32 %v88, %v438
  %v440 = vpop.f32.mrf.mxu0
  %441 = vmatprep.mubr.bf16.mxu0 0
  %442 = vmatmul.mubr.bf16.gmra.mxu0 %v279
  %v443 = vpop.f32.mrf.mxu0
  %v444 = vadd.f32 %v88, %v443
  %v445 = vpop.f32.mrf.mxu0
  %v446 = vpop.f32.mrf.mxu0
  %v447 = vadd.f32 %v88, %v446
  %v448 = vpop.f32.mrf.mxu0
  %449 = vmatprep.mubr.bf16.mxu0 0
  %450 = vmatmul.mubr.bf16.gmra.mxu0 %v282
  %v451 = vpop.f32.mrf.mxu0
  %v452 = vadd.f32 %v88, %v451
  %v453 = vpop.f32.mrf.mxu0
  %v454 = vpop.f32.mrf.mxu0
  %v455 = vadd.f32 %v88, %v454
  %v456 = vpop.f32.mrf.mxu0
  %457 = vmatprep.mubr.bf16.mxu0 0
  %458 = vmatmul.mubr.bf16.gmra.mxu0 %v285
  %v459 = vpop.f32.mrf.mxu0
  %v460 = vadd.f32 %v88, %v459
  %v461 = vpop.f32.mrf.mxu0
  %v462 = vpop.f32.mrf.mxu0
  %v463 = vadd.f32 %v88, %v462
  %v464 = vpop.f32.mrf.mxu0
  %465 = vmatprep.mubr.bf16.mxu0 0
  %466 = vmatmul.mubr.bf16.gmra.mxu0 %v288
  %v467 = vpop.f32.mrf.mxu0
  %v468 = vadd.f32 %v88, %v467
  %v469 = vpop.f32.mrf.mxu0
  %v470 = vpop.f32.mrf.mxu0
  %v471 = vadd.f32 %v88, %v470
  %v472 = vpop.f32.mrf.mxu0
  %473 = vmatprep.mubr.bf16.mxu0 0
  %474 = vmatmul.mubr.bf16.gmra.mxu0 %v291
  %v475 = vpop.f32.mrf.mxu0
  %v476 = vadd.f32 %v88, %v475
  %v477 = vpop.f32.mrf.mxu0
  %v478 = vpop.f32.mrf.mxu0
  %v479 = vadd.f32 %v88, %v478
  %v480 = vpop.f32.mrf.mxu0
  %481 = vmatprep.mubr.bf16.mxu0 0
  %482 = vmatmul.mubr.bf16.gmra.mxu0 %v294
  %v483 = vpop.f32.mrf.mxu0
  %v484 = vadd.f32 %v88, %v483
  %v485 = vpop.f32.mrf.mxu0
  %v486 = vpop.f32.mrf.mxu0
  %v487 = vadd.f32 %v88, %v486
  %v488 = vpop.f32.mrf.mxu0
  %489 = vmatprep.mubr.bf16.mxu0 0
  %490 = vmatmul.mubr.bf16.gmra.mxu0 %v297
  %v491 = vpop.f32.mrf.mxu0
  %v492 = vadd.f32 %v88, %v491
  %v493 = vpop.f32.mrf.mxu0
  %v494 = vpop.f32.mrf.mxu0
  %v495 = vadd.f32 %v88, %v494
  %v496 = vpop.f32.mrf.mxu0
  %497 = vmatprep.mubr.bf16.mxu0 0
  %498 = vmatmul.mubr.bf16.gmra.mxu0 %v300
  %v499 = vpop.f32.mrf.mxu0
  %v500 = vadd.f32 %v88, %v499
  %v501 = vpop.f32.mrf.mxu0
  %v502 = vpop.f32.mrf.mxu0
  %v503 = vadd.f32 %v88, %v502
  %v504 = vpop.f32.mrf.mxu0
  %505 = vmatprep.mubr.bf16.mxu0 0
  %506 = vmatmul.mubr.bf16.gmra.mxu0 %v303
  %v507 = vpop.f32.mrf.mxu0
  %v508 = vadd.f32 %v88, %v507
  %v509 = vpop.f32.mrf.mxu0
  %v510 = vpop.f32.mrf.mxu0
  %v511 = vadd.f32 %v88, %v510
  %v512 = vpop.f32.mrf.mxu0
  %513 = vmatprep.mubr.bf16.mxu0 0
  %514 = vmatmul.mubr.bf16.gmra.mxu0 %v306
  %v515 = vpop.f32.mrf.mxu0
  %v516 = vadd.f32 %v88, %v515
  %v517 = vpop.f32.mrf.mxu0
  %v518 = vpop.f32.mrf.mxu0
  %v519 = vadd.f32 %v88, %v518
  %v520 = vpop.f32.mrf.mxu0
  %521 = vmatprep.mubr.bf16.mxu0 0
  %522 = vmatmul.mubr.bf16.gmra.mxu0 %v309
  %v523 = vpop.f32.mrf.mxu0
  %v524 = vadd.f32 %v88, %v523
  %v525 = vpop.f32.mrf.mxu0
  %v526 = vpop.f32.mrf.mxu0
  %v527 = vadd.f32 %v88, %v526
  %v528 = vpop.f32.mrf.mxu0
  %529 = vmatprep.mubr.bf16.mxu0 0
  %530 = vmatmul.mubr.bf16.gmra.mxu0 %v312
  %v531 = vpop.f32.mrf.mxu0
  %v532 = vadd.f32 %v88, %v531
  %v533 = vpop.f32.mrf.mxu0
  %v534 = vpop.f32.mrf.mxu0
  %v535 = vadd.f32 %v88, %v534
  %v536 = vpop.f32.mrf.mxu0
  %537 = vmatprep.mubr.bf16.mxu0 0
  %538 = vmatmul.mubr.bf16.gmra.mxu0 %v315
  %v539 = vpop.f32.mrf.mxu0
  %v540 = vadd.f32 %v88, %v539
  %v541 = vpop.f32.mrf.mxu0
  %v542 = vpop.f32.mrf.mxu0
  %v543 = vadd.f32 %v88, %v542
  %v544 = vpop.f32.mrf.mxu0
  %545 = vmatprep.mubr.bf16.mxu0 0
  %546 = vmatmul.mubr.bf16.gmra.mxu0 %v318
  %v547 = vpop.f32.mrf.mxu0
  %v548 = vadd.f32 %v88, %v547
  %v549 = vpop.f32.mrf.mxu0
  %v550 = vpop.f32.mrf.mxu0
  %v551 = vadd.f32 %v88, %v550
  %v552 = vpop.f32.mrf.mxu0
  %553 = vmatprep.mubr.bf16.mxu0 0
  %554 = vmatmul.mubr.bf16.gmra.mxu0 %v321
  %v555 = vpop.f32.mrf.mxu0
  %v556 = vadd.f32 %v88, %v555
  %v557 = vpop.f32.mrf.mxu0
  %v558 = vpop.f32.mrf.mxu0
  %v559 = vadd.f32 %v88, %v558
  %v560 = vpop.f32.mrf.mxu0
  %561 = vmatprep.mubr.bf16.mxu0 0
  %562 = vmatmul.mubr.bf16.gmra.mxu0 %v324
  %v563 = vpop.f32.mrf.mxu0
  %v564 = vadd.f32 %v88, %v563
  %v565 = vpop.f32.mrf.mxu0
  %v566 = vpop.f32.mrf.mxu0
  %v567 = vadd.f32 %v88, %v566
  %v568 = vpop.f32.mrf.mxu0
  %569 = vmatprep.mubr.bf16.mxu0 0
  %570 = vmatmul.mubr.bf16.gmra.mxu0 %v327
  %v571 = vpop.f32.mrf.mxu0
  %v572 = vadd.f32 %v88, %v571
  %v573 = vpop.f32.mrf.mxu0
  %v574 = vpop.f32.mrf.mxu0
  %v575 = vadd.f32 %v88, %v574
  %v576 = vpop.f32.mrf.mxu0
  %577 = vmatprep.mubr.bf16.mxu0 0
  %578 = vmatmul.mubr.bf16.gmra.mxu0 %v330
  %v579 = vpop.f32.mrf.mxu0
  %v580 = vadd.f32 %v88, %v579
  %v581 = vpop.f32.mrf.mxu0
  %v582 = vpop.f32.mrf.mxu0
  %v583 = vadd.f32 %v88, %v582
  %v584 = vpop.f32.mrf.mxu0
  %585 = vmatprep.mubr.bf16.mxu0 0
  %586 = vmatmul.mubr.bf16.gmra.mxu0 %v333
  %v587 = vpop.f32.mrf.mxu0
  %v588 = vadd.f32 %v88, %v587
  %v589 = vpop.f32.mrf.mxu0
  %v590 = vpop.f32.mrf.mxu0
  %v591 = vadd.f32 %v88, %v590
  %v592 = vpop.f32.mrf.mxu0
  %593 = vmatprep.mubr.bf16.mxu0 0
  %594 = vmatmul.mubr.bf16.gmra.mxu0 %v336
  %v595 = vpop.f32.mrf.mxu0
  %v596 = vadd.f32 %v88, %v595
  %v597 = vpop.f32.mrf.mxu0
  %v598 = vpop.f32.mrf.mxu0
  %v599 = vadd.f32 %v88, %v598
  %v600 = vpop.f32.mrf.mxu0
  %601 = vmatprep.mubr.bf16.mxu0 0
  %602 = vmatmul.mubr.bf16.gmra.mxu0 %v339
  %v603 = vpop.f32.mrf.mxu0
  %v604 = vadd.f32 %v88, %v603
  %v605 = vpop.f32.mrf.mxu0
  %v606 = vpop.f32.mrf.mxu0
  %v607 = vadd.f32 %v88, %v606
  %v608 = vpop.f32.mrf.mxu0
  %609 = vmatprep.mubr.bf16.mxu0 0
  %610 = vmatmul.mubr.bf16.gmra.mxu0 %v342
  %v611 = vpop.f32.mrf.mxu0
  %v612 = vadd.f32 %v88, %v611
  %v613 = vpop.f32.mrf.mxu0
  %v614 = vpop.f32.mrf.mxu0
  %v615 = vadd.f32 %v88, %v614
  %v616 = vpop.f32.mrf.mxu0
  %617 = vmatprep.mubr.bf16.mxu0 0
  %618 = vmatmul.mubr.bf16.gmra.mxu0 %v345
  %v619 = vpop.f32.mrf.mxu0
  %v620 = vadd.f32 %v88, %v619
  %v621 = vpop.f32.mrf.mxu0
  %v622 = vpop.f32.mrf.mxu0
  %v623 = vadd.f32 %v88, %v622
  %v624 = vpop.f32.mrf.mxu0
  %625 = vmatprep.mubr.bf16.mxu0 0
  %626 = vmatmul.mubr.bf16.gmra.mxu0 %v348
  %v627 = vpop.f32.mrf.mxu0
  %v628 = vadd.f32 %v88, %v627
  %v629 = vpop.f32.mrf.mxu0
  %v630 = vpop.f32.mrf.mxu0
  %v631 = vadd.f32 %v88, %v630
  %v632 = vpop.f32.mrf.mxu0
  %633 = vmatprep.mubr.bf16.mxu0 0
  %634 = vmatmul.mubr.bf16.gmra.mxu0 %v351
  %v635 = vpop.f32.mrf.mxu0
  %v636 = vadd.f32 %v88, %v635
  %v637 = vpop.f32.mrf.mxu0
  %v638 = vpop.f32.mrf.mxu0
  %v639 = vadd.f32 %v88, %v638
  %v640 = vpop.f32.mrf.mxu0
  %641 = vdwg.mxu0
  %642 = vst [vmem:[%s3] sm:$0xff] %v388
  %643 = vst [vmem:[%s3 + $0x8] sm:$0xff] %v391
  %644 = vst [vmem:[%s3 + $0x10] sm:$0xff] %v396
  %645 = vst [vmem:[%s3 + $0x18] sm:$0xff] %v399
  %646 = vst [vmem:[%s3 + $0x20] sm:$0xff] %v404
  %647 = vst [vmem:[%s3 + $0x28] sm:$0xff] %v407
  %648 = vst [vmem:[%s3 + $0x30] sm:$0xff] %v412
  %649 = vst [vmem:[%s3 + $0x38] sm:$0xff] %v415
  %650 = vst [vmem:[%s3 + $0x40] sm:$0xff] %v420
  %651 = vst [vmem:[%s3 + $0x48] sm:$0xff] %v423
  %652 = vst [vmem:[%s3 + $0x50] sm:$0xff] %v428
  %653 = vst [vmem:[%s3 + $0x58] sm:$0xff] %v431
  %654 = vst [vmem:[%s3 + $0x60] sm:$0xff] %v436
  %655 = vst [vmem:[%s3 + $0x68] sm:$0xff] %v439
  %656 = vst [vmem:[%s3 + $0x70] sm:$0xff] %v444
  %657 = vst [vmem:[%s3 + $0x78] sm:$0xff] %v447
  %658 = vst [vmem:[%s3 + $0x80] sm:$0xff] %v452
  %659 = vst [vmem:[%s3 + $0x88] sm:$0xff] %v455
  %660 = vst [vmem:[%s3 + $0x90] sm:$0xff] %v460
  %661 = vst [vmem:[%s3 + $0x98] sm:$0xff] %v463
  %662 = vst [vmem:[%s3 + $0xa0] sm:$0xff] %v468
  %663 = vst [vmem:[%s3 + $0xa8] sm:$0xff] %v471
  %664 = vst [vmem:[%s3 + $0xb0] sm:$0xff] %v476
  %665 = vst [vmem:[%s3 + $0xb8] sm:$0xff] %v479
  %666 = vst [vmem:[%s3 + $0xc0] sm:$0xff] %v484
  %667 = vst [vmem:[%s3 + $0xc8] sm:$0xff] %v487
  %668 = vst [vmem:[%s3 + $0xd0] sm:$0xff] %v492
  %669 = vst [vmem:[%s3 + $0xd8] sm:$0xff] %v495
  %670 = vst [vmem:[%s3 + $0xe0] sm:$0xff] %v500
  %671 = vst [vmem:[%s3 + $0xe8] sm:$0xff] %v503
  %672 = vst [vmem:[%s3 + $0xf0] sm:$0xff] %v508
  %673 = vst [vmem:[%s3 + $0xf8] sm:$0xff] %v511
  %674 = vst [vmem:[%s3 + $0x100] sm:$0xff] %v516
  %675 = vst [vmem:[%s3 + $0x108] sm:$0xff] %v519
  %676 = vst [vmem:[%s3 + $0x110] sm:$0xff] %v524
  %677 = vst [vmem:[%s3 + $0x118] sm:$0xff] %v527
  %678 = vst [vmem:[%s3 + $0x120] sm:$0xff] %v532
  %679 = vst [vmem:[%s3 + $0x128] sm:$0xff] %v535
  %680 = vst [vmem:[%s3 + $0x130] sm:$0xff] %v540
  %681 = vst [vmem:[%s3 + $0x138] sm:$0xff] %v543
  %682 = vst [vmem:[%s3 + $0x140] sm:$0xff] %v548
  %683 = vst [vmem:[%s3 + $0x148] sm:$0xff] %v551
  %684 = vst [vmem:[%s3 + $0x150] sm:$0xff] %v556
  %685 = vst [vmem:[%s3 + $0x158] sm:$0xff] %v559
  %686 = vst [vmem:[%s3 + $0x160] sm:$0xff] %v564
  %687 = vst [vmem:[%s3 + $0x168] sm:$0xff] %v567
  %688 = vst [vmem:[%s3 + $0x170] sm:$0xff] %v572
  %689 = vst [vmem:[%s3 + $0x178] sm:$0xff] %v575
  %690 = vst [vmem:[%s3 + $0x180] sm:$0xff] %v580
  %691 = vst [vmem:[%s3 + $0x188] sm:$0xff] %v583
  %692 = vst [vmem:[%s3 + $0x190] sm:$0xff] %v588
  %693 = vst [vmem:[%s3 + $0x198] sm:$0xff] %v591
  %694 = vst [vmem:[%s3 + $0x1a0] sm:$0xff] %v596
  %695 = vst [vmem:[%s3 + $0x1a8] sm:$0xff] %v599
  %696 = vst [vmem:[%s3 + $0x1b0] sm:$0xff] %v604
  %697 = vst [vmem:[%s3 + $0x1b8] sm:$0xff] %v607
  %698 = vst [vmem:[%s3 + $0x1c0] sm:$0xff] %v612
  %699 = vst [vmem:[%s3 + $0x1c8] sm:$0xff] %v615
  %700 = vst [vmem:[%s3 + $0x1d0] sm:$0xff] %v620
  %701 = vst [vmem:[%s3 + $0x1d8] sm:$0xff] %v623
  %702 = vst [vmem:[%s3 + $0x1e0] sm:$0xff] %v628
  %703 = vst [vmem:[%s3 + $0x1e8] sm:$0xff] %v631
  %704 = vst [vmem:[%s3 + $0x1f0] sm:$0xff] %v636
  %705 = vst [vmem:[%s3 + $0x1f8] sm:$0xff] %v639
  %s706 = smul.u32 0, 512
  %v707 = vlaneseq
  %v708 = vshrl.u32 %v707, 7
  %v709 = vadd.s32 %v708, 8
  %v710 = vadd.s32 %v708, 16
  %v711 = vadd.s32 %v708, 24
  %v712 = vadd.s32 %v708, 32
  %v713 = vadd.s32 %v708, 40
  %v714 = vadd.s32 %v708, 48
  %v715 = vadd.s32 %v708, 56
  %v716 = vadd.s32 %v708, 64
  %v717 = vadd.s32 %v708, 72
  %v718 = vadd.s32 %v708, 80
  %v719 = vadd.s32 %v708, 88
  %v720 = vadd.s32 %v708, 96
  %v721 = vadd.s32 %v708, 104
  %v722 = vadd.s32 %v708, 112
  %v723 = vadd.s32 %v708, 120
  %v724 = vadd.s32 %v708, 128
  %v725 = vadd.s32 %v708, 136
  %v726 = vadd.s32 %v708, 144
  %v727 = vadd.s32 %v708, 152
  %v728 = vadd.s32 %v708, 160
  %v729 = vadd.s32 %v708, 168
  %v730 = vadd.s32 %v708, 176
  %v731 = vadd.s32 %v708, 184
  %v732 = vadd.s32 %v708, 192
  %v733 = vadd.s32 %v708, 200
  %v734 = vadd.s32 %v708, 208
  %v735 = vadd.s32 %v708, 216
  %v736 = vadd.s32 %v708, 224
  %v737 = vadd.s32 %v708, 232
  %v738 = vadd.s32 %v708, 240
  %v739 = vadd.s32 %v708, 248
  %v740 = vadd.s32 %v708, 256
  %v741 = vadd.s32 %v708, 264
  %v742 = vadd.s32 %v708, 272
  %v743 = vadd.s32 %v708, 280
  %v744 = vadd.s32 %v708, 288
  %v745 = vadd.s32 %v708, 296
  %v746 = vadd.s32 %v708, 304
  %v747 = vadd.s32 %v708, 312
  %v748 = vadd.s32 %v708, 320
  %v749 = vadd.s32 %v708, 328
  %v750 = vadd.s32 %v708, 336
  %v751 = vadd.s32 %v708, 344
  %v752 = vadd.s32 %v708, 352
  %v753 = vadd.s32 %v708, 360
  %v754 = vadd.s32 %v708, 368
  %v755 = vadd.s32 %v708, 376
  %v756 = vadd.s32 %v708, 384
  %v757 = vadd.s32 %v708, 392
  %v758 = vadd.s32 %v708, 400
  %v759 = vadd.s32 %v708, 408
  %v760 = vadd.s32 %v708, 416
  %v761 = vadd.s32 %v708, 424
  %v762 = vadd.s32 %v708, 432
  %v763 = vadd.s32 %v708, 440
  %v764 = vadd.s32 %v708, 448
  %v765 = vadd.s32 %v708, 456
  %v766 = vadd.s32 %v708, 464
  %v767 = vadd.s32 %v708, 472
  %v768 = vadd.s32 %v708, 480
  %v769 = vadd.s32 %v708, 488
  %v770 = vadd.s32 %v708, 496
  %v771 = vadd.s32 %v708, 504
  %v772 = vstv %s706
  %v773 = vadd.s32 %v772, %v708
  %v774 = vadd.s32 %v772, %v709
  %v775 = vadd.s32 %v772, %v710
  %v776 = vadd.s32 %v772, %v711
  %v777 = vadd.s32 %v772, %v712
  %v778 = vadd.s32 %v772, %v713
  %v779 = vadd.s32 %v772, %v714
  %v780 = vadd.s32 %v772, %v715
  %v781 = vadd.s32 %v772, %v716
  %v782 = vadd.s32 %v772, %v717
  %v783 = vadd.s32 %v772, %v718
  %v784 = vadd.s32 %v772, %v719
  %v785 = vadd.s32 %v772, %v720
  %v786 = vadd.s32 %v772, %v721
  %v787 = vadd.s32 %v772, %v722
  %v788 = vadd.s32 %v772, %v723
  %v789 = vadd.s32 %v772, %v724
  %v790 = vadd.s32 %v772, %v725
  %v791 = vadd.s32 %v772, %v726
  %v792 = vadd.s32 %v772, %v727
  %v793 = vadd.s32 %v772, %v728
  %v794 = vadd.s32 %v772, %v729
  %v795 = vadd.s32 %v772, %v730
  %v796 = vadd.s32 %v772, %v731
  %v797 = vadd.s32 %v772, %v732
  %v798 = vadd.s32 %v772, %v733
  %v799 = vadd.s32 %v772, %v734
  %v800 = vadd.s32 %v772, %v735
  %v801 = vadd.s32 %v772, %v736
  %v802 = vadd.s32 %v772, %v737
  %v803 = vadd.s32 %v772, %v738
  %v804 = vadd.s32 %v772, %v739
  %v805 = vadd.s32 %v772, %v740
  %v806 = vadd.s32 %v772, %v741
  %v807 = vadd.s32 %v772, %v742
  %v808 = vadd.s32 %v772, %v743
  %v809 = vadd.s32 %v772, %v744
  %v810 = vadd.s32 %v772, %v745
  %v811 = vadd.s32 %v772, %v746
  %v812 = vadd.s32 %v772, %v747
  %v813 = vadd.s32 %v772, %v748
  %v814 = vadd.s32 %v772, %v749
  %v815 = vadd.s32 %v772, %v750
  %v816 = vadd.s32 %v772, %v751
  %v817 = vadd.s32 %v772, %v752
  %v818 = vadd.s32 %v772, %v753
  %v819 = vadd.s32 %v772, %v754
  %v820 = vadd.s32 %v772, %v755
  %v821 = vadd.s32 %v772, %v756
  %v822 = vadd.s32 %v772, %v757
  %v823 = vadd.s32 %v772, %v758
  %v824 = vadd.s32 %v772, %v759
  %v825 = vadd.s32 %v772, %v760
  %v826 = vadd.s32 %v772, %v761
  %v827 = vadd.s32 %v772, %v762
  %v828 = vadd.s32 %v772, %v763
  %v829 = vadd.s32 %v772, %v764
  %v830 = vadd.s32 %v772, %v765
  %v831 = vadd.s32 %v772, %v766
  %v832 = vadd.s32 %v772, %v767
  %v833 = vadd.s32 %v772, %v768
  %v834 = vadd.s32 %v772, %v769
  %v835 = vadd.s32 %v772, %v770
  %v836 = vadd.s32 %v772, %v771
  %vm837 = vcmp.lt.s32.totalorder %v773, 512
  %vm838 = vcmp.lt.s32.totalorder %v774, 512
  %vm839 = vcmp.lt.s32.totalorder %v775, 512
  %vm840 = vcmp.lt.s32.totalorder %v776, 512
  %vm841 = vcmp.lt.s32.totalorder %v777, 512
  %vm842 = vcmp.lt.s32.totalorder %v778, 512
  %vm843 = vcmp.lt.s32.totalorder %v779, 512
  %vm844 = vcmp.lt.s32.totalorder %v780, 512
  %vm845 = vcmp.lt.s32.totalorder %v781, 512
  %vm846 = vcmp.lt.s32.totalorder %v782, 512
  %vm847 = vcmp.lt.s32.totalorder %v783, 512
  %vm848 = vcmp.lt.s32.totalorder %v784, 512
  %vm849 = vcmp.lt.s32.totalorder %v785, 512
  %vm850 = vcmp.lt.s32.totalorder %v786, 512
  %vm851 = vcmp.lt.s32.totalorder %v787, 512
  %vm852 = vcmp.lt.s32.totalorder %v788, 512
  %vm853 = vcmp.lt.s32.totalorder %v789, 512
  %vm854 = vcmp.lt.s32.totalorder %v790, 512
  %vm855 = vcmp.lt.s32.totalorder %v791, 512
  %vm856 = vcmp.lt.s32.totalorder %v792, 512
  %vm857 = vcmp.lt.s32.totalorder %v793, 512
  %vm858 = vcmp.lt.s32.totalorder %v794, 512
  %vm859 = vcmp.lt.s32.totalorder %v795, 512
  %vm860 = vcmp.lt.s32.totalorder %v796, 512
  %vm861 = vcmp.lt.s32.totalorder %v797, 512
  %vm862 = vcmp.lt.s32.totalorder %v798, 512
  %vm863 = vcmp.lt.s32.totalorder %v799, 512
  %vm864 = vcmp.lt.s32.totalorder %v800, 512
  %vm865 = vcmp.lt.s32.totalorder %v801, 512
  %vm866 = vcmp.lt.s32.totalorder %v802, 512
  %vm867 = vcmp.lt.s32.totalorder %v803, 512
  %vm868 = vcmp.lt.s32.totalorder %v804, 512
  %vm869 = vcmp.lt.s32.totalorder %v805, 512
  %vm870 = vcmp.lt.s32.totalorder %v806, 512
  %vm871 = vcmp.lt.s32.totalorder %v807, 512
  %vm872 = vcmp.lt.s32.totalorder %v808, 512
  %vm873 = vcmp.lt.s32.totalorder %v809, 512
  %vm874 = vcmp.lt.s32.totalorder %v810, 512
  %vm875 = vcmp.lt.s32.totalorder %v811, 512
  %vm876 = vcmp.lt.s32.totalorder %v812, 512
  %vm877 = vcmp.lt.s32.totalorder %v813, 512
  %vm878 = vcmp.lt.s32.totalorder %v814, 512
  %vm879 = vcmp.lt.s32.totalorder %v815, 512
  %vm880 = vcmp.lt.s32.totalorder %v816, 512
  %vm881 = vcmp.lt.s32.totalorder %v817, 512
  %vm882 = vcmp.lt.s32.totalorder %v818, 512
  %vm883 = vcmp.lt.s32.totalorder %v819, 512
  %vm884 = vcmp.lt.s32.totalorder %v820, 512
  %vm885 = vcmp.lt.s32.totalorder %v821, 512
  %vm886 = vcmp.lt.s32.totalorder %v822, 512
  %vm887 = vcmp.lt.s32.totalorder %v823, 512
  %vm888 = vcmp.lt.s32.totalorder %v824, 512
  %vm889 = vcmp.lt.s32.totalorder %v825, 512
  %vm890 = vcmp.lt.s32.totalorder %v826, 512
  %vm891 = vcmp.lt.s32.totalorder %v827, 512
  %vm892 = vcmp.lt.s32.totalorder %v828, 512
  %vm893 = vcmp.lt.s32.totalorder %v829, 512
  %vm894 = vcmp.lt.s32.totalorder %v830, 512
  %vm895 = vcmp.lt.s32.totalorder %v831, 512
  %vm896 = vcmp.lt.s32.totalorder %v832, 512
  %vm897 = vcmp.lt.s32.totalorder %v833, 512
  %vm898 = vcmp.lt.s32.totalorder %v834, 512
  %vm899 = vcmp.lt.s32.totalorder %v835, 512
  %vm900 = vcmp.lt.s32.totalorder %v836, 512
  %v901 = vsel %vm837, 1, 0
  %v902 = vsel %vm838, 1, 0
  %v903 = vsel %vm839, 1, 0
  %v904 = vsel %vm840, 1, 0
  %v905 = vsel %vm841, 1, 0
  %v906 = vsel %vm842, 1, 0
  %v907 = vsel %vm843, 1, 0
  %v908 = vsel %vm844, 1, 0
  %v909 = vsel %vm845, 1, 0
  %v910 = vsel %vm846, 1, 0
  %v911 = vsel %vm847, 1, 0
  %v912 = vsel %vm848, 1, 0
  %v913 = vsel %vm849, 1, 0
  %v914 = vsel %vm850, 1, 0
  %v915 = vsel %vm851, 1, 0
  %v916 = vsel %vm852, 1, 0
  %v917 = vsel %vm853, 1, 0
  %v918 = vsel %vm854, 1, 0
  %v919 = vsel %vm855, 1, 0
  %v920 = vsel %vm856, 1, 0
  %v921 = vsel %vm857, 1, 0
  %v922 = vsel %vm858, 1, 0
  %v923 = vsel %vm859, 1, 0
  %v924 = vsel %vm860, 1, 0
  %v925 = vsel %vm861, 1, 0
  %v926 = vsel %vm862, 1, 0
  %v927 = vsel %vm863, 1, 0
  %v928 = vsel %vm864, 1, 0
  %v929 = vsel %vm865, 1, 0
  %v930 = vsel %vm866, 1, 0
  %v931 = vsel %vm867, 1, 0
  %v932 = vsel %vm868, 1, 0
  %v933 = vsel %vm869, 1, 0
  %v934 = vsel %vm870, 1, 0
  %v935 = vsel %vm871, 1, 0
  %v936 = vsel %vm872, 1, 0
  %v937 = vsel %vm873, 1, 0
  %v938 = vsel %vm874, 1, 0
  %v939 = vsel %vm875, 1, 0
  %v940 = vsel %vm876, 1, 0
  %v941 = vsel %vm877, 1, 0
  %v942 = vsel %vm878, 1, 0
  %v943 = vsel %vm879, 1, 0
  %v944 = vsel %vm880, 1, 0
  %v945 = vsel %vm881, 1, 0
  %v946 = vsel %vm882, 1, 0
  %v947 = vsel %vm883, 1, 0
  %v948 = vsel %vm884, 1, 0
  %v949 = vsel %vm885, 1, 0
  %v950 = vsel %vm886, 1, 0
  %v951 = vsel %vm887, 1, 0
  %v952 = vsel %vm888, 1, 0
  %v953 = vsel %vm889, 1, 0
  %v954 = vsel %vm890, 1, 0
  %v955 = vsel %vm891, 1, 0
  %v956 = vsel %vm892, 1, 0
  %v957 = vsel %vm893, 1, 0
  %v958 = vsel %vm894, 1, 0
  %v959 = vsel %vm895, 1, 0
  %v960 = vsel %vm896, 1, 0
  %v961 = vsel %vm897, 1, 0
  %v962 = vsel %vm898, 1, 0
  %v963 = vsel %vm899, 1, 0
  %v964 = vsel %vm900, 1, 0
  %vm965 = vcmp.eq.s32.totalorder %v901, 1
  %vm966 = vcmp.eq.s32.totalorder %v902, 1
  %vm967 = vcmp.eq.s32.totalorder %v903, 1
  %vm968 = vcmp.eq.s32.totalorder %v904, 1
  %vm969 = vcmp.eq.s32.totalorder %v905, 1
  %vm970 = vcmp.eq.s32.totalorder %v906, 1
  %vm971 = vcmp.eq.s32.totalorder %v907, 1
  %vm972 = vcmp.eq.s32.totalorder %v908, 1
  %vm973 = vcmp.eq.s32.totalorder %v909, 1
  %vm974 = vcmp.eq.s32.totalorder %v910, 1
  %vm975 = vcmp.eq.s32.totalorder %v911, 1
  %vm976 = vcmp.eq.s32.totalorder %v912, 1
  %vm977 = vcmp.eq.s32.totalorder %v913, 1
  %vm978 = vcmp.eq.s32.totalorder %v914, 1
  %vm979 = vcmp.eq.s32.totalorder %v915, 1
  %vm980 = vcmp.eq.s32.totalorder %v916, 1
  %vm981 = vcmp.eq.s32.totalorder %v917, 1
  %vm982 = vcmp.eq.s32.totalorder %v918, 1
  %vm983 = vcmp.eq.s32.totalorder %v919, 1
  %vm984 = vcmp.eq.s32.totalorder %v920, 1
  %vm985 = vcmp.eq.s32.totalorder %v921, 1
  %vm986 = vcmp.eq.s32.totalorder %v922, 1
  %vm987 = vcmp.eq.s32.totalorder %v923, 1
  %vm988 = vcmp.eq.s32.totalorder %v924, 1
  %vm989 = vcmp.eq.s32.totalorder %v925, 1
  %vm990 = vcmp.eq.s32.totalorder %v926, 1
  %vm991 = vcmp.eq.s32.totalorder %v927, 1
  %vm992 = vcmp.eq.s32.totalorder %v928, 1
  %vm993 = vcmp.eq.s32.totalorder %v929, 1
  %vm994 = vcmp.eq.s32.totalorder %v930, 1
  %vm995 = vcmp.eq.s32.totalorder %v931, 1
  %vm996 = vcmp.eq.s32.totalorder %v932, 1
  %vm997 = vcmp.eq.s32.totalorder %v933, 1
  %vm998 = vcmp.eq.s32.totalorder %v934, 1
  %vm999 = vcmp.eq.s32.totalorder %v935, 1
  %vm1000 = vcmp.eq.s32.totalorder %v936, 1
  %vm1001 = vcmp.eq.s32.totalorder %v937, 1
  %vm1002 = vcmp.eq.s32.totalorder %v938, 1
  %vm1003 = vcmp.eq.s32.totalorder %v939, 1
  %vm1004 = vcmp.eq.s32.totalorder %v940, 1
  %vm1005 = vcmp.eq.s32.totalorder %v941, 1
  %vm1006 = vcmp.eq.s32.totalorder %v942, 1
  %vm1007 = vcmp.eq.s32.totalorder %v943, 1
  %vm1008 = vcmp.eq.s32.totalorder %v944, 1
  %vm1009 = vcmp.eq.s32.totalorder %v945, 1
  %vm1010 = vcmp.eq.s32.totalorder %v946, 1
  %vm1011 = vcmp.eq.s32.totalorder %v947, 1
  %vm1012 = vcmp.eq.s32.totalorder %v948, 1
  %vm1013 = vcmp.eq.s32.totalorder %v949, 1
  %vm1014 = vcmp.eq.s32.totalorder %v950, 1
  %vm1015 = vcmp.eq.s32.totalorder %v951, 1
  %vm1016 = vcmp.eq.s32.totalorder %v952, 1
  %vm1017 = vcmp.eq.s32.totalorder %v953, 1
  %vm1018 = vcmp.eq.s32.totalorder %v954, 1
  %vm1019 = vcmp.eq.s32.totalorder %v955, 1
  %vm1020 = vcmp.eq.s32.totalorder %v956, 1
  %vm1021 = vcmp.eq.s32.totalorder %v957, 1
  %vm1022 = vcmp.eq.s32.totalorder %v958, 1
  %vm1023 = vcmp.eq.s32.totalorder %v959, 1
  %vm1024 = vcmp.eq.s32.totalorder %v960, 1
  %vm1025 = vcmp.eq.s32.totalorder %v961, 1
  %vm1026 = vcmp.eq.s32.totalorder %v962, 1
  %vm1027 = vcmp.eq.s32.totalorder %v963, 1
  %vm1028 = vcmp.eq.s32.totalorder %v964, 1
  %v1029 = vsel %vm965, %v388, 0.0
  %v1030 = vsel %vm966, %v391, 0.0
  %v1031 = vsel %vm967, %v396, 0.0
  %v1032 = vsel %vm968, %v399, 0.0
  %v1033 = vsel %vm969, %v404, 0.0
  %v1034 = vsel %vm970, %v407, 0.0
  %v1035 = vsel %vm971, %v412, 0.0
  %v1036 = vsel %vm972, %v415, 0.0
  %v1037 = vsel %vm973, %v420, 0.0
  %v1038 = vsel %vm974, %v423, 0.0
  %v1039 = vsel %vm975, %v428, 0.0
  %v1040 = vsel %vm976, %v431, 0.0
  %v1041 = vsel %vm977, %v436, 0.0
  %v1042 = vsel %vm978, %v439, 0.0
  %v1043 = vsel %vm979, %v444, 0.0
  %v1044 = vsel %vm980, %v447, 0.0
  %v1045 = vsel %vm981, %v452, 0.0
  %v1046 = vsel %vm982, %v455, 0.0
  %v1047 = vsel %vm983, %v460, 0.0
  %v1048 = vsel %vm984, %v463, 0.0
  %v1049 = vsel %vm985, %v468, 0.0
  %v1050 = vsel %vm986, %v471, 0.0
  %v1051 = vsel %vm987, %v476, 0.0
  %v1052 = vsel %vm988, %v479, 0.0
  %v1053 = vsel %vm989, %v484, 0.0
  %v1054 = vsel %vm990, %v487, 0.0
  %v1055 = vsel %vm991, %v492, 0.0
  %v1056 = vsel %vm992, %v495, 0.0
  %v1057 = vsel %vm993, %v500, 0.0
  %v1058 = vsel %vm994, %v503, 0.0
  %v1059 = vsel %vm995, %v508, 0.0
  %v1060 = vsel %vm996, %v511, 0.0
  %v1061 = vsel %vm997, %v516, 0.0
  %v1062 = vsel %vm998, %v519, 0.0
  %v1063 = vsel %vm999, %v524, 0.0
  %v1064 = vsel %vm1000, %v527, 0.0
  %v1065 = vsel %vm1001, %v532, 0.0
  %v1066 = vsel %vm1002, %v535, 0.0
  %v1067 = vsel %vm1003, %v540, 0.0
  %v1068 = vsel %vm1004, %v543, 0.0
  %v1069 = vsel %vm1005, %v548, 0.0
  %v1070 = vsel %vm1006, %v551, 0.0
  %v1071 = vsel %vm1007, %v556, 0.0
  %v1072 = vsel %vm1008, %v559, 0.0
  %v1073 = vsel %vm1009, %v564, 0.0
  %v1074 = vsel %vm1010, %v567, 0.0
  %v1075 = vsel %vm1011, %v572, 0.0
  %v1076 = vsel %vm1012, %v575, 0.0
  %v1077 = vsel %vm1013, %v580, 0.0
  %v1078 = vsel %vm1014, %v583, 0.0
  %v1079 = vsel %vm1015, %v588, 0.0
  %v1080 = vsel %vm1016, %v591, 0.0
  %v1081 = vsel %vm1017, %v596, 0.0
  %v1082 = vsel %vm1018, %v599, 0.0
  %v1083 = vsel %vm1019, %v604, 0.0
  %v1084 = vsel %vm1020, %v607, 0.0
  %v1085 = vsel %vm1021, %v612, 0.0
  %v1086 = vsel %vm1022, %v615, 0.0
  %v1087 = vsel %vm1023, %v620, 0.0
  %v1088 = vsel %vm1024, %v623, 0.0
  %v1089 = vsel %vm1025, %v628, 0.0
  %v1090 = vsel %vm1026, %v631, 0.0
  %v1091 = vsel %vm1027, %v636, 0.0
  %v1092 = vsel %vm1028, %v639, 0.0
  %v1093 = vadd.f32 %v1029, %v1030
  %v1094 = vadd.f32 %v1093, %v1031
  %v1095 = vadd.f32 %v1094, %v1032
  %v1096 = vadd.f32 %v1095, %v1033
  %v1097 = vadd.f32 %v1096, %v1034
  %v1098 = vadd.f32 %v1097, %v1035
  %v1099 = vadd.f32 %v1098, %v1036
  %v1100 = vadd.f32 %v1099, %v1037
  %v1101 = vadd.f32 %v1100, %v1038
  %v1102 = vadd.f32 %v1101, %v1039
  %v1103 = vadd.f32 %v1102, %v1040
  %v1104 = vadd.f32 %v1103, %v1041
  %v1105 = vadd.f32 %v1104, %v1042
  %v1106 = vadd.f32 %v1105, %v1043
  %v1107 = vadd.f32 %v1106, %v1044
  %v1108 = vadd.f32 %v1107, %v1045
  %v1109 = vadd.f32 %v1108, %v1046
  %v1110 = vadd.f32 %v1109, %v1047
  %v1111 = vadd.f32 %v1110, %v1048
  %v1112 = vadd.f32 %v1111, %v1049
  %v1113 = vadd.f32 %v1112, %v1050
  %v1114 = vadd.f32 %v1113, %v1051
  %v1115 = vadd.f32 %v1114, %v1052
  %v1116 = vadd.f32 %v1115, %v1053
  %v1117 = vadd.f32 %v1116, %v1054
  %v1118 = vadd.f32 %v1117, %v1055
  %v1119 = vadd.f32 %v1118, %v1056
  %v1120 = vadd.f32 %v1119, %v1057
  %v1121 = vadd.f32 %v1120, %v1058
  %v1122 = vadd.f32 %v1121, %v1059
  %v1123 = vadd.f32 %v1122, %v1060
  %v1124 = vadd.f32 %v1123, %v1061
  %v1125 = vadd.f32 %v1124, %v1062
  %v1126 = vadd.f32 %v1125, %v1063
  %v1127 = vadd.f32 %v1126, %v1064
  %v1128 = vadd.f32 %v1127, %v1065
  %v1129 = vadd.f32 %v1128, %v1066
  %v1130 = vadd.f32 %v1129, %v1067
  %v1131 = vadd.f32 %v1130, %v1068
  %v1132 = vadd.f32 %v1131, %v1069
  %v1133 = vadd.f32 %v1132, %v1070
  %v1134 = vadd.f32 %v1133, %v1071
  %v1135 = vadd.f32 %v1134, %v1072
  %v1136 = vadd.f32 %v1135, %v1073
  %v1137 = vadd.f32 %v1136, %v1074
  %v1138 = vadd.f32 %v1137, %v1075
  %v1139 = vadd.f32 %v1138, %v1076
  %v1140 = vadd.f32 %v1139, %v1077
  %v1141 = vadd.f32 %v1140, %v1078
  %v1142 = vadd.f32 %v1141, %v1079
  %v1143 = vadd.f32 %v1142, %v1080
  %v1144 = vadd.f32 %v1143, %v1081
  %v1145 = vadd.f32 %v1144, %v1082
  %v1146 = vadd.f32 %v1145, %v1083
  %v1147 = vadd.f32 %v1146, %v1084
  %v1148 = vadd.f32 %v1147, %v1085
  %v1149 = vadd.f32 %v1148, %v1086
  %v1150 = vadd.f32 %v1149, %v1087
  %v1151 = vadd.f32 %v1150, %v1088
  %v1152 = vadd.f32 %v1151, %v1089
  %v1153 = vadd.f32 %v1152, %v1090
  %v1154 = vadd.f32 %v1153, %v1091
  %v1155 = vadd.f32 %v1154, %v1092
  %v1156 = vrot.slane %v1155, 4
  %v1157 = vadd.f32 %v1155, %v1156
  %v1158 = vrot.slane %v1157, 2
  %v1159 = vadd.f32 %v1157, %v1158
  %v1160 = vrot.slane %v1159, 1
  %v1161 = vadd.f32 %v1159, %v1160
  %v1162 = vmul.f32 %v1029, %v1029
  %v1163 = vmul.f32 %v1030, %v1030
  %v1164 = vmul.f32 %v1031, %v1031
  %v1165 = vmul.f32 %v1032, %v1032
  %v1166 = vmul.f32 %v1033, %v1033
  %v1167 = vmul.f32 %v1034, %v1034
  %v1168 = vmul.f32 %v1035, %v1035
  %v1169 = vmul.f32 %v1036, %v1036
  %v1170 = vmul.f32 %v1037, %v1037
  %v1171 = vmul.f32 %v1038, %v1038
  %v1172 = vmul.f32 %v1039, %v1039
  %v1173 = vmul.f32 %v1040, %v1040
  %v1174 = vmul.f32 %v1041, %v1041
  %v1175 = vmul.f32 %v1042, %v1042
  %v1176 = vmul.f32 %v1043, %v1043
  %v1177 = vmul.f32 %v1044, %v1044
  %v1178 = vmul.f32 %v1045, %v1045
  %v1179 = vmul.f32 %v1046, %v1046
  %v1180 = vmul.f32 %v1047, %v1047
  %v1181 = vmul.f32 %v1048, %v1048
  %v1182 = vmul.f32 %v1049, %v1049
  %v1183 = vmul.f32 %v1050, %v1050
  %v1184 = vmul.f32 %v1051, %v1051
  %v1185 = vmul.f32 %v1052, %v1052
  %v1186 = vmul.f32 %v1053, %v1053
  %v1187 = vmul.f32 %v1054, %v1054
  %v1188 = vmul.f32 %v1055, %v1055
  %v1189 = vmul.f32 %v1056, %v1056
  %v1190 = vmul.f32 %v1057, %v1057
  %v1191 = vmul.f32 %v1058, %v1058
  %v1192 = vmul.f32 %v1059, %v1059
  %v1193 = vmul.f32 %v1060, %v1060
  %v1194 = vmul.f32 %v1061, %v1061
  %v1195 = vmul.f32 %v1062, %v1062
  %v1196 = vmul.f32 %v1063, %v1063
  %v1197 = vmul.f32 %v1064, %v1064
  %v1198 = vmul.f32 %v1065, %v1065
  %v1199 = vmul.f32 %v1066, %v1066
  %v1200 = vmul.f32 %v1067, %v1067
  %v1201 = vmul.f32 %v1068, %v1068
  %v1202 = vmul.f32 %v1069, %v1069
  %v1203 = vmul.f32 %v1070, %v1070
  %v1204 = vmul.f32 %v1071, %v1071
  %v1205 = vmul.f32 %v1072, %v1072
  %v1206 = vmul.f32 %v1073, %v1073
  %v1207 = vmul.f32 %v1074, %v1074
  %v1208 = vmul.f32 %v1075, %v1075
  %v1209 = vmul.f32 %v1076, %v1076
  %v1210 = vmul.f32 %v1077, %v1077
  %v1211 = vmul.f32 %v1078, %v1078
  %v1212 = vmul.f32 %v1079, %v1079
  %v1213 = vmul.f32 %v1080, %v1080
  %v1214 = vmul.f32 %v1081, %v1081
  %v1215 = vmul.f32 %v1082, %v1082
  %v1216 = vmul.f32 %v1083, %v1083
  %v1217 = vmul.f32 %v1084, %v1084
  %v1218 = vmul.f32 %v1085, %v1085
  %v1219 = vmul.f32 %v1086, %v1086
  %v1220 = vmul.f32 %v1087, %v1087
  %v1221 = vmul.f32 %v1088, %v1088
  %v1222 = vmul.f32 %v1089, %v1089
  %v1223 = vmul.f32 %v1090, %v1090
  %v1224 = vmul.f32 %v1091, %v1091
  %v1225 = vmul.f32 %v1092, %v1092
  %v1226 = vadd.f32 %v1162, %v1163
  %v1227 = vadd.f32 %v1226, %v1164
  %v1228 = vadd.f32 %v1227, %v1165
  %v1229 = vadd.f32 %v1228, %v1166
  %v1230 = vadd.f32 %v1229, %v1167
  %v1231 = vadd.f32 %v1230, %v1168
  %v1232 = vadd.f32 %v1231, %v1169
  %v1233 = vadd.f32 %v1232, %v1170
  %v1234 = vadd.f32 %v1233, %v1171
  %v1235 = vadd.f32 %v1234, %v1172
  %v1236 = vadd.f32 %v1235, %v1173
  %v1237 = vadd.f32 %v1236, %v1174
  %v1238 = vadd.f32 %v1237, %v1175
  %v1239 = vadd.f32 %v1238, %v1176
  %v1240 = vadd.f32 %v1239, %v1177
  %v1241 = vadd.f32 %v1240, %v1178
  %v1242 = vadd.f32 %v1241, %v1179
  %v1243 = vadd.f32 %v1242, %v1180
  %v1244 = vadd.f32 %v1243, %v1181
  %v1245 = vadd.f32 %v1244, %v1182
  %v1246 = vadd.f32 %v1245, %v1183
  %v1247 = vadd.f32 %v1246, %v1184
  %v1248 = vadd.f32 %v1247, %v1185
  %v1249 = vadd.f32 %v1248, %v1186
  %v1250 = vadd.f32 %v1249, %v1187
  %v1251 = vadd.f32 %v1250, %v1188
  %v1252 = vadd.f32 %v1251, %v1189
  %v1253 = vadd.f32 %v1252, %v1190
  %v1254 = vadd.f32 %v1253, %v1191
  %v1255 = vadd.f32 %v1254, %v1192
  %v1256 = vadd.f32 %v1255, %v1193
  %v1257 = vadd.f32 %v1256, %v1194
  %v1258 = vadd.f32 %v1257, %v1195
  %v1259 = vadd.f32 %v1258, %v1196
  %v1260 = vadd.f32 %v1259, %v1197
  %v1261 = vadd.f32 %v1260, %v1198
  %v1262 = vadd.f32 %v1261, %v1199
  %v1263 = vadd.f32 %v1262, %v1200
  %v1264 = vadd.f32 %v1263, %v1201
  %v1265 = vadd.f32 %v1264, %v1202
  %v1266 = vadd.f32 %v1265, %v1203
  %v1267 = vadd.f32 %v1266, %v1204
  %v1268 = vadd.f32 %v1267, %v1205
  %v1269 = vadd.f32 %v1268, %v1206
  %v1270 = vadd.f32 %v1269, %v1207
  %v1271 = vadd.f32 %v1270, %v1208
  %v1272 = vadd.f32 %v1271, %v1209
  %v1273 = vadd.f32 %v1272, %v1210
  %v1274 = vadd.f32 %v1273, %v1211
  %v1275 = vadd.f32 %v1274, %v1212
  %v1276 = vadd.f32 %v1275, %v1213
  %v1277 = vadd.f32 %v1276, %v1214
  %v1278 = vadd.f32 %v1277, %v1215
  %v1279 = vadd.f32 %v1278, %v1216
  %v1280 = vadd.f32 %v1279, %v1217
  %v1281 = vadd.f32 %v1280, %v1218
  %v1282 = vadd.f32 %v1281, %v1219
  %v1283 = vadd.f32 %v1282, %v1220
  %v1284 = vadd.f32 %v1283, %v1221
  %v1285 = vadd.f32 %v1284, %v1222
  %v1286 = vadd.f32 %v1285, %v1223
  %v1287 = vadd.f32 %v1286, %v1224
  %v1288 = vadd.f32 %v1287, %v1225
  %v1289 = vrot.slane %v1288, 4
  %v1290 = vadd.f32 %v1288, %v1289
  %v1291 = vrot.slane %v1290, 2
  %v1292 = vadd.f32 %v1290, %v1291
  %v1293 = vrot.slane %v1292, 1
  %v1294 = vadd.f32 %v1292, %v1293
  %vm1295 = vcmask 1040384
  %v1296 = vsel %vm1295, %v1161, %v1294
  %vm1297 = vcmask 1041408
  %v1298 = vsel %vm1297, %v1296, 0.0
  %1299 = vst [vmem:[%s4] sm:$0xff] %v1298
  // Predicated region
  $region14: #{conv_transpose_layer.11} parent=0 // pred_check
    _
  $region15: #{conv_transpose_layer.11} parent=0 // pred_check_branch
    %1301 = sbr.rel (0) target = $region17
  $region16: #{conv_transpose_layer.11} parent=0 // pred_region
    _
  $region17: #{conv_transpose_layer.11} parent=0 // pred_fallthru
    _
  // Predicated region
  $region18: #{conv_transpose_layer.11} parent=0 // pred_check
    _
  $region19: #{conv_transpose_layer.11} parent=0 // pred_check_branch
    %1303 = sbr.rel (0) target = $region21
  $region20: #{conv_transpose_layer.11} parent=0 // pred_region
    _
  $region21: #{conv_transpose_layer.11} parent=0 // pred_fallthru
    _
  // Predicated region
  $region22: #{conv_transpose_layer.11} parent=0 // pred_check
    _
  $region23: #{conv_transpose_layer.11} parent=0 // pred_check_branch
    %1305 = sbr.rel (0) target = $region25
  $region24: #{conv_transpose_layer.11} parent=0 // pred_region
    _
  $region25: #{conv_transpose_layer.11} parent=0 // pred_fallthru
    _
  // Predicated region
  $region26: #{conv_transpose_layer.11} parent=0 // pred_check
    _
  $region27: #{conv_transpose_layer.11} parent=0 // pred_check_branch
    %1307 = sbr.rel (0) target = $region29
  $region28: #{conv_transpose_layer.11} parent=0 // pred_region
    _
  $region29: #{conv_transpose_layer.11} parent=0 // pred_fallthru
    _

</llo_original>
